<compile_context>
chip_gen: v7x
topology: tpu7x:2x2x1
jax: 0.10.0
libtpu: 0.0.40
codegen_flags: <defaults>
</compile_context>

<pallas_src>
import functools
import math

import jax
import jax.numpy as jnp
import numpy as np
from jax.experimental import pallas as pl
from jax.experimental.pallas import tpu as pltpu


def _round_up(x, m):
    return (x + m - 1) // m * m


def _nbytes(shape, dtype):
    return math.prod(shape) * np.dtype(dtype).itemsize


def _vmem_budget_bytes():
    """~75% of physical VMEM (≈48 MiB on v7x, ≈96 MiB on v5e/v6e), capped at 100 MiB."""
    try:
        cap = int(pltpu.get_tpu_info().vmem_capacity_bytes)
    except Exception:
        cap = 64 * 1024 * 1024
    return min((cap * 3) // 4, 100 * 1024 * 1024)


# ----------------------------------------------------------------------------
# Weight packing: PyTorch GRU layout (3H, in), gates [r; z; n] on dim 0
#   -> (in_p, 3*Hp) bf16 with each gate occupying its own lane-aligned Hp block.
# Biases: r/z parts of b_hh folded into b_ih; only the n-gate part of b_hh kept.
# ----------------------------------------------------------------------------
def _pack_gate_weight(w, hid, in_p, hid_p):
    in_size = w.shape[1]
    w3 = w.reshape(3, hid, in_size).transpose(2, 0, 1)            # (in, 3, H)
    w3 = jnp.pad(w3, ((0, in_p - in_size), (0, 0), (0, hid_p - hid)))
    return w3.reshape(in_p, 3 * hid_p).astype(jnp.bfloat16)


def _pack_gate_biases(b_ih, b_hh, hid, hid_p):
    bi = b_ih.reshape(3, hid)
    bh = b_hh.reshape(3, hid)
    fused = bi.at[0].add(bh[0]).at[1].add(bh[1])                   # fold r/z of b_hh
    fused = jnp.pad(fused, ((0, 0), (0, hid_p - hid))).reshape(1, 3 * hid_p)
    bhn = jnp.pad(bh[2:3], ((0, 0), (0, hid_p - hid)))             # (1, Hp) n-gate only
    return fused.astype(jnp.float32), bhn.astype(jnp.float32)


def _pick_time_chunk(seq_len, max_chunk=32):
    if seq_len <= max_chunk:
        return seq_len
    for c in range(max_chunk, 0, -1):
        if seq_len % c == 0:
            return c
    return 1


# ----------------------------------------------------------------------------
# GRU kernel: single grid step; static layer loop; static chunk loop over time;
# per chunk one big input-gate MXU matmul, then a partially-unrolled fori_loop
# over the chunk's timesteps (only the tiny recurrent h @ W_hh stays per-step).
# ----------------------------------------------------------------------------
def _make_gru_kernel(n_layers, seq_len, chunk, batch_p, hid_p):
    n_chunks = seq_len // chunk

    def kernel(emb_ref, h0_ref, *rest):
        w_refs = rest[: 4 * n_layers]
        out_ref = rest[4 * n_layers]
        hfin_ref = rest[4 * n_layers + 1]
        seq_scr = rest[4 * n_layers + 2]     # (S*Bp, Hp)   bf16 inter-layer activations
        gi_scr = rest[4 * n_layers + 3]      # (Tc*Bp, 3Hp) f32 input-side gates (chunk)

        Bp, Hp = batch_p, hid_p
        unroll = min(8, chunk)

        for layer in range(n_layers):
            w_ih_t = w_refs[4 * layer + 0][...]   # (in_p, 3Hp) bf16
            w_hh_t = w_refs[4 * layer + 1][...]   # (Hp, 3Hp)   bf16
            b_ih = w_refs[4 * layer + 2][...]     # (1, 3Hp) f32, r/z of b_hh folded in
            b_hh_n = jnp.broadcast_to(w_refs[4 * layer + 3][...], (Bp, Hp))  # hoisted

            x_ref = emb_ref if layer == 0 else seq_scr
            dst = out_ref if layer == n_layers - 1 else seq_scr
            h = h0_ref[layer]                     # (Bp, Hp) f32

            for c in range(n_chunks):
                base = c * chunk * Bp             # static

                # Input-side gates for this time chunk: one MXU matmul
                # (bf16 x bf16 operands, f32 accumulation).
                gi_scr[...] = (
                    jnp.dot(x_ref[pl.ds(base, chunk * Bp), :], w_ih_t,
                            preferred_element_type=jnp.float32) + b_ih)

                def step(t, h_prev, base=base):
                    row = pl.multiple_of(t * Bp, Bp)
                    gi = gi_scr[pl.ds(row, Bp), :]                  # (Bp, 3Hp)
                    gh = jnp.dot(h_prev.astype(jnp.bfloat16), w_hh_t,
                                 preferred_element_type=jnp.float32)
                    # Lane-aligned gate slices (each gate is a full Hp-lane block).
                    i_r, i_z, i_n = gi[:, :Hp], gi[:, Hp:2 * Hp], gi[:, 2 * Hp:]
                    h_r, h_z = gh[:, :Hp], gh[:, Hp:2 * Hp]
                    h_n = gh[:, 2 * Hp:] + b_hh_n
                    r = jax.nn.sigmoid(i_r + h_r)
                    z = jax.nn.sigmoid(i_z + h_z)
                    n = jnp.tanh(i_n + r * h_n)
                    h_new = (1.0 - z) * n + z * h_prev
                    abs_row = pl.multiple_of(base + t * Bp, Bp)
                    dst[pl.ds(abs_row, Bp), :] = h_new.astype(dst.dtype)
                    return h_new

                h = jax.lax.fori_loop(0, chunk, step, h, unroll=unroll)

            hfin_ref[layer] = h.astype(hfin_ref.dtype)

    return kernel


def gru_forward(emb2d, h0, gru_params):
    """emb2d: (S*Bp, Ep) bf16; h0: (L, Bp, Hp) f32 -> ((S*Bp, Hp) bf16, (L, Bp, Hp) f32)."""
    n_tokens, emb_p = emb2d.shape
    n_layers, batch_p, hid_p = h0.shape
    seq_len = n_tokens // batch_p
    chunk = _pick_time_chunk(seq_len)

    flat_weights, flat_specs = [], []
    for p in gru_params:
        for name in ("w_ih_t", "w_hh_t", "b_ih", "b_hh_n"):
            w = p[name]
            flat_weights.append(w)
            flat_specs.append(pl.BlockSpec(w.shape, lambda i: (0, 0)))

    kernel = _make_gru_kernel(n_layers, seq_len, chunk, batch_p, hid_p)

    # Everything is resident for the single grid step: size the VMEM limit explicitly
    # (x2 for pipeline buffering on operands, single-buffered scratch, + headroom).
    need = 2 * (_nbytes((n_tokens, emb_p), jnp.bfloat16)
                + 2 * _nbytes((n_layers, batch_p, hid_p), jnp.float32)
                + _nbytes((n_tokens, hid_p), jnp.bfloat16))
    for w in flat_weights:
        need += 2 * w.size * w.dtype.itemsize
    need += _nbytes((n_tokens, hid_p), jnp.bfloat16)               # seq_scr
    need += _nbytes((chunk * batch_p, 3 * hid_p), jnp.float32)     # gi_scr
    vmem_limit = int(min(max(need + (8 << 20), 32 << 20), 128 << 20))

    out2d, h_fin = pl.pallas_call(
        kernel,
        out_shape=(
            jax.ShapeDtypeStruct((n_tokens, hid_p), jnp.bfloat16),
            jax.ShapeDtypeStruct((n_layers, batch_p, hid_p), jnp.float32),
        ),
        grid_spec=pltpu.PrefetchScalarGridSpec(
            num_scalar_prefetch=0,
            grid=(1,),
            in_specs=[
                pl.BlockSpec((n_tokens, emb_p), lambda i: (0, 0)),
                pl.BlockSpec((n_layers, batch_p, hid_p), lambda i: (0, 0, 0)),
            ] + flat_specs,
            out_specs=(
                pl.BlockSpec((n_tokens, hid_p), lambda i: (0, 0)),
                pl.BlockSpec((n_layers, batch_p, hid_p), lambda i: (0, 0, 0)),
            ),
            scratch_shapes=[
                pltpu.VMEM((n_tokens, hid_p), jnp.bfloat16),
                pltpu.VMEM((chunk * batch_p, 3 * hid_p), jnp.float32),
            ],
        ),
        compiler_params=pltpu.CompilerParams(
            dimension_semantics=("arbitrary",),
            vmem_limit_bytes=vmem_limit),
    )(emb2d, h0, *flat_weights)
    return out2d, h_fin


# ----------------------------------------------------------------------------
# Output projection + log_softmax: row-parallel tiles, resident bf16 weight,
# lane-dense padded vocab axis (padded bias = -1e30 so padded lanes never win).
# Row tile and VMEM budget derived from the generation's VMEM capacity.
# ----------------------------------------------------------------------------
def _proj_logsoftmax_kernel(x_ref, w_ref, b_ref, o_ref):
    logits = jnp.dot(x_ref[...].astype(jnp.bfloat16), w_ref[...],
                     preferred_element_type=jnp.float32) + b_ref[...]
    m = jnp.max(logits, axis=-1, keepdims=True)
    s = logits - m
    lse = jnp.log(jnp.sum(jnp.exp(s), axis=-1, keepdims=True))
    o_ref[...] = (s - lse).astype(o_ref.dtype)


def proj_logsoftmax(x2d, w_t, bias):
    """x2d: (N, Hp) bf16; w_t: (Hp, Vp) bf16; bias: (1, Vp) f32 -> (N, Vp) f32 log-probs."""
    n, hp = x2d.shape
    vp = w_t.shape[1]

    budget = _vmem_budget_bytes()
    resident = 2 * (hp * vp * 2 + vp * 4)           # weight + bias (double-buffered)
    per_row = 2 * (vp * 4 + hp * 2)                 # f32 out + bf16 in, double-buffered
    tn = max(16, ((budget - resident - (2 << 20)) // per_row) // 16 * 16)
    tn = min(tn, 1024, _round_up(n, 16))

    n_pad = _round_up(n, tn)
    if n_pad != n:
        x2d = jnp.pad(x2d, ((0, n_pad - n), (0, 0)))

    out = pl.pallas_call(
        _proj_logsoftmax_kernel,
        out_shape=jax.ShapeDtypeStruct((n_pad, vp), jnp.float32),
        grid_spec=pltpu.PrefetchScalarGridSpec(
            num_scalar_prefetch=0,
            grid=(n_pad // tn,),
            in_specs=[
                pl.BlockSpec((tn, hp), lambda i: (i, 0)),
                pl.BlockSpec((hp, vp), lambda i: (0, 0)),
                pl.BlockSpec((1, vp), lambda i: (0, 0)),
            ],
            out_specs=pl.BlockSpec((tn, vp), lambda i: (i, 0)),
        ),
        compiler_params=pltpu.CompilerParams(
            dimension_semantics=("parallel",),
            vmem_limit_bytes=int(budget)),
    )(x2d, w_t, bias)
    return out[:n]


# ----------------------------------------------------------------------------
# Parameter construction (padding / transposes / gate repack / bias folding ONCE here).
# ----------------------------------------------------------------------------
def init_params(key, voc_size, emb_size, hid_size, n_layers):
    ep = _round_up(emb_size, 128)
    hp = _round_up(hid_size, 128)
    vp = _round_up(voc_size, 128)

    keys = jax.random.split(key, 3 + n_layers)
    orth = jax.nn.initializers.orthogonal()
    bound = 1.0 / float(hid_size) ** 0.5

    emb = jax.random.uniform(keys[0], (voc_size, emb_size), jnp.float32, -0.1, 0.1)
    emb_p = jnp.pad(emb, ((0, 0), (0, ep - emb_size))).astype(jnp.bfloat16)

    gru, raw_gru = [], []
    for layer in range(n_layers):
        in_size = emb_size if layer == 0 else hid_size
        in_p = ep if layer == 0 else hp
        k = jax.random.split(keys[1 + layer], 4)
        w_ih = orth(k[0], (3 * hid_size, in_size), jnp.float32)
        w_hh = orth(k[1], (3 * hid_size, hid_size), jnp.float32)
        b_ih = jax.random.uniform(k[2], (3 * hid_size,), jnp.float32, -bound, bound)
        b_hh = jax.random.uniform(k[3], (3 * hid_size,), jnp.float32, -bound, bound)
        raw_gru.append({"w_ih": w_ih, "w_hh": w_hh, "b_ih": b_ih, "b_hh": b_hh})
        b_ih_f, b_hh_n = _pack_gate_biases(b_ih, b_hh, hid_size, hp)
        gru.append({
            "w_ih_t": _pack_gate_weight(w_ih, hid_size, in_p, hp),
            "w_hh_t": _pack_gate_weight(w_hh, hid_size, hp, hp),
            "b_ih": b_ih_f,
            "b_hh_n": b_hh_n,
        })

    out_w = jax.random.uniform(keys[-2], (voc_size, hid_size), jnp.float32, -bound, bound)
    out_b = jax.random.uniform(keys[-1], (voc_size,), jnp.float32, -bound, bound)
    out_w_t = (jnp.zeros((hp, vp), jnp.float32)
               .at[:hid_size, :voc_size].set(out_w.T).astype(jnp.bfloat16))
    out_b_p = jnp.full((1, vp), -1e30, jnp.float32).at[0, :voc_size].set(out_b)

    params = {"embedding": emb_p, "gru": gru, "out_w_t": out_w_t, "out_b": out_b_p}
    raw = {"embedding": emb, "gru": raw_gru, "out_w": out_w, "out_b": out_b}
    return params, raw


# ----------------------------------------------------------------------------
# Forward (matches NaiveDecoder.forward: returns (log_prob, hidden, None)).
# ----------------------------------------------------------------------------
@functools.partial(jax.jit, static_argnames=("voc_size",))
def naive_decoder_forward(params, x, hidden, *, voc_size):
    seq_len, batch = x.shape
    n_layers, _, hid_size = hidden.shape
    ep = params["embedding"].shape[1]
    hp = params["gru"][0]["w_hh_t"].shape[0]
    vp = params["out_w_t"].shape[1]
    bp = _round_up(batch, 16)   # 16 sublanes so bf16 per-step stores stay full-tile

    # embedd = self.embedding(x)
    # TODO(synk): fuse the embedding gather into the GRU kernel via scalar-prefetch
    #             row gather (pl.Element) for large emb_size; jnp.take stays outside here.
    x_p = jnp.pad(x, ((0, 0), (0, bp - batch)))
    emb = jnp.take(params["embedding"], x_p, axis=0)          # (S, Bp, Ep) bf16
    emb2d = emb.reshape(seq_len * bp, ep)

    h0 = jnp.pad(hidden, ((0, 0), (0, bp - batch), (0, hp - hid_size)))

    # output, hidden = self.gru(embedd, hidden)
    out2d, h_fin = gru_forward(emb2d, h0, params["gru"])       # (S*Bp, Hp) bf16, (L, Bp, Hp)

    # log_prob = F.log_softmax(self.out(output), -1)
    logp = proj_logsoftmax(out2d, params["out_w_t"], params["out_b"])
    log_prob = logp.reshape(seq_len, bp, vp)[:, :batch, :voc_size]
    hidden_out = h_fin[:, :batch, :hid_size]
    return log_prob, hidden_out, None


# ----------------------------------------------------------------------------
# Pure-JAX reference (PyTorch GRU equations), with operands rounded through bf16
# to mirror the kernel's bf16-stored weights / activations.
# ----------------------------------------------------------------------------
def reference_forward(raw, x, hidden):
    def r32(w):
        return w.astype(jnp.bfloat16).astype(jnp.float32)

    emb = jnp.take(r32(raw["embedding"]), x, axis=0)          # (S, B, E)
    seq_len = emb.shape[0]
    n_layers = hidden.shape[0]
    h = [hidden[l] for l in range(n_layers)]
    outs = []
    for t in range(seq_len):
        xt = emb[t]
        for l in range(n_layers):
            p = raw["gru"][l]
            gi = r32(xt) @ r32(p["w_ih"]).T + p["b_ih"]
            gh = r32(h[l]) @ r32(p["w_hh"]).T + p["b_hh"]
            H = h[l].shape[-1]
            i_r, i_z, i_n = gi[:, :H], gi[:, H:2 * H], gi[:, 2 * H:]
            h_r, h_z, h_n = gh[:, :H], gh[:, H:2 * H], gh[:, 2 * H:]
            r = jax.nn.sigmoid(i_r + h_r)
            z = jax.nn.sigmoid(i_z + h_z)
            n = jnp.tanh(i_n + r * h_n)
            h[l] = (1.0 - z) * n + z * h[l]
            xt = h[l]
        outs.append(xt)
    out = jnp.stack(outs)                                     # (S, B, H)
    logits = r32(out) @ r32(raw["out_w"]).T + raw["out_b"]
    return jax.nn.log_softmax(logits, axis=-1), jnp.stack(h)


if __name__ == "__main__":
    voc_size, emb_size, hid_size, n_layers = 32, 16, 32, 2
    seq_len, batch = 8, 2

    key = jax.random.PRNGKey(0)
    pkey, xkey = jax.random.split(key)
    params, raw = init_params(pkey, voc_size, emb_size, hid_size, n_layers)

    x = jax.random.randint(xkey, (seq_len, batch), 0, voc_size, jnp.int32)
    h0 = jnp.zeros((n_layers, batch, hid_size), jnp.float32)   # hidden=None -> zeros

    log_prob, hidden, _ = naive_decoder_forward(params, x, h0, voc_size=voc_size)
    jax.block_until_ready((log_prob, hidden))

    assert log_prob.shape == (seq_len, batch, voc_size)
    assert hidden.shape == (n_layers, batch, hid_size)
    # log_softmax sanity: rows sum to ~1 in prob space.
    assert jnp.allclose(jnp.sum(jnp.exp(log_prob), axis=-1), 1.0, atol=1e-3)

    # Loose numerical check vs. a pure-JAX reference (bf16-rounded operands).
    ref_logp, ref_hidden = reference_forward(raw, x, h0)
    assert float(jnp.max(jnp.abs(log_prob - ref_logp))) < 2e-1
    assert float(jnp.max(jnp.abs(hidden - ref_hidden))) < 1e-1

    print("KERNEL_OK")
</pallas_src>

<mosaic_0001>
module attributes {stable_mosaic.version = 11 : i64} {
  func.func @_proj_logsoftmax_kernel(%arg0: i32, %arg1: memref<128x128xbf16, #tpu.memory_space<vmem>>, %arg2: memref<128x128xbf16, #tpu.memory_space<vmem>>, %arg3: memref<1x128xf32, #tpu.memory_space<vmem>>, %arg4: memref<128x128xf32, #tpu.memory_space<vmem>>) attributes {dimension_semantics = [#tpu.dimension_semantics<parallel>], iteration_bounds = array<i64: 1>, scalar_prefetch = 0 : i64, scratch_operands = 0 : i64, tpu.core_type = #tpu.core_type<tc>, window_params = [{transform_indices = @transform_0, window_bounds = array<i64: 128, 128>}, {pipeline_mode = #tpu.pipeline_mode<synchronous>, transform_indices = @transform_1, window_bounds = array<i64: 128, 128>}, {pipeline_mode = #tpu.pipeline_mode<synchronous>, transform_indices = @transform_2, window_bounds = array<i64: 1, 128>}, {transform_indices = @transform_3, window_bounds = array<i64: 128, 128>}]} {
    %c0 = arith.constant 0 : index
    %c0_0 = arith.constant 0 : index
    %0 = vector.load %arg1[%c0, %c0_0] : memref<128x128xbf16, #tpu.memory_space<vmem>>, vector<128x128xbf16>
    %c0_1 = arith.constant 0 : index
    %c0_2 = arith.constant 0 : index
    %1 = vector.load %arg2[%c0_1, %c0_2] : memref<128x128xbf16, #tpu.memory_space<vmem>>, vector<128x128xbf16>
    %cst = arith.constant dense<0.000000e+00> : vector<128x128xf32>
    %2 = tpu.matmul %0, %1, %cst {dimension_numbers = #tpu.dot_dimension_numbers<[1], [0], [0], [1], [0, 0, 1, 1], [], []>} : vector<128x128xbf16>, vector<128x128xbf16>, vector<128x128xf32> -> vector<128x128xf32>
    %c0_3 = arith.constant 0 : index
    %c0_4 = arith.constant 0 : index
    %3 = vector.load %arg3[%c0_3, %c0_4] : memref<1x128xf32, #tpu.memory_space<vmem>>, vector<1x128xf32>
    %4 = vector.broadcast %3 : vector<1x128xf32> to vector<128x128xf32>
    %5 = arith.addf %2, %4 : vector<128x128xf32>
    %cst_5 = arith.constant dense<0xFF800000> : vector<128xf32>
    %6 = vector.multi_reduction <maximumf>, %5, %cst_5 [1] : vector<128x128xf32> to vector<128xf32>
    %7 = vector.shape_cast %6 : vector<128xf32> to vector<128x1xf32>
    %8 = vector.broadcast %7 : vector<128x1xf32> to vector<128x128xf32>
    %9 = arith.subf %5, %8 : vector<128x128xf32>
    %10 = math.exp %9 : vector<128x128xf32>
    %cst_6 = arith.constant dense<0.000000e+00> : vector<128xf32>
    %11 = vector.multi_reduction <add>, %10, %cst_6 [1] : vector<128x128xf32> to vector<128xf32>
    %12 = vector.shape_cast %11 : vector<128xf32> to vector<128x1xf32>
    %13 = math.log %12 : vector<128x1xf32>
    %14 = vector.broadcast %13 : vector<128x1xf32> to vector<128x128xf32>
    %15 = arith.subf %9, %14 : vector<128x128xf32>
    %c0_7 = arith.constant 0 : index
    %c0_8 = arith.constant 0 : index
    %16 = vector.load %arg4[%c0_7, %c0_8] : memref<128x128xf32, #tpu.memory_space<vmem>>, vector<128x128xf32>
    tpu.vector_store %arg4[%c0_7, %c0_8], %15 {strides = array<i32>} : memref<128x128xf32, #tpu.memory_space<vmem>>, vector<128x128xf32>,
    return
  }
  func.func @transform_0(%arg0: i32) -> (i32, i32) {
    %c0_i32 = arith.constant 0 : i32
    %c0_i32_0 = arith.constant 0 : i32
    return %arg0, %c0_i32 : i32, i32
  }
  func.func @transform_1(%arg0: i32) -> (i32, i32) {
    %c0_i32 = arith.constant 0 : i32
    %c0_i32_0 = arith.constant 0 : i32
    %c0_i32_1 = arith.constant 0 : i32
    return %c0_i32, %c0_i32_0 : i32, i32
  }
  func.func @transform_2(%arg0: i32) -> (i32, i32) {
    %c0_i32 = arith.constant 0 : i32
    %c0_i32_0 = arith.constant 0 : i32
    %c0_i32_1 = arith.constant 0 : i32
    return %c0_i32, %c0_i32_0 : i32, i32
  }
  func.func @transform_3(%arg0: i32) -> (i32, i32) {
    %c0_i32 = arith.constant 0 : i32
    %c0_i32_0 = arith.constant 0 : i32
    return %arg0, %c0_i32 : i32, i32
  }
}

module attributes {stable_mosaic.version = 11 : i64} {
  func.func @kernel(%arg0: i32, %arg1: memref<128x128xbf16, #tpu.memory_space<vmem>>, %arg2: memref<2x16x128xf32, #tpu.memory_space<vmem>>, %arg3: memref<128x384xbf16, #tpu.memory_space<vmem>>, %arg4: memref<128x384xbf16, #tpu.memory_space<vmem>>, %arg5: memref<1x384xf32, #tpu.memory_space<vmem>>, %arg6: memref<1x128xf32, #tpu.memory_space<vmem>>, %arg7: memref<128x384xbf16, #tpu.memory_space<vmem>>, %arg8: memref<128x384xbf16, #tpu.memory_space<vmem>>, %arg9: memref<1x384xf32, #tpu.memory_space<vmem>>, %arg10: memref<1x128xf32, #tpu.memory_space<vmem>>, %arg11: memref<128x128xbf16, #tpu.memory_space<vmem>>, %arg12: memref<2x16x128xf32, #tpu.memory_space<vmem>>, %arg13: memref<128x128xbf16, #tpu.memory_space<vmem>>, %arg14: memref<128x384xf32, #tpu.memory_space<vmem>>) attributes {dimension_semantics = [#tpu.dimension_semantics<arbitrary>], iteration_bounds = array<i64: 1>, scalar_prefetch = 0 : i64, scratch_operands = 2 : i64, tpu.core_type = #tpu.core_type<tc>, window_params = [{pipeline_mode = #tpu.pipeline_mode<synchronous>, transform_indices = @transform_0, window_bounds = array<i64: 128, 128>}, {pipeline_mode = #tpu.pipeline_mode<synchronous>, transform_indices = @transform_1, window_bounds = array<i64: 2, 16, 128>}, {pipeline_mode = #tpu.pipeline_mode<synchronous>, transform_indices = @transform_2, window_bounds = array<i64: 128, 384>}, {pipeline_mode = #tpu.pipeline_mode<synchronous>, transform_indices = @transform_3, window_bounds = array<i64: 128, 384>}, {pipeline_mode = #tpu.pipeline_mode<synchronous>, transform_indices = @transform_4, window_bounds = array<i64: 1, 384>}, {pipeline_mode = #tpu.pipeline_mode<synchronous>, transform_indices = @transform_5, window_bounds = array<i64: 1, 128>}, {pipeline_mode = #tpu.pipeline_mode<synchronous>, transform_indices = @transform_6, window_bounds = array<i64: 128, 384>}, {pipeline_mode = #tpu.pipeline_mode<synchronous>, transform_indices = @transform_7, window_bounds = array<i64: 128, 384>}, {pipeline_mode = #tpu.pipeline_mode<synchronous>, transform_indices = @transform_8, window_bounds = array<i64: 1, 384>}, {pipeline_mode = #tpu.pipeline_mode<synchronous>, transform_indices = @transform_9, window_bounds = array<i64: 1, 128>}, {pipeline_mode = #tpu.pipeline_mode<synchronous>, transform_indices = @transform_10, window_bounds = array<i64: 128, 128>}, {pipeline_mode = #tpu.pipeline_mode<synchronous>, transform_indices = @transform_11, window_bounds = array<i64: 2, 16, 128>}]} {
    %c0 = arith.constant 0 : index
    %c0_0 = arith.constant 0 : index
    %0 = vector.load %arg3[%c0, %c0_0] : memref<128x384xbf16, #tpu.memory_space<vmem>>, vector<128x384xbf16>
    %c0_1 = arith.constant 0 : index
    %c0_2 = arith.constant 0 : index
    %1 = vector.load %arg4[%c0_1, %c0_2] : memref<128x384xbf16, #tpu.memory_space<vmem>>, vector<128x384xbf16>
    %c0_3 = arith.constant 0 : index
    %c0_4 = arith.constant 0 : index
    %2 = vector.load %arg5[%c0_3, %c0_4] : memref<1x384xf32, #tpu.memory_space<vmem>>, vector<1x384xf32>
    %c0_5 = arith.constant 0 : index
    %c0_6 = arith.constant 0 : index
    %3 = vector.load %arg6[%c0_5, %c0_6] : memref<1x128xf32, #tpu.memory_space<vmem>>, vector<1x128xf32>
    %4 = vector.shape_cast %3 : vector<1x128xf32> to vector<1x128xf32>
    %5 = vector.broadcast %4 : vector<1x128xf32> to vector<16x128xf32>
    %c0_7 = arith.constant 0 : index
    %c0_8 = arith.constant 0 : index
    %c0_9 = arith.constant 0 : index
    %6 = vector.load %arg2[%c0_7, %c0_8, %c0_9] : memref<2x16x128xf32, #tpu.memory_space<vmem>>, vector<1x16x128xf32>
    %7 = vector.shape_cast %6 : vector<1x16x128xf32> to vector<16x128xf32>
    %c0_10 = arith.constant 0 : index
    %c0_11 = arith.constant 0 : index
    %8 = vector.load %arg1[%c0_10, %c0_11] : memref<128x128xbf16, #tpu.memory_space<vmem>>, vector<128x128xbf16>
    %cst = arith.constant dense<0.000000e+00> : vector<128x384xf32>
    %9 = tpu.matmul %8, %0, %cst {dimension_numbers = #tpu.dot_dimension_numbers<[1], [0], [0], [1], [0, 0, 1, 1], [], []>} : vector<128x128xbf16>, vector<128x384xbf16>, vector<128x384xf32> -> vector<128x384xf32>
    %10 = vector.broadcast %2 : vector<1x384xf32> to vector<128x384xf32>
    %11 = arith.addf %9, %10 : vector<128x384xf32>
    %c0_12 = arith.constant 0 : index
    %c0_13 = arith.constant 0 : index
    %12 = vector.load %arg14[%c0_12, %c0_13] : memref<128x384xf32, #tpu.memory_space<vmem>>, vector<128x384xf32>
    tpu.vector_store %arg14[%c0_12, %c0_13], %11 {strides = array<i32>} : memref<128x384xf32, #tpu.memory_space<vmem>>, vector<128x384xf32>,
    %c0_i32 = arith.constant 0 : i32
    %c16_i32 = arith.constant 16 : i32
    %13 = arith.muli %c0_i32, %c16_i32 : i32
    %14 = tpu.assume_multiple %13, 16 : i32
    %15 = arith.index_cast %14 : i32 to index
    %c0_14 = arith.constant 0 : index
    %16 = vector.load %arg14[%15, %c0_14] : memref<128x384xf32, #tpu.memory_space<vmem>>, vector<16x384xf32>
    %17 = arith.truncf %7 : vector<16x128xf32> to vector<16x128xbf16>
    %cst_15 = arith.constant dense<0.000000e+00> : vector<16x384xf32>
    %18 = tpu.matmul %17, %1, %cst_15 {dimension_numbers = #tpu.dot_dimension_numbers<[1], [0], [0], [1], [0, 0, 1, 1], [], []>} : vector<16x128xbf16>, vector<128x384xbf16>, vector<16x384xf32> -> vector<16x384xf32>
    %19 = vector.extract_strided_slice %16 {offsets = [0, 0], sizes = [16, 128], strides = [1, 1]} : vector<16x384xf32> to vector<16x128xf32>
    %20 = vector.extract_strided_slice %16 {offsets = [0, 128], sizes = [16, 128], strides = [1, 1]} : vector<16x384xf32> to vector<16x128xf32>
    %21 = vector.extract_strided_slice %16 {offsets = [0, 256], sizes = [16, 128], strides = [1, 1]} : vector<16x384xf32> to vector<16x128xf32>
    %22 = vector.extract_strided_slice %18 {offsets = [0, 0], sizes = [16, 128], strides = [1, 1]} : vector<16x384xf32> to vector<16x128xf32>
    %23 = vector.extract_strided_slice %18 {offsets = [0, 128], sizes = [16, 128], strides = [1, 1]} : vector<16x384xf32> to vector<16x128xf32>
    %24 = vector.extract_strided_slice %18 {offsets = [0, 256], sizes = [16, 128], strides = [1, 1]} : vector<16x384xf32> to vector<16x128xf32>
    %25 = arith.addf %24, %5 : vector<16x128xf32>
    %26 = arith.addf %19, %22 : vector<16x128xf32>
    %27 = arith.negf %26 : vector<16x128xf32>
    %28 = math.exp %27 : vector<16x128xf32>
    %cst_16 = arith.constant 1.000000e+00 : f32
    %29 = vector.broadcast %cst_16 : f32 to vector<16x128xf32>
    %30 = arith.addf %29, %28 : vector<16x128xf32>
    %31 = arith.divf %29, %30 : vector<16x128xf32>
    %32 = arith.addf %20, %23 : vector<16x128xf32>
    %33 = arith.negf %32 : vector<16x128xf32>
    %34 = math.exp %33 : vector<16x128xf32>
    %cst_17 = arith.constant 1.000000e+00 : f32
    %35 = vector.broadcast %cst_17 : f32 to vector<16x128xf32>
    %36 = arith.addf %35, %34 : vector<16x128xf32>
    %37 = arith.divf %35, %36 : vector<16x128xf32>
    %38 = arith.mulf %31, %25 : vector<16x128xf32>
    %39 = arith.addf %21, %38 : vector<16x128xf32>
    %40 = math.tanh %39 : vector<16x128xf32>
    %cst_18 = arith.constant 1.000000e+00 : f32
    %41 = vector.broadcast %cst_18 : f32 to vector<16x128xf32>
    %42 = arith.subf %41, %37 : vector<16x128xf32>
    %43 = arith.mulf %42, %40 : vector<16x128xf32>
    %44 = arith.mulf %37, %7 : vector<16x128xf32>
    %45 = arith.addf %43, %44 : vector<16x128xf32>
    %c16_i32_19 = arith.constant 16 : i32
    %46 = arith.muli %c0_i32, %c16_i32_19 : i32
    %c0_i32_20 = arith.constant 0 : i32
    %47 = arith.addi %c0_i32_20, %46 : i32
    %48 = tpu.assume_multiple %47, 16 : i32
    %49 = arith.truncf %45 : vector<16x128xf32> to vector<16x128xbf16>
    %50 = arith.index_cast %48 : i32 to index
    %c0_21 = arith.constant 0 : index
    %51 = vector.load %arg13[%50, %c0_21] : memref<128x128xbf16, #tpu.memory_space<vmem>>, vector<16x128xbf16>
    tpu.vector_store %arg13[%50, %c0_21], %49 {strides = array<i32>} : memref<128x128xbf16, #tpu.memory_space<vmem>>, vector<16x128xbf16>,
    %c1_i32 = arith.constant 1 : i32
    %c16_i32_22 = arith.constant 16 : i32
    %52 = arith.muli %c1_i32, %c16_i32_22 : i32
    %53 = tpu.assume_multiple %52, 16 : i32
    %54 = arith.index_cast %53 : i32 to index
    %c0_23 = arith.constant 0 : index
    %55 = vector.load %arg14[%54, %c0_23] : memref<128x384xf32, #tpu.memory_space<vmem>>, vector<16x384xf32>
    %56 = arith.truncf %45 : vector<16x128xf32> to vector<16x128xbf16>
    %cst_24 = arith.constant dense<0.000000e+00> : vector<16x384xf32>
    %57 = tpu.matmul %56, %1, %cst_24 {dimension_numbers = #tpu.dot_dimension_numbers<[1], [0], [0], [1], [0, 0, 1, 1], [], []>} : vector<16x128xbf16>, vector<128x384xbf16>, vector<16x384xf32> -> vector<16x384xf32>
    %58 = vector.extract_strided_slice %55 {offsets = [0, 0], sizes = [16, 128], strides = [1, 1]} : vector<16x384xf32> to vector<16x128xf32>
    %59 = vector.extract_strided_slice %55 {offsets = [0, 128], sizes = [16, 128], strides = [1, 1]} : vector<16x384xf32> to vector<16x128xf32>
    %60 = vector.extract_strided_slice %55 {offsets = [0, 256], sizes = [16, 128], strides = [1, 1]} : vector<16x384xf32> to vector<16x128xf32>
    %61 = vector.extract_strided_slice %57 {offsets = [0, 0], sizes = [16, 128], strides = [1, 1]} : vector<16x384xf32> to vector<16x128xf32>
    %62 = vector.extract_strided_slice %57 {offsets = [0, 128], sizes = [16, 128], strides = [1, 1]} : vector<16x384xf32> to vector<16x128xf32>
    %63 = vector.extract_strided_slice %57 {offsets = [0, 256], sizes = [16, 128], strides = [1, 1]} : vector<16x384xf32> to vector<16x128xf32>
    %64 = arith.addf %63, %5 : vector<16x128xf32>
    %65 = arith.addf %58, %61 : vector<16x128xf32>
    %66 = arith.negf %65 : vector<16x128xf32>
    %67 = math.exp %66 : vector<16x128xf32>
    %cst_25 = arith.constant 1.000000e+00 : f32
    %68 = vector.broadcast %cst_25 : f32 to vector<16x128xf32>
    %69 = arith.addf %68, %67 : vector<16x128xf32>
    %70 = arith.divf %68, %69 : vector<16x128xf32>
    %71 = arith.addf %59, %62 : vector<16x128xf32>
    %72 = arith.negf %71 : vector<16x128xf32>
    %73 = math.exp %72 : vector<16x128xf32>
    %cst_26 = arith.constant 1.000000e+00 : f32
    %74 = vector.broadcast %cst_26 : f32 to vector<16x128xf32>
    %75 = arith.addf %74, %73 : vector<16x128xf32>
    %76 = arith.divf %74, %75 : vector<16x128xf32>
    %77 = arith.mulf %70, %64 : vector<16x128xf32>
    %78 = arith.addf %60, %77 : vector<16x128xf32>
    %79 = math.tanh %78 : vector<16x128xf32>
    %cst_27 = arith.constant 1.000000e+00 : f32
    %80 = vector.broadcast %cst_27 : f32 to vector<16x128xf32>
    %81 = arith.subf %80, %76 : vector<16x128xf32>
    %82 = arith.mulf %81, %79 : vector<16x128xf32>
    %83 = arith.mulf %76, %45 : vector<16x128xf32>
    %84 = arith.addf %82, %83 : vector<16x128xf32>
    %c16_i32_28 = arith.constant 16 : i32
    %85 = arith.muli %c1_i32, %c16_i32_28 : i32
    %c0_i32_29 = arith.constant 0 : i32
    %86 = arith.addi %c0_i32_29, %85 : i32
    %87 = tpu.assume_multiple %86, 16 : i32
    %88 = arith.truncf %84 : vector<16x128xf32> to vector<16x128xbf16>
    %89 = arith.index_cast %87 : i32 to index
    %c0_30 = arith.constant 0 : index
    %90 = vector.load %arg13[%89, %c0_30] : memref<128x128xbf16, #tpu.memory_space<vmem>>, vector<16x128xbf16>
    tpu.vector_store %arg13[%89, %c0_30], %88 {strides = array<i32>} : memref<128x128xbf16, #tpu.memory_space<vmem>>, vector<16x128xbf16>,
    %c2_i32 = arith.constant 2 : i32
    %c16_i32_31 = arith.constant 16 : i32
    %91 = arith.muli %c2_i32, %c16_i32_31 : i32
    %92 = tpu.assume_multiple %91, 16 : i32
    %93 = arith.index_cast %92 : i32 to index
    %c0_32 = arith.constant 0 : index
    %94 = vector.load %arg14[%93, %c0_32] : memref<128x384xf32, #tpu.memory_space<vmem>>, vector<16x384xf32>
    %95 = arith.truncf %84 : vector<16x128xf32> to vector<16x128xbf16>
    %cst_33 = arith.constant dense<0.000000e+00> : vector<16x384xf32>
    %96 = tpu.matmul %95, %1, %cst_33 {dimension_numbers = #tpu.dot_dimension_numbers<[1], [0], [0], [1], [0, 0, 1, 1], [], []>} : vector<16x128xbf16>, vector<128x384xbf16>, vector<16x384xf32> -> vector<16x384xf32>
    %97 = vector.extract_strided_slice %94 {offsets = [0, 0], sizes = [16, 128], strides = [1, 1]} : vector<16x384xf32> to vector<16x128xf32>
    %98 = vector.extract_strided_slice %94 {offsets = [0, 128], sizes = [16, 128], strides = [1, 1]} : vector<16x384xf32> to vector<16x128xf32>
    %99 = vector.extract_strided_slice %94 {offsets = [0, 256], sizes = [16, 128], strides = [1, 1]} : vector<16x384xf32> to vector<16x128xf32>
    %100 = vector.extract_strided_slice %96 {offsets = [0, 0], sizes = [16, 128], strides = [1, 1]} : vector<16x384xf32> to vector<16x128xf32>
    %101 = vector.extract_strided_slice %96 {offsets = [0, 128], sizes = [16, 128], strides = [1, 1]} : vector<16x384xf32> to vector<16x128xf32>
    %102 = vector.extract_strided_slice %96 {offsets = [0, 256], sizes = [16, 128], strides = [1, 1]} : vector<16x384xf32> to vector<16x128xf32>
    %103 = arith.addf %102, %5 : vector<16x128xf32>
    %104 = arith.addf %97, %100 : vector<16x128xf32>
    %105 = arith.negf %104 : vector<16x128xf32>
    %106 = math.exp %105 : vector<16x128xf32>
    %cst_34 = arith.constant 1.000000e+00 : f32
    %107 = vector.broadcast %cst_34 : f32 to vector<16x128xf32>
    %108 = arith.addf %107, %106 : vector<16x128xf32>
    %109 = arith.divf %107, %108 : vector<16x128xf32>
    %110 = arith.addf %98, %101 : vector<16x128xf32>
    %111 = arith.negf %110 : vector<16x128xf32>
    %112 = math.exp %111 : vector<16x128xf32>
    %cst_35 = arith.constant 1.000000e+00 : f32
    %113 = vector.broadcast %cst_35 : f32 to vector<16x128xf32>
    %114 = arith.addf %113, %112 : vector<16x128xf32>
    %115 = arith.divf %113, %114 : vector<16x128xf32>
    %116 = arith.mulf %109, %103 : vector<16x128xf32>
    %117 = arith.addf %99, %116 : vector<16x128xf32>
    %118 = math.tanh %117 : vector<16x128xf32>
    %cst_36 = arith.constant 1.000000e+00 : f32
    %119 = vector.broadcast %cst_36 : f32 to vector<16x128xf32>
    %120 = arith.subf %119, %115 : vector<16x128xf32>
    %121 = arith.mulf %120, %118 : vector<16x128xf32>
    %122 = arith.mulf %115, %84 : vector<16x128xf32>
    %123 = arith.addf %121, %122 : vector<16x128xf32>
    %c16_i32_37 = arith.constant 16 : i32
    %124 = arith.muli %c2_i32, %c16_i32_37 : i32
    %c0_i32_38 = arith.constant 0 : i32
    %125 = arith.addi %c0_i32_38, %124 : i32
    %126 = tpu.assume_multiple %125, 16 : i32
    %127 = arith.truncf %123 : vector<16x128xf32> to vector<16x128xbf16>
    %128 = arith.index_cast %126 : i32 to index
    %c0_39 = arith.constant 0 : index
    %129 = vector.load %arg13[%128, %c0_39] : memref<128x128xbf16, #tpu.memory_space<vmem>>, vector<16x128xbf16>
    tpu.vector_store %arg13[%128, %c0_39], %127 {strides = array<i32>} : memref<128x128xbf16, #tpu.memory_space<vmem>>, vector<16x128xbf16>,
    %c3_i32 = arith.constant 3 : i32
    %c16_i32_40 = arith.constant 16 : i32
    %130 = arith.muli %c3_i32, %c16_i32_40 : i32
    %131 = tpu.assume_multiple %130, 16 : i32
    %132 = arith.index_cast %131 : i32 to index
    %c0_41 = arith.constant 0 : index
    %133 = vector.load %arg14[%132, %c0_41] : memref<128x384xf32, #tpu.memory_space<vmem>>, vector<16x384xf32>
    %134 = arith.truncf %123 : vector<16x128xf32> to vector<16x128xbf16>
    %cst_42 = arith.constant dense<0.000000e+00> : vector<16x384xf32>
    %135 = tpu.matmul %134, %1, %cst_42 {dimension_numbers = #tpu.dot_dimension_numbers<[1], [0], [0], [1], [0, 0, 1, 1], [], []>} : vector<16x128xbf16>, vector<128x384xbf16>, vector<16x384xf32> -> vector<16x384xf32>
    %136 = vector.extract_strided_slice %133 {offsets = [0, 0], sizes = [16, 128], strides = [1, 1]} : vector<16x384xf32> to vector<16x128xf32>
    %137 = vector.extract_strided_slice %133 {offsets = [0, 128], sizes = [16, 128], strides = [1, 1]} : vector<16x384xf32> to vector<16x128xf32>
    %138 = vector.extract_strided_slice %133 {offsets = [0, 256], sizes = [16, 128], strides = [1, 1]} : vector<16x384xf32> to vector<16x128xf32>
    %139 = vector.extract_strided_slice %135 {offsets = [0, 0], sizes = [16, 128], strides = [1, 1]} : vector<16x384xf32> to vector<16x128xf32>
    %140 = vector.extract_strided_slice %135 {offsets = [0, 128], sizes = [16, 128], strides = [1, 1]} : vector<16x384xf32> to vector<16x128xf32>
    %141 = vector.extract_strided_slice %135 {offsets = [0, 256], sizes = [16, 128], strides = [1, 1]} : vector<16x384xf32> to vector<16x128xf32>
    %142 = arith.addf %141, %5 : vector<16x128xf32>
    %143 = arith.addf %136, %139 : vector<16x128xf32>
    %144 = arith.negf %143 : vector<16x128xf32>
    %145 = math.exp %144 : vector<16x128xf32>
    %cst_43 = arith.constant 1.000000e+00 : f32
    %146 = vector.broadcast %cst_43 : f32 to vector<16x128xf32>
    %147 = arith.addf %146, %145 : vector<16x128xf32>
    %148 = arith.divf %146, %147 : vector<16x128xf32>
    %149 = arith.addf %137, %140 : vector<16x128xf32>
    %150 = arith.negf %149 : vector<16x128xf32>
    %151 = math.exp %150 : vector<16x128xf32>
    %cst_44 = arith.constant 1.000000e+00 : f32
    %152 = vector.broadcast %cst_44 : f32 to vector<16x128xf32>
    %153 = arith.addf %152, %151 : vector<16x128xf32>
    %154 = arith.divf %152, %153 : vector<16x128xf32>
    %155 = arith.mulf %148, %142 : vector<16x128xf32>
    %156 = arith.addf %138, %155 : vector<16x128xf32>
    %157 = math.tanh %156 : vector<16x128xf32>
    %cst_45 = arith.constant 1.000000e+00 : f32
    %158 = vector.broadcast %cst_45 : f32 to vector<16x128xf32>
    %159 = arith.subf %158, %154 : vector<16x128xf32>
    %160 = arith.mulf %159, %157 : vector<16x128xf32>
    %161 = arith.mulf %154, %123 : vector<16x128xf32>
    %162 = arith.addf %160, %161 : vector<16x128xf32>
    %c16_i32_46 = arith.constant 16 : i32
    %163 = arith.muli %c3_i32, %c16_i32_46 : i32
    %c0_i32_47 = arith.constant 0 : i32
    %164 = arith.addi %c0_i32_47, %163 : i32
    %165 = tpu.assume_multiple %164, 16 : i32
    %166 = arith.truncf %162 : vector<16x128xf32> to vector<16x128xbf16>
    %167 = arith.index_cast %165 : i32 to index
    %c0_48 = arith.constant 0 : index
    %168 = vector.load %arg13[%167, %c0_48] : memref<128x128xbf16, #tpu.memory_space<vmem>>, vector<16x128xbf16>
    tpu.vector_store %arg13[%167, %c0_48], %166 {strides = array<i32>} : memref<128x128xbf16, #tpu.memory_space<vmem>>, vector<16x128xbf16>,
    %c4_i32 = arith.constant 4 : i32
    %c16_i32_49 = arith.constant 16 : i32
    %169 = arith.muli %c4_i32, %c16_i32_49 : i32
    %170 = tpu.assume_multiple %169, 16 : i32
    %171 = arith.index_cast %170 : i32 to index
    %c0_50 = arith.constant 0 : index
    %172 = vector.load %arg14[%171, %c0_50] : memref<128x384xf32, #tpu.memory_space<vmem>>, vector<16x384xf32>
    %173 = arith.truncf %162 : vector<16x128xf32> to vector<16x128xbf16>
    %cst_51 = arith.constant dense<0.000000e+00> : vector<16x384xf32>
    %174 = tpu.matmul %173, %1, %cst_51 {dimension_numbers = #tpu.dot_dimension_numbers<[1], [0], [0], [1], [0, 0, 1, 1], [], []>} : vector<16x128xbf16>, vector<128x384xbf16>, vector<16x384xf32> -> vector<16x384xf32>
    %175 = vector.extract_strided_slice %172 {offsets = [0, 0], sizes = [16, 128], strides = [1, 1]} : vector<16x384xf32> to vector<16x128xf32>
    %176 = vector.extract_strided_slice %172 {offsets = [0, 128], sizes = [16, 128], strides = [1, 1]} : vector<16x384xf32> to vector<16x128xf32>
    %177 = vector.extract_strided_slice %172 {offsets = [0, 256], sizes = [16, 128], strides = [1, 1]} : vector<16x384xf32> to vector<16x128xf32>
    %178 = vector.extract_strided_slice %174 {offsets = [0, 0], sizes = [16, 128], strides = [1, 1]} : vector<16x384xf32> to vector<16x128xf32>
    %179 = vector.extract_strided_slice %174 {offsets = [0, 128], sizes = [16, 128], strides = [1, 1]} : vector<16x384xf32> to vector<16x128xf32>
    %180 = vector.extract_strided_slice %174 {offsets = [0, 256], sizes = [16, 128], strides = [1, 1]} : vector<16x384xf32> to vector<16x128xf32>
    %181 = arith.addf %180, %5 : vector<16x128xf32>
    %182 = arith.addf %175, %178 : vector<16x128xf32>
    %183 = arith.negf %182 : vector<16x128xf32>
    %184 = math.exp %183 : vector<16x128xf32>
    %cst_52 = arith.constant 1.000000e+00 : f32
    %185 = vector.broadcast %cst_52 : f32 to vector<16x128xf32>
    %186 = arith.addf %185, %184 : vector<16x128xf32>
    %187 = arith.divf %185, %186 : vector<16x128xf32>
    %188 = arith.addf %176, %179 : vector<16x128xf32>
    %189 = arith.negf %188 : vector<16x128xf32>
    %190 = math.exp %189 : vector<16x128xf32>
    %cst_53 = arith.constant 1.000000e+00 : f32
    %191 = vector.broadcast %cst_53 : f32 to vector<16x128xf32>
    %192 = arith.addf %191, %190 : vector<16x128xf32>
    %193 = arith.divf %191, %192 : vector<16x128xf32>
    %194 = arith.mulf %187, %181 : vector<16x128xf32>
    %195 = arith.addf %177, %194 : vector<16x128xf32>
    %196 = math.tanh %195 : vector<16x128xf32>
    %cst_54 = arith.constant 1.000000e+00 : f32
    %197 = vector.broadcast %cst_54 : f32 to vector<16x128xf32>
    %198 = arith.subf %197, %193 : vector<16x128xf32>
    %199 = arith.mulf %198, %196 : vector<16x128xf32>
    %200 = arith.mulf %193, %162 : vector<16x128xf32>
    %201 = arith.addf %199, %200 : vector<16x128xf32>
    %c16_i32_55 = arith.constant 16 : i32
    %202 = arith.muli %c4_i32, %c16_i32_55 : i32
    %c0_i32_56 = arith.constant 0 : i32
    %203 = arith.addi %c0_i32_56, %202 : i32
    %204 = tpu.assume_multiple %203, 16 : i32
    %205 = arith.truncf %201 : vector<16x128xf32> to vector<16x128xbf16>
    %206 = arith.index_cast %204 : i32 to index
    %c0_57 = arith.constant 0 : index
    %207 = vector.load %arg13[%206, %c0_57] : memref<128x128xbf16, #tpu.memory_space<vmem>>, vector<16x128xbf16>
    tpu.vector_store %arg13[%206, %c0_57], %205 {strides = array<i32>} : memref<128x128xbf16, #tpu.memory_space<vmem>>, vector<16x128xbf16>,
    %c5_i32 = arith.constant 5 : i32
    %c16_i32_58 = arith.constant 16 : i32
    %208 = arith.muli %c5_i32, %c16_i32_58 : i32
    %209 = tpu.assume_multiple %208, 16 : i32
    %210 = arith.index_cast %209 : i32 to index
    %c0_59 = arith.constant 0 : index
    %211 = vector.load %arg14[%210, %c0_59] : memref<128x384xf32, #tpu.memory_space<vmem>>, vector<16x384xf32>
    %212 = arith.truncf %201 : vector<16x128xf32> to vector<16x128xbf16>
    %cst_60 = arith.constant dense<0.000000e+00> : vector<16x384xf32>
    %213 = tpu.matmul %212, %1, %cst_60 {dimension_numbers = #tpu.dot_dimension_numbers<[1], [0], [0], [1], [0, 0, 1, 1], [], []>} : vector<16x128xbf16>, vector<128x384xbf16>, vector<16x384xf32> -> vector<16x384xf32>
    %214 = vector.extract_strided_slice %211 {offsets = [0, 0], sizes = [16, 128], strides = [1, 1]} : vector<16x384xf32> to vector<16x128xf32>
    %215 = vector.extract_strided_slice %211 {offsets = [0, 128], sizes = [16, 128], strides = [1, 1]} : vector<16x384xf32> to vector<16x128xf32>
    %216 = vector.extract_strided_slice %211 {offsets = [0, 256], sizes = [16, 128], strides = [1, 1]} : vector<16x384xf32> to vector<16x128xf32>
    %217 = vector.extract_strided_slice %213 {offsets = [0, 0], sizes = [16, 128], strides = [1, 1]} : vector<16x384xf32> to vector<16x128xf32>
    %218 = vector.extract_strided_slice %213 {offsets = [0, 128], sizes = [16, 128], strides = [1, 1]} : vector<16x384xf32> to vector<16x128xf32>
    %219 = vector.extract_strided_slice %213 {offsets = [0, 256], sizes = [16, 128], strides = [1, 1]} : vector<16x384xf32> to vector<16x128xf32>
    %220 = arith.addf %219, %5 : vector<16x128xf32>
    %221 = arith.addf %214, %217 : vector<16x128xf32>
    %222 = arith.negf %221 : vector<16x128xf32>
    %223 = math.exp %222 : vector<16x128xf32>
    %cst_61 = arith.constant 1.000000e+00 : f32
    %224 = vector.broadcast %cst_61 : f32 to vector<16x128xf32>
    %225 = arith.addf %224, %223 : vector<16x128xf32>
    %226 = arith.divf %224, %225 : vector<16x128xf32>
    %227 = arith.addf %215, %218 : vector<16x128xf32>
    %228 = arith.negf %227 : vector<16x128xf32>
    %229 = math.exp %228 : vector<16x128xf32>
    %cst_62 = arith.constant 1.000000e+00 : f32
    %230 = vector.broadcast %cst_62 : f32 to vector<16x128xf32>
    %231 = arith.addf %230, %229 : vector<16x128xf32>
    %232 = arith.divf %230, %231 : vector<16x128xf32>
    %233 = arith.mulf %226, %220 : vector<16x128xf32>
    %234 = arith.addf %216, %233 : vector<16x128xf32>
    %235 = math.tanh %234 : vector<16x128xf32>
    %cst_63 = arith.constant 1.000000e+00 : f32
    %236 = vector.broadcast %cst_63 : f32 to vector<16x128xf32>
    %237 = arith.subf %236, %232 : vector<16x128xf32>
    %238 = arith.mulf %237, %235 : vector<16x128xf32>
    %239 = arith.mulf %232, %201 : vector<16x128xf32>
    %240 = arith.addf %238, %239 : vector<16x128xf32>
    %c16_i32_64 = arith.constant 16 : i32
    %241 = arith.muli %c5_i32, %c16_i32_64 : i32
    %c0_i32_65 = arith.constant 0 : i32
    %242 = arith.addi %c0_i32_65, %241 : i32
    %243 = tpu.assume_multiple %242, 16 : i32
    %244 = arith.truncf %240 : vector<16x128xf32> to vector<16x128xbf16>
    %245 = arith.index_cast %243 : i32 to index
    %c0_66 = arith.constant 0 : index
    %246 = vector.load %arg13[%245, %c0_66] : memref<128x128xbf16, #tpu.memory_space<vmem>>, vector<16x128xbf16>
    tpu.vector_store %arg13[%245, %c0_66], %244 {strides = array<i32>} : memref<128x128xbf16, #tpu.memory_space<vmem>>, vector<16x128xbf16>,
    %c6_i32 = arith.constant 6 : i32
    %c16_i32_67 = arith.constant 16 : i32
    %247 = arith.muli %c6_i32, %c16_i32_67 : i32
    %248 = tpu.assume_multiple %247, 16 : i32
    %249 = arith.index_cast %248 : i32 to index
    %c0_68 = arith.constant 0 : index
    %250 = vector.load %arg14[%249, %c0_68] : memref<128x384xf32, #tpu.memory_space<vmem>>, vector<16x384xf32>
    %251 = arith.truncf %240 : vector<16x128xf32> to vector<16x128xbf16>
    %cst_69 = arith.constant dense<0.000000e+00> : vector<16x384xf32>
    %252 = tpu.matmul %251, %1, %cst_69 {dimension_numbers = #tpu.dot_dimension_numbers<[1], [0], [0], [1], [0, 0, 1, 1], [], []>} : vector<16x128xbf16>, vector<128x384xbf16>, vector<16x384xf32> -> vector<16x384xf32>
    %253 = vector.extract_strided_slice %250 {offsets = [0, 0], sizes = [16, 128], strides = [1, 1]} : vector<16x384xf32> to vector<16x128xf32>
    %254 = vector.extract_strided_slice %250 {offsets = [0, 128], sizes = [16, 128], strides = [1, 1]} : vector<16x384xf32> to vector<16x128xf32>
    %255 = vector.extract_strided_slice %250 {offsets = [0, 256], sizes = [16, 128], strides = [1, 1]} : vector<16x384xf32> to vector<16x128xf32>
    %256 = vector.extract_strided_slice %252 {offsets = [0, 0], sizes = [16, 128], strides = [1, 1]} : vector<16x384xf32> to vector<16x128xf32>
    %257 = vector.extract_strided_slice %252 {offsets = [0, 128], sizes = [16, 128], strides = [1, 1]} : vector<16x384xf32> to vector<16x128xf32>
    %258 = vector.extract_strided_slice %252 {offsets = [0, 256], sizes = [16, 128], strides = [1, 1]} : vector<16x384xf32> to vector<16x128xf32>
    %259 = arith.addf %258, %5 : vector<16x128xf32>
    %260 = arith.addf %253, %256 : vector<16x128xf32>
    %261 = arith.negf %260 : vector<16x128xf32>
    %262 = math.exp %261 : vector<16x128xf32>
    %cst_70 = arith.constant 1.000000e+00 : f32
    %263 = vector.broadcast %cst_70 : f32 to vector<16x128xf32>
    %264 = arith.addf %263, %262 : vector<16x128xf32>
    %265 = arith.divf %263, %264 : vector<16x128xf32>
    %266 = arith.addf %254, %257 : vector<16x128xf32>
    %267 = arith.negf %266 : vector<16x128xf32>
    %268 = math.exp %267 : vector<16x128xf32>
    %cst_71 = arith.constant 1.000000e+00 : f32
    %269 = vector.broadcast %cst_71 : f32 to vector<16x128xf32>
    %270 = arith.addf %269, %268 : vector<16x128xf32>
    %271 = arith.divf %269, %270 : vector<16x128xf32>
    %272 = arith.mulf %265, %259 : vector<16x128xf32>
    %273 = arith.addf %255, %272 : vector<16x128xf32>
    %274 = math.tanh %273 : vector<16x128xf32>
    %cst_72 = arith.constant 1.000000e+00 : f32
    %275 = vector.broadcast %cst_72 : f32 to vector<16x128xf32>
    %276 = arith.subf %275, %271 : vector<16x128xf32>
    %277 = arith.mulf %276, %274 : vector<16x128xf32>
    %278 = arith.mulf %271, %240 : vector<16x128xf32>
    %279 = arith.addf %277, %278 : vector<16x128xf32>
    %c16_i32_73 = arith.constant 16 : i32
    %280 = arith.muli %c6_i32, %c16_i32_73 : i32
    %c0_i32_74 = arith.constant 0 : i32
    %281 = arith.addi %c0_i32_74, %280 : i32
    %282 = tpu.assume_multiple %281, 16 : i32
    %283 = arith.truncf %279 : vector<16x128xf32> to vector<16x128xbf16>
    %284 = arith.index_cast %282 : i32 to index
    %c0_75 = arith.constant 0 : index
    %285 = vector.load %arg13[%284, %c0_75] : memref<128x128xbf16, #tpu.memory_space<vmem>>, vector<16x128xbf16>
    tpu.vector_store %arg13[%284, %c0_75], %283 {strides = array<i32>} : memref<128x128xbf16, #tpu.memory_space<vmem>>, vector<16x128xbf16>,
    %c7_i32 = arith.constant 7 : i32
    %c16_i32_76 = arith.constant 16 : i32
    %286 = arith.muli %c7_i32, %c16_i32_76 : i32
    %287 = tpu.assume_multiple %286, 16 : i32
    %288 = arith.index_cast %287 : i32 to index
    %c0_77 = arith.constant 0 : index
    %289 = vector.load %arg14[%288, %c0_77] : memref<128x384xf32, #tpu.memory_space<vmem>>, vector<16x384xf32>
    %290 = arith.truncf %279 : vector<16x128xf32> to vector<16x128xbf16>
    %cst_78 = arith.constant dense<0.000000e+00> : vector<16x384xf32>
    %291 = tpu.matmul %290, %1, %cst_78 {dimension_numbers = #tpu.dot_dimension_numbers<[1], [0], [0], [1], [0, 0, 1, 1], [], []>} : vector<16x128xbf16>, vector<128x384xbf16>, vector<16x384xf32> -> vector<16x384xf32>
    %292 = vector.extract_strided_slice %289 {offsets = [0, 0], sizes = [16, 128], strides = [1, 1]} : vector<16x384xf32> to vector<16x128xf32>
    %293 = vector.extract_strided_slice %289 {offsets = [0, 128], sizes = [16, 128], strides = [1, 1]} : vector<16x384xf32> to vector<16x128xf32>
    %294 = vector.extract_strided_slice %289 {offsets = [0, 256], sizes = [16, 128], strides = [1, 1]} : vector<16x384xf32> to vector<16x128xf32>
    %295 = vector.extract_strided_slice %291 {offsets = [0, 0], sizes = [16, 128], strides = [1, 1]} : vector<16x384xf32> to vector<16x128xf32>
    %296 = vector.extract_strided_slice %291 {offsets = [0, 128], sizes = [16, 128], strides = [1, 1]} : vector<16x384xf32> to vector<16x128xf32>
    %297 = vector.extract_strided_slice %291 {offsets = [0, 256], sizes = [16, 128], strides = [1, 1]} : vector<16x384xf32> to vector<16x128xf32>
    %298 = arith.addf %297, %5 : vector<16x128xf32>
    %299 = arith.addf %292, %295 : vector<16x128xf32>
    %300 = arith.negf %299 : vector<16x128xf32>
    %301 = math.exp %300 : vector<16x128xf32>
    %cst_79 = arith.constant 1.000000e+00 : f32
    %302 = vector.broadcast %cst_79 : f32 to vector<16x128xf32>
    %303 = arith.addf %302, %301 : vector<16x128xf32>
    %304 = arith.divf %302, %303 : vector<16x128xf32>
    %305 = arith.addf %293, %296 : vector<16x128xf32>
    %306 = arith.negf %305 : vector<16x128xf32>
    %307 = math.exp %306 : vector<16x128xf32>
    %cst_80 = arith.constant 1.000000e+00 : f32
    %308 = vector.broadcast %cst_80 : f32 to vector<16x128xf32>
    %309 = arith.addf %308, %307 : vector<16x128xf32>
    %310 = arith.divf %308, %309 : vector<16x128xf32>
    %311 = arith.mulf %304, %298 : vector<16x128xf32>
    %312 = arith.addf %294, %311 : vector<16x128xf32>
    %313 = math.tanh %312 : vector<16x128xf32>
    %cst_81 = arith.constant 1.000000e+00 : f32
    %314 = vector.broadcast %cst_81 : f32 to vector<16x128xf32>
    %315 = arith.subf %314, %310 : vector<16x128xf32>
    %316 = arith.mulf %315, %313 : vector<16x128xf32>
    %317 = arith.mulf %310, %279 : vector<16x128xf32>
    %318 = arith.addf %316, %317 : vector<16x128xf32>
    %c16_i32_82 = arith.constant 16 : i32
    %319 = arith.muli %c7_i32, %c16_i32_82 : i32
    %c0_i32_83 = arith.constant 0 : i32
    %320 = arith.addi %c0_i32_83, %319 : i32
    %321 = tpu.assume_multiple %320, 16 : i32
    %322 = arith.truncf %318 : vector<16x128xf32> to vector<16x128xbf16>
    %323 = arith.index_cast %321 : i32 to index
    %c0_84 = arith.constant 0 : index
    %324 = vector.load %arg13[%323, %c0_84] : memref<128x128xbf16, #tpu.memory_space<vmem>>, vector<16x128xbf16>
    tpu.vector_store %arg13[%323, %c0_84], %322 {strides = array<i32>} : memref<128x128xbf16, #tpu.memory_space<vmem>>, vector<16x128xbf16>,
    %c8_i32 = arith.constant 8 : i32
    %c0_85 = arith.constant 0 : index
    %c0_86 = arith.constant 0 : index
    %c0_87 = arith.constant 0 : index
    %325 = vector.load %arg12[%c0_85, %c0_86, %c0_87] : memref<2x16x128xf32, #tpu.memory_space<vmem>>, vector<1x16x128xf32>
    %326 = vector.shape_cast %325 : vector<1x16x128xf32> to vector<16x128xf32>
    %327 = vector.shape_cast %318 : vector<16x128xf32> to vector<1x16x128xf32>
    tpu.vector_store %arg12[%c0_85, %c0_86, %c0_87], %327 {strides = array<i32>} : memref<2x16x128xf32, #tpu.memory_space<vmem>>, vector<1x16x128xf32>,
    %c0_88 = arith.constant 0 : index
    %c0_89 = arith.constant 0 : index
    %328 = vector.load %arg7[%c0_88, %c0_89] : memref<128x384xbf16, #tpu.memory_space<vmem>>, vector<128x384xbf16>
    %c0_90 = arith.constant 0 : index
    %c0_91 = arith.constant 0 : index
    %329 = vector.load %arg8[%c0_90, %c0_91] : memref<128x384xbf16, #tpu.memory_space<vmem>>, vector<128x384xbf16>
    %c0_92 = arith.constant 0 : index
    %c0_93 = arith.constant 0 : index
    %330 = vector.load %arg9[%c0_92, %c0_93] : memref<1x384xf32, #tpu.memory_space<vmem>>, vector<1x384xf32>
    %c0_94 = arith.constant 0 : index
    %c0_95 = arith.constant 0 : index
    %331 = vector.load %arg10[%c0_94, %c0_95] : memref<1x128xf32, #tpu.memory_space<vmem>>, vector<1x128xf32>
    %332 = vector.shape_cast %331 : vector<1x128xf32> to vector<1x128xf32>
    %333 = vector.broadcast %332 : vector<1x128xf32> to vector<16x128xf32>
    %c1 = arith.constant 1 : index
    %c0_96 = arith.constant 0 : index
    %c0_97 = arith.constant 0 : index
    %334 = vector.load %arg2[%c1, %c0_96, %c0_97] : memref<2x16x128xf32, #tpu.memory_space<vmem>>, vector<1x16x128xf32>
    %335 = vector.shape_cast %334 : vector<1x16x128xf32> to vector<16x128xf32>
    %c0_98 = arith.constant 0 : index
    %c0_99 = arith.constant 0 : index
    %336 = vector.load %arg13[%c0_98, %c0_99] : memref<128x128xbf16, #tpu.memory_space<vmem>>, vector<128x128xbf16>
    %cst_100 = arith.constant dense<0.000000e+00> : vector<128x384xf32>
    %337 = tpu.matmul %336, %328, %cst_100 {dimension_numbers = #tpu.dot_dimension_numbers<[1], [0], [0], [1], [0, 0, 1, 1], [], []>} : vector<128x128xbf16>, vector<128x384xbf16>, vector<128x384xf32> -> vector<128x384xf32>
    %338 = vector.broadcast %330 : vector<1x384xf32> to vector<128x384xf32>
    %339 = arith.addf %337, %338 : vector<128x384xf32>
    %c0_101 = arith.constant 0 : index
    %c0_102 = arith.constant 0 : index
    %340 = vector.load %arg14[%c0_101, %c0_102] : memref<128x384xf32, #tpu.memory_space<vmem>>, vector<128x384xf32>
    tpu.vector_store %arg14[%c0_101, %c0_102], %339 {strides = array<i32>} : memref<128x384xf32, #tpu.memory_space<vmem>>, vector<128x384xf32>,
    %c0_i32_103 = arith.constant 0 : i32
    %c16_i32_104 = arith.constant 16 : i32
    %341 = arith.muli %c0_i32_103, %c16_i32_104 : i32
    %342 = tpu.assume_multiple %341, 16 : i32
    %343 = arith.index_cast %342 : i32 to index
    %c0_105 = arith.constant 0 : index
    %344 = vector.load %arg14[%343, %c0_105] : memref<128x384xf32, #tpu.memory_space<vmem>>, vector<16x384xf32>
    %345 = arith.truncf %335 : vector<16x128xf32> to vector<16x128xbf16>
    %cst_106 = arith.constant dense<0.000000e+00> : vector<16x384xf32>
    %346 = tpu.matmul %345, %329, %cst_106 {dimension_numbers = #tpu.dot_dimension_numbers<[1], [0], [0], [1], [0, 0, 1, 1], [], []>} : vector<16x128xbf16>, vector<128x384xbf16>, vector<16x384xf32> -> vector<16x384xf32>
    %347 = vector.extract_strided_slice %344 {offsets = [0, 0], sizes = [16, 128], strides = [1, 1]} : vector<16x384xf32> to vector<16x128xf32>
    %348 = vector.extract_strided_slice %344 {offsets = [0, 128], sizes = [16, 128], strides = [1, 1]} : vector<16x384xf32> to vector<16x128xf32>
    %349 = vector.extract_strided_slice %344 {offsets = [0, 256], sizes = [16, 128], strides = [1, 1]} : vector<16x384xf32> to vector<16x128xf32>
    %350 = vector.extract_strided_slice %346 {offsets = [0, 0], sizes = [16, 128], strides = [1, 1]} : vector<16x384xf32> to vector<16x128xf32>
    %351 = vector.extract_strided_slice %346 {offsets = [0, 128], sizes = [16, 128], strides = [1, 1]} : vector<16x384xf32> to vector<16x128xf32>
    %352 = vector.extract_strided_slice %346 {offsets = [0, 256], sizes = [16, 128], strides = [1, 1]} : vector<16x384xf32> to vector<16x128xf32>
    %353 = arith.addf %352, %333 : vector<16x128xf32>
    %354 = arith.addf %347, %350 : vector<16x128xf32>
    %355 = arith.negf %354 : vector<16x128xf32>
    %356 = math.exp %355 : vector<16x128xf32>
    %cst_107 = arith.constant 1.000000e+00 : f32
    %357 = vector.broadcast %cst_107 : f32 to vector<16x128xf32>
    %358 = arith.addf %357, %356 : vector<16x128xf32>
    %359 = arith.divf %357, %358 : vector<16x128xf32>
    %360 = arith.addf %348, %351 : vector<16x128xf32>
    %361 = arith.negf %360 : vector<16x128xf32>
    %362 = math.exp %361 : vector<16x128xf32>
    %cst_108 = arith.constant 1.000000e+00 : f32
    %363 = vector.broadcast %cst_108 : f32 to vector<16x128xf32>
    %364 = arith.addf %363, %362 : vector<16x128xf32>
    %365 = arith.divf %363, %364 : vector<16x128xf32>
    %366 = arith.mulf %359, %353 : vector<16x128xf32>
    %367 = arith.addf %349, %366 : vector<16x128xf32>
    %368 = math.tanh %367 : vector<16x128xf32>
    %cst_109 = arith.constant 1.000000e+00 : f32
    %369 = vector.broadcast %cst_109 : f32 to vector<16x128xf32>
    %370 = arith.subf %369, %365 : vector<16x128xf32>
    %371 = arith.mulf %370, %368 : vector<16x128xf32>
    %372 = arith.mulf %365, %335 : vector<16x128xf32>
    %373 = arith.addf %371, %372 : vector<16x128xf32>
    %c16_i32_110 = arith.constant 16 : i32
    %374 = arith.muli %c0_i32_103, %c16_i32_110 : i32
    %c0_i32_111 = arith.constant 0 : i32
    %375 = arith.addi %c0_i32_111, %374 : i32
    %376 = tpu.assume_multiple %375, 16 : i32
    %377 = arith.truncf %373 : vector<16x128xf32> to vector<16x128xbf16>
    %378 = arith.index_cast %376 : i32 to index
    %c0_112 = arith.constant 0 : index
    %379 = vector.load %arg11[%378, %c0_112] : memref<128x128xbf16, #tpu.memory_space<vmem>>, vector<16x128xbf16>
    tpu.vector_store %arg11[%378, %c0_112], %377 {strides = array<i32>} : memref<128x128xbf16, #tpu.memory_space<vmem>>, vector<16x128xbf16>,
    %c1_i32_113 = arith.constant 1 : i32
    %c16_i32_114 = arith.constant 16 : i32
    %380 = arith.muli %c1_i32_113, %c16_i32_114 : i32
    %381 = tpu.assume_multiple %380, 16 : i32
    %382 = arith.index_cast %381 : i32 to index
    %c0_115 = arith.constant 0 : index
    %383 = vector.load %arg14[%382, %c0_115] : memref<128x384xf32, #tpu.memory_space<vmem>>, vector<16x384xf32>
    %384 = arith.truncf %373 : vector<16x128xf32> to vector<16x128xbf16>
    %cst_116 = arith.constant dense<0.000000e+00> : vector<16x384xf32>
    %385 = tpu.matmul %384, %329, %cst_116 {dimension_numbers = #tpu.dot_dimension_numbers<[1], [0], [0], [1], [0, 0, 1, 1], [], []>} : vector<16x128xbf16>, vector<128x384xbf16>, vector<16x384xf32> -> vector<16x384xf32>
    %386 = vector.extract_strided_slice %383 {offsets = [0, 0], sizes = [16, 128], strides = [1, 1]} : vector<16x384xf32> to vector<16x128xf32>
    %387 = vector.extract_strided_slice %383 {offsets = [0, 128], sizes = [16, 128], strides = [1, 1]} : vector<16x384xf32> to vector<16x128xf32>
    %388 = vector.extract_strided_slice %383 {offsets = [0, 256], sizes = [16, 128], strides = [1, 1]} : vector<16x384xf32> to vector<16x128xf32>
    %389 = vector.extract_strided_slice %385 {offsets = [0, 0], sizes = [16, 128], strides = [1, 1]} : vector<16x384xf32> to vector<16x128xf32>
    %390 = vector.extract_strided_slice %385 {offsets = [0, 128], sizes = [16, 128], strides = [1, 1]} : vector<16x384xf32> to vector<16x128xf32>
    %391 = vector.extract_strided_slice %385 {offsets = [0, 256], sizes = [16, 128], strides = [1, 1]} : vector<16x384xf32> to vector<16x128xf32>
    %392 = arith.addf %391, %333 : vector<16x128xf32>
    %393 = arith.addf %386, %389 : vector<16x128xf32>
    %394 = arith.negf %393 : vector<16x128xf32>
    %395 = math.exp %394 : vector<16x128xf32>
    %cst_117 = arith.constant 1.000000e+00 : f32
    %396 = vector.broadcast %cst_117 : f32 to vector<16x128xf32>
    %397 = arith.addf %396, %395 : vector<16x128xf32>
    %398 = arith.divf %396, %397 : vector<16x128xf32>
    %399 = arith.addf %387, %390 : vector<16x128xf32>
    %400 = arith.negf %399 : vector<16x128xf32>
    %401 = math.exp %400 : vector<16x128xf32>
    %cst_118 = arith.constant 1.000000e+00 : f32
    %402 = vector.broadcast %cst_118 : f32 to vector<16x128xf32>
    %403 = arith.addf %402, %401 : vector<16x128xf32>
    %404 = arith.divf %402, %403 : vector<16x128xf32>
    %405 = arith.mulf %398, %392 : vector<16x128xf32>
    %406 = arith.addf %388, %405 : vector<16x128xf32>
    %407 = math.tanh %406 : vector<16x128xf32>
    %cst_119 = arith.constant 1.000000e+00 : f32
    %408 = vector.broadcast %cst_119 : f32 to vector<16x128xf32>
    %409 = arith.subf %408, %404 : vector<16x128xf32>
    %410 = arith.mulf %409, %407 : vector<16x128xf32>
    %411 = arith.mulf %404, %373 : vector<16x128xf32>
    %412 = arith.addf %410, %411 : vector<16x128xf32>
    %c16_i32_120 = arith.constant 16 : i32
    %413 = arith.muli %c1_i32_113, %c16_i32_120 : i32
    %c0_i32_121 = arith.constant 0 : i32
    %414 = arith.addi %c0_i32_121, %413 : i32
    %415 = tpu.assume_multiple %414, 16 : i32
    %416 = arith.truncf %412 : vector<16x128xf32> to vector<16x128xbf16>
    %417 = arith.index_cast %415 : i32 to index
    %c0_122 = arith.constant 0 : index
    %418 = vector.load %arg11[%417, %c0_122] : memref<128x128xbf16, #tpu.memory_space<vmem>>, vector<16x128xbf16>
    tpu.vector_store %arg11[%417, %c0_122], %416 {strides = array<i32>} : memref<128x128xbf16, #tpu.memory_space<vmem>>, vector<16x128xbf16>,
    %c2_i32_123 = arith.constant 2 : i32
    %c16_i32_124 = arith.constant 16 : i32
    %419 = arith.muli %c2_i32_123, %c16_i32_124 : i32
    %420 = tpu.assume_multiple %419, 16 : i32
    %421 = arith.index_cast %420 : i32 to index
    %c0_125 = arith.constant 0 : index
    %422 = vector.load %arg14[%421, %c0_125] : memref<128x384xf32, #tpu.memory_space<vmem>>, vector<16x384xf32>
    %423 = arith.truncf %412 : vector<16x128xf32> to vector<16x128xbf16>
    %cst_126 = arith.constant dense<0.000000e+00> : vector<16x384xf32>
    %424 = tpu.matmul %423, %329, %cst_126 {dimension_numbers = #tpu.dot_dimension_numbers<[1], [0], [0], [1], [0, 0, 1, 1], [], []>} : vector<16x128xbf16>, vector<128x384xbf16>, vector<16x384xf32> -> vector<16x384xf32>
    %425 = vector.extract_strided_slice %422 {offsets = [0, 0], sizes = [16, 128], strides = [1, 1]} : vector<16x384xf32> to vector<16x128xf32>
    %426 = vector.extract_strided_slice %422 {offsets = [0, 128], sizes = [16, 128], strides = [1, 1]} : vector<16x384xf32> to vector<16x128xf32>
    %427 = vector.extract_strided_slice %422 {offsets = [0, 256], sizes = [16, 128], strides = [1, 1]} : vector<16x384xf32> to vector<16x128xf32>
    %428 = vector.extract_strided_slice %424 {offsets = [0, 0], sizes = [16, 128], strides = [1, 1]} : vector<16x384xf32> to vector<16x128xf32>
    %429 = vector.extract_strided_slice %424 {offsets = [0, 128], sizes = [16, 128], strides = [1, 1]} : vector<16x384xf32> to vector<16x128xf32>
    %430 = vector.extract_strided_slice %424 {offsets = [0, 256], sizes = [16, 128], strides = [1, 1]} : vector<16x384xf32> to vector<16x128xf32>
    %431 = arith.addf %430, %333 : vector<16x128xf32>
    %432 = arith.addf %425, %428 : vector<16x128xf32>
    %433 = arith.negf %432 : vector<16x128xf32>
    %434 = math.exp %433 : vector<16x128xf32>
    %cst_127 = arith.constant 1.000000e+00 : f32
    %435 = vector.broadcast %cst_127 : f32 to vector<16x128xf32>
    %436 = arith.addf %435, %434 : vector<16x128xf32>
    %437 = arith.divf %435, %436 : vector<16x128xf32>
    %438 = arith.addf %426, %429 : vector<16x128xf32>
    %439 = arith.negf %438 : vector<16x128xf32>
    %440 = math.exp %439 : vector<16x128xf32>
    %cst_128 = arith.constant 1.000000e+00 : f32
    %441 = vector.broadcast %cst_128 : f32 to vector<16x128xf32>
    %442 = arith.addf %441, %440 : vector<16x128xf32>
    %443 = arith.divf %441, %442 : vector<16x128xf32>
    %444 = arith.mulf %437, %431 : vector<16x128xf32>
    %445 = arith.addf %427, %444 : vector<16x128xf32>
    %446 = math.tanh %445 : vector<16x128xf32>
    %cst_129 = arith.constant 1.000000e+00 : f32
    %447 = vector.broadcast %cst_129 : f32 to vector<16x128xf32>
    %448 = arith.subf %447, %443 : vector<16x128xf32>
    %449 = arith.mulf %448, %446 : vector<16x128xf32>
    %450 = arith.mulf %443, %412 : vector<16x128xf32>
    %451 = arith.addf %449, %450 : vector<16x128xf32>
    %c16_i32_130 = arith.constant 16 : i32
    %452 = arith.muli %c2_i32_123, %c16_i32_130 : i32
    %c0_i32_131 = arith.constant 0 : i32
    %453 = arith.addi %c0_i32_131, %452 : i32
    %454 = tpu.assume_multiple %453, 16 : i32
    %455 = arith.truncf %451 : vector<16x128xf32> to vector<16x128xbf16>
    %456 = arith.index_cast %454 : i32 to index
    %c0_132 = arith.constant 0 : index
    %457 = vector.load %arg11[%456, %c0_132] : memref<128x128xbf16, #tpu.memory_space<vmem>>, vector<16x128xbf16>
    tpu.vector_store %arg11[%456, %c0_132], %455 {strides = array<i32>} : memref<128x128xbf16, #tpu.memory_space<vmem>>, vector<16x128xbf16>,
    %c3_i32_133 = arith.constant 3 : i32
    %c16_i32_134 = arith.constant 16 : i32
    %458 = arith.muli %c3_i32_133, %c16_i32_134 : i32
    %459 = tpu.assume_multiple %458, 16 : i32
    %460 = arith.index_cast %459 : i32 to index
    %c0_135 = arith.constant 0 : index
    %461 = vector.load %arg14[%460, %c0_135] : memref<128x384xf32, #tpu.memory_space<vmem>>, vector<16x384xf32>
    %462 = arith.truncf %451 : vector<16x128xf32> to vector<16x128xbf16>
    %cst_136 = arith.constant dense<0.000000e+00> : vector<16x384xf32>
    %463 = tpu.matmul %462, %329, %cst_136 {dimension_numbers = #tpu.dot_dimension_numbers<[1], [0], [0], [1], [0, 0, 1, 1], [], []>} : vector<16x128xbf16>, vector<128x384xbf16>, vector<16x384xf32> -> vector<16x384xf32>
    %464 = vector.extract_strided_slice %461 {offsets = [0, 0], sizes = [16, 128], strides = [1, 1]} : vector<16x384xf32> to vector<16x128xf32>
    %465 = vector.extract_strided_slice %461 {offsets = [0, 128], sizes = [16, 128], strides = [1, 1]} : vector<16x384xf32> to vector<16x128xf32>
    %466 = vector.extract_strided_slice %461 {offsets = [0, 256], sizes = [16, 128], strides = [1, 1]} : vector<16x384xf32> to vector<16x128xf32>
    %467 = vector.extract_strided_slice %463 {offsets = [0, 0], sizes = [16, 128], strides = [1, 1]} : vector<16x384xf32> to vector<16x128xf32>
    %468 = vector.extract_strided_slice %463 {offsets = [0, 128], sizes = [16, 128], strides = [1, 1]} : vector<16x384xf32> to vector<16x128xf32>
    %469 = vector.extract_strided_slice %463 {offsets = [0, 256], sizes = [16, 128], strides = [1, 1]} : vector<16x384xf32> to vector<16x128xf32>
    %470 = arith.addf %469, %333 : vector<16x128xf32>
    %471 = arith.addf %464, %467 : vector<16x128xf32>
    %472 = arith.negf %471 : vector<16x128xf32>
    %473 = math.exp %472 : vector<16x128xf32>
    %cst_137 = arith.constant 1.000000e+00 : f32
    %474 = vector.broadcast %cst_137 : f32 to vector<16x128xf32>
    %475 = arith.addf %474, %473 : vector<16x128xf32>
    %476 = arith.divf %474, %475 : vector<16x128xf32>
    %477 = arith.addf %465, %468 : vector<16x128xf32>
    %478 = arith.negf %477 : vector<16x128xf32>
    %479 = math.exp %478 : vector<16x128xf32>
    %cst_138 = arith.constant 1.000000e+00 : f32
    %480 = vector.broadcast %cst_138 : f32 to vector<16x128xf32>
    %481 = arith.addf %480, %479 : vector<16x128xf32>
    %482 = arith.divf %480, %481 : vector<16x128xf32>
    %483 = arith.mulf %476, %470 : vector<16x128xf32>
    %484 = arith.addf %466, %483 : vector<16x128xf32>
    %485 = math.tanh %484 : vector<16x128xf32>
    %cst_139 = arith.constant 1.000000e+00 : f32
    %486 = vector.broadcast %cst_139 : f32 to vector<16x128xf32>
    %487 = arith.subf %486, %482 : vector<16x128xf32>
    %488 = arith.mulf %487, %485 : vector<16x128xf32>
    %489 = arith.mulf %482, %451 : vector<16x128xf32>
    %490 = arith.addf %488, %489 : vector<16x128xf32>
    %c16_i32_140 = arith.constant 16 : i32
    %491 = arith.muli %c3_i32_133, %c16_i32_140 : i32
    %c0_i32_141 = arith.constant 0 : i32
    %492 = arith.addi %c0_i32_141, %491 : i32
    %493 = tpu.assume_multiple %492, 16 : i32
    %494 = arith.truncf %490 : vector<16x128xf32> to vector<16x128xbf16>
    %495 = arith.index_cast %493 : i32 to index
    %c0_142 = arith.constant 0 : index
    %496 = vector.load %arg11[%495, %c0_142] : memref<128x128xbf16, #tpu.memory_space<vmem>>, vector<16x128xbf16>
    tpu.vector_store %arg11[%495, %c0_142], %494 {strides = array<i32>} : memref<128x128xbf16, #tpu.memory_space<vmem>>, vector<16x128xbf16>,
    %c4_i32_143 = arith.constant 4 : i32
    %c16_i32_144 = arith.constant 16 : i32
    %497 = arith.muli %c4_i32_143, %c16_i32_144 : i32
    %498 = tpu.assume_multiple %497, 16 : i32
    %499 = arith.index_cast %498 : i32 to index
    %c0_145 = arith.constant 0 : index
    %500 = vector.load %arg14[%499, %c0_145] : memref<128x384xf32, #tpu.memory_space<vmem>>, vector<16x384xf32>
    %501 = arith.truncf %490 : vector<16x128xf32> to vector<16x128xbf16>
    %cst_146 = arith.constant dense<0.000000e+00> : vector<16x384xf32>
    %502 = tpu.matmul %501, %329, %cst_146 {dimension_numbers = #tpu.dot_dimension_numbers<[1], [0], [0], [1], [0, 0, 1, 1], [], []>} : vector<16x128xbf16>, vector<128x384xbf16>, vector<16x384xf32> -> vector<16x384xf32>
    %503 = vector.extract_strided_slice %500 {offsets = [0, 0], sizes = [16, 128], strides = [1, 1]} : vector<16x384xf32> to vector<16x128xf32>
    %504 = vector.extract_strided_slice %500 {offsets = [0, 128], sizes = [16, 128], strides = [1, 1]} : vector<16x384xf32> to vector<16x128xf32>
    %505 = vector.extract_strided_slice %500 {offsets = [0, 256], sizes = [16, 128], strides = [1, 1]} : vector<16x384xf32> to vector<16x128xf32>
    %506 = vector.extract_strided_slice %502 {offsets = [0, 0], sizes = [16, 128], strides = [1, 1]} : vector<16x384xf32> to vector<16x128xf32>
    %507 = vector.extract_strided_slice %502 {offsets = [0, 128], sizes = [16, 128], strides = [1, 1]} : vector<16x384xf32> to vector<16x128xf32>
    %508 = vector.extract_strided_slice %502 {offsets = [0, 256], sizes = [16, 128], strides = [1, 1]} : vector<16x384xf32> to vector<16x128xf32>
    %509 = arith.addf %508, %333 : vector<16x128xf32>
    %510 = arith.addf %503, %506 : vector<16x128xf32>
    %511 = arith.negf %510 : vector<16x128xf32>
    %512 = math.exp %511 : vector<16x128xf32>
    %cst_147 = arith.constant 1.000000e+00 : f32
    %513 = vector.broadcast %cst_147 : f32 to vector<16x128xf32>
    %514 = arith.addf %513, %512 : vector<16x128xf32>
    %515 = arith.divf %513, %514 : vector<16x128xf32>
    %516 = arith.addf %504, %507 : vector<16x128xf32>
    %517 = arith.negf %516 : vector<16x128xf32>
    %518 = math.exp %517 : vector<16x128xf32>
    %cst_148 = arith.constant 1.000000e+00 : f32
    %519 = vector.broadcast %cst_148 : f32 to vector<16x128xf32>
    %520 = arith.addf %519, %518 : vector<16x128xf32>
    %521 = arith.divf %519, %520 : vector<16x128xf32>
    %522 = arith.mulf %515, %509 : vector<16x128xf32>
    %523 = arith.addf %505, %522 : vector<16x128xf32>
    %524 = math.tanh %523 : vector<16x128xf32>
    %cst_149 = arith.constant 1.000000e+00 : f32
    %525 = vector.broadcast %cst_149 : f32 to vector<16x128xf32>
    %526 = arith.subf %525, %521 : vector<16x128xf32>
    %527 = arith.mulf %526, %524 : vector<16x128xf32>
    %528 = arith.mulf %521, %490 : vector<16x128xf32>
    %529 = arith.addf %527, %528 : vector<16x128xf32>
    %c16_i32_150 = arith.constant 16 : i32
    %530 = arith.muli %c4_i32_143, %c16_i32_150 : i32
    %c0_i32_151 = arith.constant 0 : i32
    %531 = arith.addi %c0_i32_151, %530 : i32
    %532 = tpu.assume_multiple %531, 16 : i32
    %533 = arith.truncf %529 : vector<16x128xf32> to vector<16x128xbf16>
    %534 = arith.index_cast %532 : i32 to index
    %c0_152 = arith.constant 0 : index
    %535 = vector.load %arg11[%534, %c0_152] : memref<128x128xbf16, #tpu.memory_space<vmem>>, vector<16x128xbf16>
    tpu.vector_store %arg11[%534, %c0_152], %533 {strides = array<i32>} : memref<128x128xbf16, #tpu.memory_space<vmem>>, vector<16x128xbf16>,
    %c5_i32_153 = arith.constant 5 : i32
    %c16_i32_154 = arith.constant 16 : i32
    %536 = arith.muli %c5_i32_153, %c16_i32_154 : i32
    %537 = tpu.assume_multiple %536, 16 : i32
    %538 = arith.index_cast %537 : i32 to index
    %c0_155 = arith.constant 0 : index
    %539 = vector.load %arg14[%538, %c0_155] : memref<128x384xf32, #tpu.memory_space<vmem>>, vector<16x384xf32>
    %540 = arith.truncf %529 : vector<16x128xf32> to vector<16x128xbf16>
    %cst_156 = arith.constant dense<0.000000e+00> : vector<16x384xf32>
    %541 = tpu.matmul %540, %329, %cst_156 {dimension_numbers = #tpu.dot_dimension_numbers<[1], [0], [0], [1], [0, 0, 1, 1], [], []>} : vector<16x128xbf16>, vector<128x384xbf16>, vector<16x384xf32> -> vector<16x384xf32>
    %542 = vector.extract_strided_slice %539 {offsets = [0, 0], sizes = [16, 128], strides = [1, 1]} : vector<16x384xf32> to vector<16x128xf32>
    %543 = vector.extract_strided_slice %539 {offsets = [0, 128], sizes = [16, 128], strides = [1, 1]} : vector<16x384xf32> to vector<16x128xf32>
    %544 = vector.extract_strided_slice %539 {offsets = [0, 256], sizes = [16, 128], strides = [1, 1]} : vector<16x384xf32> to vector<16x128xf32>
    %545 = vector.extract_strided_slice %541 {offsets = [0, 0], sizes = [16, 128], strides = [1, 1]} : vector<16x384xf32> to vector<16x128xf32>
    %546 = vector.extract_strided_slice %541 {offsets = [0, 128], sizes = [16, 128], strides = [1, 1]} : vector<16x384xf32> to vector<16x128xf32>
    %547 = vector.extract_strided_slice %541 {offsets = [0, 256], sizes = [16, 128], strides = [1, 1]} : vector<16x384xf32> to vector<16x128xf32>
    %548 = arith.addf %547, %333 : vector<16x128xf32>
    %549 = arith.addf %542, %545 : vector<16x128xf32>
    %550 = arith.negf %549 : vector<16x128xf32>
    %551 = math.exp %550 : vector<16x128xf32>
    %cst_157 = arith.constant 1.000000e+00 : f32
    %552 = vector.broadcast %cst_157 : f32 to vector<16x128xf32>
    %553 = arith.addf %552, %551 : vector<16x128xf32>
    %554 = arith.divf %552, %553 : vector<16x128xf32>
    %555 = arith.addf %543, %546 : vector<16x128xf32>
    %556 = arith.negf %555 : vector<16x128xf32>
    %557 = math.exp %556 : vector<16x128xf32>
    %cst_158 = arith.constant 1.000000e+00 : f32
    %558 = vector.broadcast %cst_158 : f32 to vector<16x128xf32>
    %559 = arith.addf %558, %557 : vector<16x128xf32>
    %560 = arith.divf %558, %559 : vector<16x128xf32>
    %561 = arith.mulf %554, %548 : vector<16x128xf32>
    %562 = arith.addf %544, %561 : vector<16x128xf32>
    %563 = math.tanh %562 : vector<16x128xf32>
    %cst_159 = arith.constant 1.000000e+00 : f32
    %564 = vector.broadcast %cst_159 : f32 to vector<16x128xf32>
    %565 = arith.subf %564, %560 : vector<16x128xf32>
    %566 = arith.mulf %565, %563 : vector<16x128xf32>
    %567 = arith.mulf %560, %529 : vector<16x128xf32>
    %568 = arith.addf %566, %567 : vector<16x128xf32>
    %c16_i32_160 = arith.constant 16 : i32
    %569 = arith.muli %c5_i32_153, %c16_i32_160 : i32
    %c0_i32_161 = arith.constant 0 : i32
    %570 = arith.addi %c0_i32_161, %569 : i32
    %571 = tpu.assume_multiple %570, 16 : i32
    %572 = arith.truncf %568 : vector<16x128xf32> to vector<16x128xbf16>
    %573 = arith.index_cast %571 : i32 to index
    %c0_162 = arith.constant 0 : index
    %574 = vector.load %arg11[%573, %c0_162] : memref<128x128xbf16, #tpu.memory_space<vmem>>, vector<16x128xbf16>
    tpu.vector_store %arg11[%573, %c0_162], %572 {strides = array<i32>} : memref<128x128xbf16, #tpu.memory_space<vmem>>, vector<16x128xbf16>,
    %c6_i32_163 = arith.constant 6 : i32
    %c16_i32_164 = arith.constant 16 : i32
    %575 = arith.muli %c6_i32_163, %c16_i32_164 : i32
    %576 = tpu.assume_multiple %575, 16 : i32
    %577 = arith.index_cast %576 : i32 to index
    %c0_165 = arith.constant 0 : index
    %578 = vector.load %arg14[%577, %c0_165] : memref<128x384xf32, #tpu.memory_space<vmem>>, vector<16x384xf32>
    %579 = arith.truncf %568 : vector<16x128xf32> to vector<16x128xbf16>
    %cst_166 = arith.constant dense<0.000000e+00> : vector<16x384xf32>
    %580 = tpu.matmul %579, %329, %cst_166 {dimension_numbers = #tpu.dot_dimension_numbers<[1], [0], [0], [1], [0, 0, 1, 1], [], []>} : vector<16x128xbf16>, vector<128x384xbf16>, vector<16x384xf32> -> vector<16x384xf32>
    %581 = vector.extract_strided_slice %578 {offsets = [0, 0], sizes = [16, 128], strides = [1, 1]} : vector<16x384xf32> to vector<16x128xf32>
    %582 = vector.extract_strided_slice %578 {offsets = [0, 128], sizes = [16, 128], strides = [1, 1]} : vector<16x384xf32> to vector<16x128xf32>
    %583 = vector.extract_strided_slice %578 {offsets = [0, 256], sizes = [16, 128], strides = [1, 1]} : vector<16x384xf32> to vector<16x128xf32>
    %584 = vector.extract_strided_slice %580 {offsets = [0, 0], sizes = [16, 128], strides = [1, 1]} : vector<16x384xf32> to vector<16x128xf32>
    %585 = vector.extract_strided_slice %580 {offsets = [0, 128], sizes = [16, 128], strides = [1, 1]} : vector<16x384xf32> to vector<16x128xf32>
    %586 = vector.extract_strided_slice %580 {offsets = [0, 256], sizes = [16, 128], strides = [1, 1]} : vector<16x384xf32> to vector<16x128xf32>
    %587 = arith.addf %586, %333 : vector<16x128xf32>
    %588 = arith.addf %581, %584 : vector<16x128xf32>
    %589 = arith.negf %588 : vector<16x128xf32>
    %590 = math.exp %589 : vector<16x128xf32>
    %cst_167 = arith.constant 1.000000e+00 : f32
    %591 = vector.broadcast %cst_167 : f32 to vector<16x128xf32>
    %592 = arith.addf %591, %590 : vector<16x128xf32>
    %593 = arith.divf %591, %592 : vector<16x128xf32>
    %594 = arith.addf %582, %585 : vector<16x128xf32>
    %595 = arith.negf %594 : vector<16x128xf32>
    %596 = math.exp %595 : vector<16x128xf32>
    %cst_168 = arith.constant 1.000000e+00 : f32
    %597 = vector.broadcast %cst_168 : f32 to vector<16x128xf32>
    %598 = arith.addf %597, %596 : vector<16x128xf32>
    %599 = arith.divf %597, %598 : vector<16x128xf32>
    %600 = arith.mulf %593, %587 : vector<16x128xf32>
    %601 = arith.addf %583, %600 : vector<16x128xf32>
    %602 = math.tanh %601 : vector<16x128xf32>
    %cst_169 = arith.constant 1.000000e+00 : f32
    %603 = vector.broadcast %cst_169 : f32 to vector<16x128xf32>
    %604 = arith.subf %603, %599 : vector<16x128xf32>
    %605 = arith.mulf %604, %602 : vector<16x128xf32>
    %606 = arith.mulf %599, %568 : vector<16x128xf32>
    %607 = arith.addf %605, %606 : vector<16x128xf32>
    %c16_i32_170 = arith.constant 16 : i32
    %608 = arith.muli %c6_i32_163, %c16_i32_170 : i32
    %c0_i32_171 = arith.constant 0 : i32
    %609 = arith.addi %c0_i32_171, %608 : i32
    %610 = tpu.assume_multiple %609, 16 : i32
    %611 = arith.truncf %607 : vector<16x128xf32> to vector<16x128xbf16>
    %612 = arith.index_cast %610 : i32 to index
    %c0_172 = arith.constant 0 : index
    %613 = vector.load %arg11[%612, %c0_172] : memref<128x128xbf16, #tpu.memory_space<vmem>>, vector<16x128xbf16>
    tpu.vector_store %arg11[%612, %c0_172], %611 {strides = array<i32>} : memref<128x128xbf16, #tpu.memory_space<vmem>>, vector<16x128xbf16>,
    %c7_i32_173 = arith.constant 7 : i32
    %c16_i32_174 = arith.constant 16 : i32
    %614 = arith.muli %c7_i32_173, %c16_i32_174 : i32
    %615 = tpu.assume_multiple %614, 16 : i32
    %616 = arith.index_cast %615 : i32 to index
    %c0_175 = arith.constant 0 : index
    %617 = vector.load %arg14[%616, %c0_175] : memref<128x384xf32, #tpu.memory_space<vmem>>, vector<16x384xf32>
    %618 = arith.truncf %607 : vector<16x128xf32> to vector<16x128xbf16>
    %cst_176 = arith.constant dense<0.000000e+00> : vector<16x384xf32>
    %619 = tpu.matmul %618, %329, %cst_176 {dimension_numbers = #tpu.dot_dimension_numbers<[1], [0], [0], [1], [0, 0, 1, 1], [], []>} : vector<16x128xbf16>, vector<128x384xbf16>, vector<16x384xf32> -> vector<16x384xf32>
    %620 = vector.extract_strided_slice %617 {offsets = [0, 0], sizes = [16, 128], strides = [1, 1]} : vector<16x384xf32> to vector<16x128xf32>
    %621 = vector.extract_strided_slice %617 {offsets = [0, 128], sizes = [16, 128], strides = [1, 1]} : vector<16x384xf32> to vector<16x128xf32>
    %622 = vector.extract_strided_slice %617 {offsets = [0, 256], sizes = [16, 128], strides = [1, 1]} : vector<16x384xf32> to vector<16x128xf32>
    %623 = vector.extract_strided_slice %619 {offsets = [0, 0], sizes = [16, 128], strides = [1, 1]} : vector<16x384xf32> to vector<16x128xf32>
    %624 = vector.extract_strided_slice %619 {offsets = [0, 128], sizes = [16, 128], strides = [1, 1]} : vector<16x384xf32> to vector<16x128xf32>
    %625 = vector.extract_strided_slice %619 {offsets = [0, 256], sizes = [16, 128], strides = [1, 1]} : vector<16x384xf32> to vector<16x128xf32>
    %626 = arith.addf %625, %333 : vector<16x128xf32>
    %627 = arith.addf %620, %623 : vector<16x128xf32>
    %628 = arith.negf %627 : vector<16x128xf32>
    %629 = math.exp %628 : vector<16x128xf32>
    %cst_177 = arith.constant 1.000000e+00 : f32
    %630 = vector.broadcast %cst_177 : f32 to vector<16x128xf32>
    %631 = arith.addf %630, %629 : vector<16x128xf32>
    %632 = arith.divf %630, %631 : vector<16x128xf32>
    %633 = arith.addf %621, %624 : vector<16x128xf32>
    %634 = arith.negf %633 : vector<16x128xf32>
    %635 = math.exp %634 : vector<16x128xf32>
    %cst_178 = arith.constant 1.000000e+00 : f32
    %636 = vector.broadcast %cst_178 : f32 to vector<16x128xf32>
    %637 = arith.addf %636, %635 : vector<16x128xf32>
    %638 = arith.divf %636, %637 : vector<16x128xf32>
    %639 = arith.mulf %632, %626 : vector<16x128xf32>
    %640 = arith.addf %622, %639 : vector<16x128xf32>
    %641 = math.tanh %640 : vector<16x128xf32>
    %cst_179 = arith.constant 1.000000e+00 : f32
    %642 = vector.broadcast %cst_179 : f32 to vector<16x128xf32>
    %643 = arith.subf %642, %638 : vector<16x128xf32>
    %644 = arith.mulf %643, %641 : vector<16x128xf32>
    %645 = arith.mulf %638, %607 : vector<16x128xf32>
    %646 = arith.addf %644, %645 : vector<16x128xf32>
    %c16_i32_180 = arith.constant 16 : i32
    %647 = arith.muli %c7_i32_173, %c16_i32_180 : i32
    %c0_i32_181 = arith.constant 0 : i32
    %648 = arith.addi %c0_i32_181, %647 : i32
    %649 = tpu.assume_multiple %648, 16 : i32
    %650 = arith.truncf %646 : vector<16x128xf32> to vector<16x128xbf16>
    %651 = arith.index_cast %649 : i32 to index
    %c0_182 = arith.constant 0 : index
    %652 = vector.load %arg11[%651, %c0_182] : memref<128x128xbf16, #tpu.memory_space<vmem>>, vector<16x128xbf16>
    tpu.vector_store %arg11[%651, %c0_182], %650 {strides = array<i32>} : memref<128x128xbf16, #tpu.memory_space<vmem>>, vector<16x128xbf16>,
    %c8_i32_183 = arith.constant 8 : i32
    %c1_184 = arith.constant 1 : index
    %c0_185 = arith.constant 0 : index
    %c0_186 = arith.constant 0 : index
    %653 = vector.load %arg12[%c1_184, %c0_185, %c0_186] : memref<2x16x128xf32, #tpu.memory_space<vmem>>, vector<1x16x128xf32>
    %654 = vector.shape_cast %653 : vector<1x16x128xf32> to vector<16x128xf32>
    %655 = vector.shape_cast %646 : vector<16x128xf32> to vector<1x16x128xf32>
    tpu.vector_store %arg12[%c1_184, %c0_185, %c0_186], %655 {strides = array<i32>} : memref<2x16x128xf32, #tpu.memory_space<vmem>>, vector<1x16x128xf32>,
    return
  }
  func.func @transform_0(%arg0: i32) -> (i32, i32) {
    %c0_i32 = arith.constant 0 : i32
    %c0_i32_0 = arith.constant 0 : i32
    %c0_i32_1 = arith.constant 0 : i32
    return %c0_i32, %c0_i32_0 : i32, i32
  }
  func.func @transform_1(%arg0: i32) -> (i32, i32, i32) {
    %c0_i32 = arith.constant 0 : i32
    %c0_i32_0 = arith.constant 0 : i32
    %c0_i32_1 = arith.constant 0 : i32
    %c0_i32_2 = arith.constant 0 : i32
    return %c0_i32, %c0_i32_0, %c0_i32_1 : i32, i32, i32
  }
  func.func @transform_2(%arg0: i32) -> (i32, i32) {
    %c0_i32 = arith.constant 0 : i32
    %c0_i32_0 = arith.constant 0 : i32
    %c0_i32_1 = arith.constant 0 : i32
    return %c0_i32, %c0_i32_0 : i32, i32
  }
  func.func @transform_3(%arg0: i32) -> (i32, i32) {
    %c0_i32 = arith.constant 0 : i32
    %c0_i32_0 = arith.constant 0 : i32
    %c0_i32_1 = arith.constant 0 : i32
    return %c0_i32, %c0_i32_0 : i32, i32
  }
  func.func @transform_4(%arg0: i32) -> (i32, i32) {
    %c0_i32 = arith.constant 0 : i32
    %c0_i32_0 = arith.constant 0 : i32
    %c0_i32_1 = arith.constant 0 : i32
    return %c0_i32, %c0_i32_0 : i32, i32
  }
  func.func @transform_5(%arg0: i32) -> (i32, i32) {
    %c0_i32 = arith.constant 0 : i32
    %c0_i32_0 = arith.constant 0 : i32
    %c0_i32_1 = arith.constant 0 : i32
    return %c0_i32, %c0_i32_0 : i32, i32
  }
  func.func @transform_6(%arg0: i32) -> (i32, i32) {
    %c0_i32 = arith.constant 0 : i32
    %c0_i32_0 = arith.constant 0 : i32
    %c0_i32_1 = arith.constant 0 : i32
    return %c0_i32, %c0_i32_0 : i32, i32
  }
  func.func @transform_7(%arg0: i32) -> (i32, i32) {
    %c0_i32 = arith.constant 0 : i32
    %c0_i32_0 = arith.constant 0 : i32
    %c0_i32_1 = arith.constant 0 : i32
    return %c0_i32, %c0_i32_0 : i32, i32
  }
  func.func @transform_8(%arg0: i32) -> (i32, i32) {
    %c0_i32 = arith.constant 0 : i32
    %c0_i32_0 = arith.constant 0 : i32
    %c0_i32_1 = arith.constant 0 : i32
    return %c0_i32, %c0_i32_0 : i32, i32
  }
  func.func @transform_9(%arg0: i32) -> (i32, i32) {
    %c0_i32 = arith.constant 0 : i32
    %c0_i32_0 = arith.constant 0 : i32
    %c0_i32_1 = arith.constant 0 : i32
    return %c0_i32, %c0_i32_0 : i32, i32
  }
  func.func @transform_10(%arg0: i32) -> (i32, i32) {
    %c0_i32 = arith.constant 0 : i32
    %c0_i32_0 = arith.constant 0 : i32
    %c0_i32_1 = arith.constant 0 : i32
    return %c0_i32, %c0_i32_0 : i32, i32
  }
  func.func @transform_11(%arg0: i32) -> (i32, i32, i32) {
    %c0_i32 = arith.constant 0 : i32
    %c0_i32_0 = arith.constant 0 : i32
    %c0_i32_1 = arith.constant 0 : i32
    %c0_i32_2 = arith.constant 0 : i32
    return %c0_i32, %c0_i32_0, %c0_i32_1 : i32, i32, i32
  }
}

</mosaic_0001>

<llo_original>
// kernel: naive_decoder_forward.3
$region0: #{naive_decoder_forward.3}
  #allocation0 [shape = 'u32[]', space=smem, size = 0x4, offset = 0x4, fixed_abs, tag = 'smem constant byte address 0x4 - core index']
  #allocation1 [shape = 'u32[144,128]{1,0:T(1,128)}', space=vmem, size = 0x12000, scoped, tag = 'internal scratch']
  %s0 = inlined_call_operand.vmem [shape: bf16[128,128], index: 0, kind: input, shape index: {}]
  %s1 = inlined_call_operand.vmem [shape: bf16[128,128], index: 1, kind: input, shape index: {}]
  %s2 = inlined_call_operand.vmem [shape: f32[1,128], index: 2, kind: input, shape index: {}]
  %s3 = inlined_call_operand.vmem [shape: f32[128,128], index: 3, kind: output, shape index: {}]
  %s4 = sld [smem:[#allocation0]]
  $region22: #{naive_decoder_forward.3} parent=0
    _
  %s6 = ssub.s32 1, %s4
  %s7 = scalar_select 0, %s6, %s4
  // Predicated region
  $region2: #{naive_decoder_forward.3} parent=0 // pred_check
    _
  $region3: #{naive_decoder_forward.3} parent=0 // pred_check_branch
    %9 = sbr.rel (0) target = $region5
  $region4: #{naive_decoder_forward.3} parent=0 // pred_region
    _
  $region5: #{naive_decoder_forward.3} parent=0 // pred_fallthru
    _
  // Predicated region
  $region6: #{naive_decoder_forward.3} parent=0 // pred_check
    _
  $region7: #{naive_decoder_forward.3} parent=0 // pred_check_branch
    %11 = sbr.rel (0) target = $region9
  $region8: #{naive_decoder_forward.3} parent=0 // pred_region
    _
  $region9: #{naive_decoder_forward.3} parent=0 // pred_fallthru
    _
  // Predicated region
  $region10: #{naive_decoder_forward.3} parent=0 // pred_check
    _
  $region11: #{naive_decoder_forward.3} parent=0 // pred_check_branch
    %13 = sbr.rel (0) target = $region13
  $region12: #{naive_decoder_forward.3} parent=0 // pred_region
    _
  $region13: #{naive_decoder_forward.3} parent=0 // pred_fallthru
    _
  %v15 = vld [vmem:[%s0] sm:$0xf]
  %v16 = vld [vmem:[%s0 + $0x4] sm:$0xf]
  %v17 = vld [vmem:[%s0 + $0x8] sm:$0xf]
  %v18 = vld [vmem:[%s0 + $0xc] sm:$0xf]
  %v19 = vld [vmem:[%s0 + $0x10] sm:$0xf]
  %v20 = vld [vmem:[%s0 + $0x14] sm:$0xf]
  %v21 = vld [vmem:[%s0 + $0x18] sm:$0xf]
  %v22 = vld [vmem:[%s0 + $0x1c] sm:$0xf]
  %v23 = vld [vmem:[%s0 + $0x20] sm:$0xf]
  %v24 = vld [vmem:[%s0 + $0x24] sm:$0xf]
  %v25 = vld [vmem:[%s0 + $0x28] sm:$0xf]
  %v26 = vld [vmem:[%s0 + $0x2c] sm:$0xf]
  %v27 = vld [vmem:[%s0 + $0x30] sm:$0xf]
  %v28 = vld [vmem:[%s0 + $0x34] sm:$0xf]
  %v29 = vld [vmem:[%s0 + $0x38] sm:$0xf]
  %v30 = vld [vmem:[%s0 + $0x3c] sm:$0xf]
  %v31 = vld [vmem:[%s1] sm:$0xf]
  %v32 = vld [vmem:[%s1 + $0x4] sm:$0xf]
  %v33 = vld [vmem:[%s1 + $0x8] sm:$0xf]
  %v34 = vld [vmem:[%s1 + $0xc] sm:$0xf]
  %v35 = vld [vmem:[%s1 + $0x10] sm:$0xf]
  %v36 = vld [vmem:[%s1 + $0x14] sm:$0xf]
  %v37 = vld [vmem:[%s1 + $0x18] sm:$0xf]
  %v38 = vld [vmem:[%s1 + $0x1c] sm:$0xf]
  %v39 = vld [vmem:[%s1 + $0x20] sm:$0xf]
  %v40 = vld [vmem:[%s1 + $0x24] sm:$0xf]
  %v41 = vld [vmem:[%s1 + $0x28] sm:$0xf]
  %v42 = vld [vmem:[%s1 + $0x2c] sm:$0xf]
  %v43 = vld [vmem:[%s1 + $0x30] sm:$0xf]
  %v44 = vld [vmem:[%s1 + $0x34] sm:$0xf]
  %v45 = vld [vmem:[%s1 + $0x38] sm:$0xf]
  %v46 = vld [vmem:[%s1 + $0x3c] sm:$0xf]
  %v47 = vld [vmem:[%s2] sm:$0x1]
  %v49 = vlaneseq
  %v50 = vshrl.u32 %v49, 7
  %v51 = vsub.s32 0, %v50
  %v52 = vrot.slane %v47, %v51
  %v70 = vunpack.c.l.b16 %v15
  %v71 = vunpack.c.l.b16 %v16
  %v72 = vunpack.c.l.b16 %v17
  %v73 = vunpack.c.l.b16 %v18
  %v74 = vunpack.c.l.b16 %v19
  %v75 = vunpack.c.l.b16 %v20
  %v76 = vunpack.c.l.b16 %v21
  %v77 = vunpack.c.l.b16 %v22
  %v78 = vunpack.c.l.b16 %v23
  %v79 = vunpack.c.l.b16 %v24
  %v80 = vunpack.c.l.b16 %v25
  %v81 = vunpack.c.l.b16 %v26
  %v82 = vunpack.c.l.b16 %v27
  %v83 = vunpack.c.l.b16 %v28
  %v84 = vunpack.c.l.b16 %v29
  %v85 = vunpack.c.l.b16 %v30
  %v86 = vpack.c.b16 %v71, %v70
  %v87 = vpack.c.b16 %v73, %v72
  %v88 = vpack.c.b16 %v75, %v74
  %v89 = vpack.c.b16 %v77, %v76
  %v90 = vpack.c.b16 %v79, %v78
  %v91 = vpack.c.b16 %v81, %v80
  %v92 = vpack.c.b16 %v83, %v82
  %v93 = vpack.c.b16 %v85, %v84
  %v118 = vunpack.c.l.b16 %v31
  %v119 = vunpack.c.l.b16 %v32
  %v120 = vunpack.c.l.b16 %v33
  %v121 = vunpack.c.l.b16 %v34
  %v122 = vunpack.c.l.b16 %v35
  %v123 = vunpack.c.l.b16 %v36
  %v124 = vunpack.c.l.b16 %v37
  %v125 = vunpack.c.l.b16 %v38
  %v126 = vunpack.c.l.b16 %v39
  %v127 = vunpack.c.l.b16 %v40
  %v128 = vunpack.c.l.b16 %v41
  %v129 = vunpack.c.l.b16 %v42
  %v130 = vunpack.c.l.b16 %v43
  %v131 = vunpack.c.l.b16 %v44
  %v132 = vunpack.c.l.b16 %v45
  %v133 = vunpack.c.l.b16 %v46
  %v134 = vpack.c.b16 %v119, %v118
  %v135 = vpack.c.b16 %v121, %v120
  %v136 = vpack.c.b16 %v123, %v122
  %v137 = vpack.c.b16 %v125, %v124
  %v138 = vpack.c.b16 %v127, %v126
  %v139 = vpack.c.b16 %v129, %v128
  %v140 = vpack.c.b16 %v131, %v130
  %v141 = vpack.c.b16 %v133, %v132
  %150 = vmatprep.subr.bf16.mxu0 0
  %151 = vmatpush1.bf16.msra.mxu0 %v134
  %152 = vmatprep.subr.bf16.mxu0 0
  %153 = vmatpush1.bf16.msra.mxu0 %v135
  %154 = vmatprep.subr.bf16.mxu0 0
  %155 = vmatpush1.bf16.msra.mxu0 %v136
  %156 = vmatprep.subr.bf16.mxu0 0
  %157 = vmatpush1.bf16.msra.mxu0 %v137
  %158 = vmatprep.subr.bf16.mxu0 0
  %159 = vmatpush1.bf16.msra.mxu0 %v138
  %160 = vmatprep.subr.bf16.mxu0 0
  %161 = vmatpush1.bf16.msra.mxu0 %v139
  %162 = vmatprep.subr.bf16.mxu0 0
  %163 = vmatpush1.bf16.msra.mxu0 %v140
  %164 = vmatprep.subr.bf16.mxu0 0
  %165 = vmatpush1.bf16.msra.mxu0 %v141
  %166 = vmatprep.subr.bf16.mxu0 0
  %167 = vmatpush1.bf16.msra.mxu0 0
  %168 = vmatprep.subr.bf16.mxu0 0
  %169 = vmatpush1.bf16.msra.mxu0 0
  %170 = vmatprep.subr.bf16.mxu0 0
  %171 = vmatpush1.bf16.msra.mxu0 0
  %172 = vmatprep.subr.bf16.mxu0 0
  %173 = vmatpush1.bf16.msra.mxu0 0
  %174 = vmatprep.subr.bf16.mxu0 0
  %175 = vmatpush1.bf16.msra.mxu0 0
  %176 = vmatprep.subr.bf16.mxu0 0
  %177 = vmatpush1.bf16.msra.mxu0 0
  %178 = vmatprep.subr.bf16.mxu0 0
  %179 = vmatpush1.bf16.msra.mxu0 0
  %180 = vmatprep.subr.bf16.mxu0 0
  %181 = vmatpush1.bf16.msra.mxu0 0
  %182 = vmatprep.mubr.bf16.mxu0 0
  %183 = vmatmul.mubr.bf16.gmra.mrb[0].mxu0 %v86
  %v184 = vpop.f32.mrb[0].mxu0
  %v185 = vadd.f32 %v52, %v184
  %v186 = vpop.f32.mrb[0].mxu0
  %v187 = vpop.f32.mrb[0].mxu0
  %v188 = vadd.f32 %v52, %v187
  %v189 = vpop.f32.mrb[0].mxu0
  %190 = vmatprep.mubr.bf16.mxu0 0
  %191 = vmatmul.mubr.bf16.gmra.mrb[0].mxu0 %v87
  %v192 = vpop.f32.mrb[0].mxu0
  %v193 = vadd.f32 %v52, %v192
  %v194 = vpop.f32.mrb[0].mxu0
  %v195 = vpop.f32.mrb[0].mxu0
  %v196 = vadd.f32 %v52, %v195
  %v197 = vpop.f32.mrb[0].mxu0
  %198 = vmatprep.mubr.bf16.mxu0 0
  %199 = vmatmul.mubr.bf16.gmra.mrb[0].mxu0 %v88
  %v200 = vpop.f32.mrb[0].mxu0
  %v201 = vadd.f32 %v52, %v200
  %v202 = vpop.f32.mrb[0].mxu0
  %v203 = vpop.f32.mrb[0].mxu0
  %v204 = vadd.f32 %v52, %v203
  %v205 = vpop.f32.mrb[0].mxu0
  %206 = vmatprep.mubr.bf16.mxu0 0
  %207 = vmatmul.mubr.bf16.gmra.mrb[0].mxu0 %v89
  %v208 = vpop.f32.mrb[0].mxu0
  %v209 = vadd.f32 %v52, %v208
  %v210 = vpop.f32.mrb[0].mxu0
  %v211 = vpop.f32.mrb[0].mxu0
  %v212 = vadd.f32 %v52, %v211
  %v213 = vpop.f32.mrb[0].mxu0
  %214 = vmatprep.mubr.bf16.mxu0 0
  %215 = vmatmul.mubr.bf16.gmra.mrb[0].mxu0 %v90
  %v216 = vpop.f32.mrb[0].mxu0
  %v217 = vadd.f32 %v52, %v216
  %v218 = vpop.f32.mrb[0].mxu0
  %v219 = vpop.f32.mrb[0].mxu0
  %v220 = vadd.f32 %v52, %v219
  %v221 = vpop.f32.mrb[0].mxu0
  %222 = vmatprep.mubr.bf16.mxu0 0
  %223 = vmatmul.mubr.bf16.gmra.mrb[0].mxu0 %v91
  %v224 = vpop.f32.mrb[0].mxu0
  %v225 = vadd.f32 %v52, %v224
  %v226 = vpop.f32.mrb[0].mxu0
  %v227 = vpop.f32.mrb[0].mxu0
  %v228 = vadd.f32 %v52, %v227
  %v229 = vpop.f32.mrb[0].mxu0
  %230 = vmatprep.mubr.bf16.mxu0 0
  %231 = vmatmul.mubr.bf16.gmra.mrb[0].mxu0 %v92
  %v232 = vpop.f32.mrb[0].mxu0
  %v233 = vadd.f32 %v52, %v232
  %v234 = vpop.f32.mrb[0].mxu0
  %v235 = vpop.f32.mrb[0].mxu0
  %v236 = vadd.f32 %v52, %v235
  %v237 = vpop.f32.mrb[0].mxu0
  %238 = vmatprep.mubr.bf16.mxu0 0
  %239 = vmatmul.mubr.bf16.gmra.mrb[0].mxu0 %v93
  %v240 = vpop.f32.mrb[0].mxu0
  %v241 = vadd.f32 %v52, %v240
  %v242 = vpop.f32.mrb[0].mxu0
  %v243 = vpop.f32.mrb[0].mxu0
  %v244 = vadd.f32 %v52, %v243
  %v245 = vpop.f32.mrb[0].mxu0
  %246 = vdwg.mxu0
  %247 = vmax.xlane.f32.xlu0 %v185
  %v248 = vpop.xlane.xlu0 %247
  %249 = vmax.xlane.f32.xlu0 %v188
  %v250 = vpop.xlane.xlu0 %249
  %251 = vmax.xlane.f32.xlu0 %v193
  %v252 = vpop.xlane.xlu0 %251
  %253 = vmax.xlane.f32.xlu0 %v196
  %v254 = vpop.xlane.xlu0 %253
  %255 = vmax.xlane.f32.xlu0 %v201
  %v256 = vpop.xlane.xlu0 %255
  %257 = vmax.xlane.f32.xlu0 %v204
  %v258 = vpop.xlane.xlu0 %257
  %259 = vmax.xlane.f32.xlu0 %v209
  %v260 = vpop.xlane.xlu0 %259
  %261 = vmax.xlane.f32.xlu0 %v212
  %v262 = vpop.xlane.xlu0 %261
  %263 = vmax.xlane.f32.xlu0 %v217
  %v264 = vpop.xlane.xlu0 %263
  %265 = vmax.xlane.f32.xlu0 %v220
  %v266 = vpop.xlane.xlu0 %265
  %267 = vmax.xlane.f32.xlu0 %v225
  %v268 = vpop.xlane.xlu0 %267
  %269 = vmax.xlane.f32.xlu0 %v228
  %v270 = vpop.xlane.xlu0 %269
  %271 = vmax.xlane.f32.xlu0 %v233
  %v272 = vpop.xlane.xlu0 %271
  %273 = vmax.xlane.f32.xlu0 %v236
  %v274 = vpop.xlane.xlu0 %273
  %275 = vmax.xlane.f32.xlu0 %v241
  %v276 = vpop.xlane.xlu0 %275
  %277 = vmax.xlane.f32.xlu0 %v244
  %v278 = vpop.xlane.xlu0 %277
  %v279 = vsub.f32 %v185, %v248
  %v280 = vsub.f32 %v188, %v250
  %v281 = vsub.f32 %v193, %v252
  %v282 = vsub.f32 %v196, %v254
  %v283 = vsub.f32 %v201, %v256
  %v284 = vsub.f32 %v204, %v258
  %v285 = vsub.f32 %v209, %v260
  %v286 = vsub.f32 %v212, %v262
  %v287 = vsub.f32 %v217, %v264
  %v288 = vsub.f32 %v220, %v266
  %v289 = vsub.f32 %v225, %v268
  %v290 = vsub.f32 %v228, %v270
  %v291 = vsub.f32 %v233, %v272
  %v292 = vsub.f32 %v236, %v274
  %v293 = vsub.f32 %v241, %v276
  %v294 = vsub.f32 %v244, %v278
  %v295 = vmul.f32 %v279, 1.442695
  %v296 = vpow.pop %v295
  %v297 = vmul.f32 %v280, 1.442695
  %v298 = vpow.pop %v297
  %v299 = vmul.f32 %v281, 1.442695
  %v300 = vpow.pop %v299
  %v301 = vmul.f32 %v282, 1.442695
  %v302 = vpow.pop %v301
  %v303 = vmul.f32 %v283, 1.442695
  %v304 = vpow.pop %v303
  %v305 = vmul.f32 %v284, 1.442695
  %v306 = vpow.pop %v305
  %v307 = vmul.f32 %v285, 1.442695
  %v308 = vpow.pop %v307
  %v309 = vmul.f32 %v286, 1.442695
  %v310 = vpow.pop %v309
  %v311 = vmul.f32 %v287, 1.442695
  %v312 = vpow.pop %v311
  %v313 = vmul.f32 %v288, 1.442695
  %v314 = vpow.pop %v313
  %v315 = vmul.f32 %v289, 1.442695
  %v316 = vpow.pop %v315
  %v317 = vmul.f32 %v290, 1.442695
  %v318 = vpow.pop %v317
  %v319 = vmul.f32 %v291, 1.442695
  %v320 = vpow.pop %v319
  %v321 = vmul.f32 %v292, 1.442695
  %v322 = vpow.pop %v321
  %v323 = vmul.f32 %v293, 1.442695
  %v324 = vpow.pop %v323
  %v325 = vmul.f32 %v294, 1.442695
  %v326 = vpow.pop %v325
  %327 = vadd.xlane.f32.xlu0 %v296
  %v328 = vpop.xlane.xlu0 %327
  %329 = vadd.xlane.f32.xlu0 %v298
  %v330 = vpop.xlane.xlu0 %329
  %331 = vadd.xlane.f32.xlu0 %v300
  %v332 = vpop.xlane.xlu0 %331
  %333 = vadd.xlane.f32.xlu0 %v302
  %v334 = vpop.xlane.xlu0 %333
  %335 = vadd.xlane.f32.xlu0 %v304
  %v336 = vpop.xlane.xlu0 %335
  %337 = vadd.xlane.f32.xlu0 %v306
  %v338 = vpop.xlane.xlu0 %337
  %339 = vadd.xlane.f32.xlu0 %v308
  %v340 = vpop.xlane.xlu0 %339
  %341 = vadd.xlane.f32.xlu0 %v310
  %v342 = vpop.xlane.xlu0 %341
  %343 = vadd.xlane.f32.xlu0 %v312
  %v344 = vpop.xlane.xlu0 %343
  %345 = vadd.xlane.f32.xlu0 %v314
  %v346 = vpop.xlane.xlu0 %345
  %347 = vadd.xlane.f32.xlu0 %v316
  %v348 = vpop.xlane.xlu0 %347
  %349 = vadd.xlane.f32.xlu0 %v318
  %v350 = vpop.xlane.xlu0 %349
  %351 = vadd.xlane.f32.xlu0 %v320
  %v352 = vpop.xlane.xlu0 %351
  %353 = vadd.xlane.f32.xlu0 %v322
  %v354 = vpop.xlane.xlu0 %353
  %355 = vadd.xlane.f32.xlu0 %v324
  %v356 = vpop.xlane.xlu0 %355
  %357 = vadd.xlane.f32.xlu0 %v326
  %v358 = vpop.xlane.xlu0 %357
  %v359 = vlog2.pop %v328
  %v360 = vmul.f32 %v359, 0.6931472
  %v361 = vlog2.pop %v330
  %v362 = vmul.f32 %v361, 0.6931472
  %v363 = vlog2.pop %v332
  %v364 = vmul.f32 %v363, 0.6931472
  %v365 = vlog2.pop %v334
  %v366 = vmul.f32 %v365, 0.6931472
  %v367 = vlog2.pop %v336
  %v368 = vmul.f32 %v367, 0.6931472
  %v369 = vlog2.pop %v338
  %v370 = vmul.f32 %v369, 0.6931472
  %v371 = vlog2.pop %v340
  %v372 = vmul.f32 %v371, 0.6931472
  %v373 = vlog2.pop %v342
  %v374 = vmul.f32 %v373, 0.6931472
  %v375 = vlog2.pop %v344
  %v376 = vmul.f32 %v375, 0.6931472
  %v377 = vlog2.pop %v346
  %v378 = vmul.f32 %v377, 0.6931472
  %v379 = vlog2.pop %v348
  %v380 = vmul.f32 %v379, 0.6931472
  %v381 = vlog2.pop %v350
  %v382 = vmul.f32 %v381, 0.6931472
  %v383 = vlog2.pop %v352
  %v384 = vmul.f32 %v383, 0.6931472
  %v385 = vlog2.pop %v354
  %v386 = vmul.f32 %v385, 0.6931472
  %v387 = vlog2.pop %v356
  %v388 = vmul.f32 %v387, 0.6931472
  %v389 = vlog2.pop %v358
  %v390 = vmul.f32 %v389, 0.6931472
  %v391 = vsub.f32 %v279, %v360
  %v392 = vsub.f32 %v280, %v362
  %v393 = vsub.f32 %v281, %v364
  %v394 = vsub.f32 %v282, %v366
  %v395 = vsub.f32 %v283, %v368
  %v396 = vsub.f32 %v284, %v370
  %v397 = vsub.f32 %v285, %v372
  %v398 = vsub.f32 %v286, %v374
  %v399 = vsub.f32 %v287, %v376
  %v400 = vsub.f32 %v288, %v378
  %v401 = vsub.f32 %v289, %v380
  %v402 = vsub.f32 %v290, %v382
  %v403 = vsub.f32 %v291, %v384
  %v404 = vsub.f32 %v292, %v386
  %v405 = vsub.f32 %v293, %v388
  %v406 = vsub.f32 %v294, %v390
  %407 = vst [vmem:[%s3] sm:$0xff] %v391
  %408 = vst [vmem:[%s3 + $0x8] sm:$0xff] %v392
  %409 = vst [vmem:[%s3 + $0x10] sm:$0xff] %v393
  %410 = vst [vmem:[%s3 + $0x18] sm:$0xff] %v394
  %411 = vst [vmem:[%s3 + $0x20] sm:$0xff] %v395
  %412 = vst [vmem:[%s3 + $0x28] sm:$0xff] %v396
  %413 = vst [vmem:[%s3 + $0x30] sm:$0xff] %v397
  %414 = vst [vmem:[%s3 + $0x38] sm:$0xff] %v398
  %415 = vst [vmem:[%s3 + $0x40] sm:$0xff] %v399
  %416 = vst [vmem:[%s3 + $0x48] sm:$0xff] %v400
  %417 = vst [vmem:[%s3 + $0x50] sm:$0xff] %v401
  %418 = vst [vmem:[%s3 + $0x58] sm:$0xff] %v402
  %419 = vst [vmem:[%s3 + $0x60] sm:$0xff] %v403
  %420 = vst [vmem:[%s3 + $0x68] sm:$0xff] %v404
  %421 = vst [vmem:[%s3 + $0x70] sm:$0xff] %v405
  %422 = vst [vmem:[%s3 + $0x78] sm:$0xff] %v406
  // Predicated region
  $region14: #{naive_decoder_forward.3} parent=0 // pred_check
    _
  $region15: #{naive_decoder_forward.3} parent=0 // pred_check_branch
    %424 = sbr.rel (0) target = $region17
  $region16: #{naive_decoder_forward.3} parent=0 // pred_region
    _
  $region17: #{naive_decoder_forward.3} parent=0 // pred_fallthru
    _
  // Predicated region
  $region18: #{naive_decoder_forward.3} parent=0 // pred_check
    _
  $region19: #{naive_decoder_forward.3} parent=0 // pred_check_branch
    %426 = sbr.rel (0) target = $region21
  $region20: #{naive_decoder_forward.3} parent=0 // pred_region
    _
  $region21: #{naive_decoder_forward.3} parent=0 // pred_fallthru
    _

// kernel: naive_decoder_forward.2
$region0: #{naive_decoder_forward.2}
  #allocation0 [shape = 'u32[]', space=smem, size = 0x4, offset = 0x4, fixed_abs, tag = 'smem constant byte address 0x4 - core index']
  #allocation1 [shape = 'u32[144,128]{1,0:T(1,128)}', space=vmem, size = 0x12000, scoped, tag = 'internal scratch']
  #allocation2 [shape = 'bf16[128,128]{1,0:T(16,128)(2,1)}', space=vmem, size = 0x8000, scoped, tag = 'scratch operand']
  #allocation3 [shape = 'f32[128,384]{1,0:T(8,128)}', space=vmem, size = 0x30000, scoped, tag = 'scratch operand']
  %s0 = inlined_call_operand.vmem [shape: bf16[128,128], index: 0, kind: input, shape index: {}]
  %s1 = inlined_call_operand.vmem [shape: f32[2,16,128], index: 1, kind: input, shape index: {}]
  %s2 = inlined_call_operand.vmem [shape: bf16[128,384], index: 2, kind: input, shape index: {}]
  %s3 = inlined_call_operand.vmem [shape: bf16[128,384], index: 3, kind: input, shape index: {}]
  %s4 = inlined_call_operand.vmem [shape: f32[1,384], index: 4, kind: input, shape index: {}]
  %s5 = inlined_call_operand.vmem [shape: f32[1,128], index: 5, kind: input, shape index: {}]
  %s6 = inlined_call_operand.vmem [shape: bf16[128,384], index: 6, kind: input, shape index: {}]
  %s7 = inlined_call_operand.vmem [shape: bf16[128,384], index: 7, kind: input, shape index: {}]
  %s8 = inlined_call_operand.vmem [shape: f32[1,384], index: 8, kind: input, shape index: {}]
  %s9 = inlined_call_operand.vmem [shape: f32[1,128], index: 9, kind: input, shape index: {}]
  %s10 = inlined_call_operand.vmem [shape: bf16[128,128], index: 10, kind: output, shape index: {0}]
  %s11 = inlined_call_operand.vmem [shape: f32[2,16,128], index: 11, kind: output, shape index: {1}]
  %12 = xla_tuple %s10, %s11
  %s13 = sld [smem:[#allocation0]]
  $region58: #{naive_decoder_forward.2} parent=0
    _
  %s15 = ssub.s32 1, %s13
  %s16 = scalar_select 0, %s15, %s13
  // Predicated region
  $region2: #{naive_decoder_forward.2} parent=0 // pred_check
    _
  $region3: #{naive_decoder_forward.2} parent=0 // pred_check_branch
    %18 = sbr.rel (0) target = $region5
  $region4: #{naive_decoder_forward.2} parent=0 // pred_region
    _
  $region5: #{naive_decoder_forward.2} parent=0 // pred_fallthru
    _
  // Predicated region
  $region6: #{naive_decoder_forward.2} parent=0 // pred_check
    _
  $region7: #{naive_decoder_forward.2} parent=0 // pred_check_branch
    %20 = sbr.rel (0) target = $region9
  $region8: #{naive_decoder_forward.2} parent=0 // pred_region
    _
  $region9: #{naive_decoder_forward.2} parent=0 // pred_fallthru
    _
  // Predicated region
  $region10: #{naive_decoder_forward.2} parent=0 // pred_check
    _
  $region11: #{naive_decoder_forward.2} parent=0 // pred_check_branch
    %22 = sbr.rel (0) target = $region13
  $region12: #{naive_decoder_forward.2} parent=0 // pred_region
    _
  $region13: #{naive_decoder_forward.2} parent=0 // pred_fallthru
    _
  // Predicated region
  $region14: #{naive_decoder_forward.2} parent=0 // pred_check
    _
  $region15: #{naive_decoder_forward.2} parent=0 // pred_check_branch
    %24 = sbr.rel (0) target = $region17
  $region16: #{naive_decoder_forward.2} parent=0 // pred_region
    _
  $region17: #{naive_decoder_forward.2} parent=0 // pred_fallthru
    _
  // Predicated region
  $region18: #{naive_decoder_forward.2} parent=0 // pred_check
    _
  $region19: #{naive_decoder_forward.2} parent=0 // pred_check_branch
    %26 = sbr.rel (0) target = $region21
  $region20: #{naive_decoder_forward.2} parent=0 // pred_region
    _
  $region21: #{naive_decoder_forward.2} parent=0 // pred_fallthru
    _
  // Predicated region
  $region22: #{naive_decoder_forward.2} parent=0 // pred_check
    _
  $region23: #{naive_decoder_forward.2} parent=0 // pred_check_branch
    %28 = sbr.rel (0) target = $region25
  $region24: #{naive_decoder_forward.2} parent=0 // pred_region
    _
  $region25: #{naive_decoder_forward.2} parent=0 // pred_fallthru
    _
  // Predicated region
  $region26: #{naive_decoder_forward.2} parent=0 // pred_check
    _
  $region27: #{naive_decoder_forward.2} parent=0 // pred_check_branch
    %30 = sbr.rel (0) target = $region29
  $region28: #{naive_decoder_forward.2} parent=0 // pred_region
    _
  $region29: #{naive_decoder_forward.2} parent=0 // pred_fallthru
    _
  // Predicated region
  $region30: #{naive_decoder_forward.2} parent=0 // pred_check
    _
  $region31: #{naive_decoder_forward.2} parent=0 // pred_check_branch
    %32 = sbr.rel (0) target = $region33
  $region32: #{naive_decoder_forward.2} parent=0 // pred_region
    _
  $region33: #{naive_decoder_forward.2} parent=0 // pred_fallthru
    _
  // Predicated region
  $region34: #{naive_decoder_forward.2} parent=0 // pred_check
    _
  $region35: #{naive_decoder_forward.2} parent=0 // pred_check_branch
    %34 = sbr.rel (0) target = $region37
  $region36: #{naive_decoder_forward.2} parent=0 // pred_region
    _
  $region37: #{naive_decoder_forward.2} parent=0 // pred_fallthru
    _
  // Predicated region
  $region38: #{naive_decoder_forward.2} parent=0 // pred_check
    _
  $region39: #{naive_decoder_forward.2} parent=0 // pred_check_branch
    %36 = sbr.rel (0) target = $region41
  $region40: #{naive_decoder_forward.2} parent=0 // pred_region
    _
  $region41: #{naive_decoder_forward.2} parent=0 // pred_fallthru
    _
  %v38 = vld [vmem:[%s2] sm:$0xff]
  %v39 = vld [vmem:[%s2 + $0x8] sm:$0xf]
  %v40 = vld [vmem:[%s2 + $0xc] sm:$0xff]
  %v41 = vld [vmem:[%s2 + $0x14] sm:$0xf]
  %v42 = vld [vmem:[%s2 + $0x18] sm:$0xff]
  %v43 = vld [vmem:[%s2 + $0x20] sm:$0xf]
  %v44 = vld [vmem:[%s2 + $0x24] sm:$0xff]
  %v45 = vld [vmem:[%s2 + $0x2c] sm:$0xf]
  %v46 = vld [vmem:[%s2 + $0x30] sm:$0xff]
  %v47 = vld [vmem:[%s2 + $0x38] sm:$0xf]
  %v48 = vld [vmem:[%s2 + $0x3c] sm:$0xff]
  %v49 = vld [vmem:[%s2 + $0x44] sm:$0xf]
  %v50 = vld [vmem:[%s2 + $0x48] sm:$0xff]
  %v51 = vld [vmem:[%s2 + $0x50] sm:$0xf]
  %v52 = vld [vmem:[%s2 + $0x54] sm:$0xff]
  %v53 = vld [vmem:[%s2 + $0x5c] sm:$0xf]
  %v54 = vld [vmem:[%s2 + $0x60] sm:$0xff]
  %v55 = vld [vmem:[%s2 + $0x68] sm:$0xf]
  %v56 = vld [vmem:[%s2 + $0x6c] sm:$0xff]
  %v57 = vld [vmem:[%s2 + $0x74] sm:$0xf]
  %v58 = vld [vmem:[%s2 + $0x78] sm:$0xff]
  %v59 = vld [vmem:[%s2 + $0x80] sm:$0xf]
  %v60 = vld [vmem:[%s2 + $0x84] sm:$0xff]
  %v61 = vld [vmem:[%s2 + $0x8c] sm:$0xf]
  %v62 = vld [vmem:[%s2 + $0x90] sm:$0xff]
  %v63 = vld [vmem:[%s2 + $0x98] sm:$0xf]
  %v64 = vld [vmem:[%s2 + $0x9c] sm:$0xff]
  %v65 = vld [vmem:[%s2 + $0xa4] sm:$0xf]
  %v66 = vld [vmem:[%s2 + $0xa8] sm:$0xff]
  %v67 = vld [vmem:[%s2 + $0xb0] sm:$0xf]
  %v68 = vld [vmem:[%s2 + $0xb4] sm:$0xff]
  %v69 = vld [vmem:[%s2 + $0xbc] sm:$0xf]
  %v70 = vld [vmem:[%s3] sm:$0xff]
  %v71 = vld [vmem:[%s3 + $0x8] sm:$0xf]
  %v72 = vld [vmem:[%s3 + $0xc] sm:$0xff]
  %v73 = vld [vmem:[%s3 + $0x14] sm:$0xf]
  %v74 = vld [vmem:[%s3 + $0x18] sm:$0xff]
  %v75 = vld [vmem:[%s3 + $0x20] sm:$0xf]
  %v76 = vld [vmem:[%s3 + $0x24] sm:$0xff]
  %v77 = vld [vmem:[%s3 + $0x2c] sm:$0xf]
  %v78 = vld [vmem:[%s3 + $0x30] sm:$0xff]
  %v79 = vld [vmem:[%s3 + $0x38] sm:$0xf]
  %v80 = vld [vmem:[%s3 + $0x3c] sm:$0xff]
  %v81 = vld [vmem:[%s3 + $0x44] sm:$0xf]
  %v82 = vld [vmem:[%s3 + $0x48] sm:$0xff]
  %v83 = vld [vmem:[%s3 + $0x50] sm:$0xf]
  %v84 = vld [vmem:[%s3 + $0x54] sm:$0xff]
  %v85 = vld [vmem:[%s3 + $0x5c] sm:$0xf]
  %v86 = vld [vmem:[%s3 + $0x60] sm:$0xff]
  %v87 = vld [vmem:[%s3 + $0x68] sm:$0xf]
  %v88 = vld [vmem:[%s3 + $0x6c] sm:$0xff]
  %v89 = vld [vmem:[%s3 + $0x74] sm:$0xf]
  %v90 = vld [vmem:[%s3 + $0x78] sm:$0xff]
  %v91 = vld [vmem:[%s3 + $0x80] sm:$0xf]
  %v92 = vld [vmem:[%s3 + $0x84] sm:$0xff]
  %v93 = vld [vmem:[%s3 + $0x8c] sm:$0xf]
  %v94 = vld [vmem:[%s3 + $0x90] sm:$0xff]
  %v95 = vld [vmem:[%s3 + $0x98] sm:$0xf]
  %v96 = vld [vmem:[%s3 + $0x9c] sm:$0xff]
  %v97 = vld [vmem:[%s3 + $0xa4] sm:$0xf]
  %v98 = vld [vmem:[%s3 + $0xa8] sm:$0xff]
  %v99 = vld [vmem:[%s3 + $0xb0] sm:$0xf]
  %v100 = vld [vmem:[%s3 + $0xb4] sm:$0xff]
  %v101 = vld [vmem:[%s3 + $0xbc] sm:$0xf]
  %v102 = vld [vmem:[%s4] sm:$0x7]
  %v103 = vld [vmem:[%s5] sm:$0x1]
  %v105 = vlaneseq
  %v106 = vshrl.u32 %v105, 7
  %v107 = vsub.s32 0, %v106
  %v108 = vrot.slane %v103, %v107
  %v110 = vld [vmem:[%s1] sm:$0xff]
  %v111 = vld [vmem:[%s1 + $0x8] sm:$0xff]
  %v112 = vld [vmem:[%s0] sm:$0xf]
  %v113 = vld [vmem:[%s0 + $0x4] sm:$0xf]
  %v114 = vld [vmem:[%s0 + $0x8] sm:$0xf]
  %v115 = vld [vmem:[%s0 + $0xc] sm:$0xf]
  %v116 = vld [vmem:[%s0 + $0x10] sm:$0xf]
  %v117 = vld [vmem:[%s0 + $0x14] sm:$0xf]
  %v118 = vld [vmem:[%s0 + $0x18] sm:$0xf]
  %v119 = vld [vmem:[%s0 + $0x1c] sm:$0xf]
  %v120 = vld [vmem:[%s0 + $0x20] sm:$0xf]
  %v121 = vld [vmem:[%s0 + $0x24] sm:$0xf]
  %v122 = vld [vmem:[%s0 + $0x28] sm:$0xf]
  %v123 = vld [vmem:[%s0 + $0x2c] sm:$0xf]
  %v124 = vld [vmem:[%s0 + $0x30] sm:$0xf]
  %v125 = vld [vmem:[%s0 + $0x34] sm:$0xf]
  %v126 = vld [vmem:[%s0 + $0x38] sm:$0xf]
  %v127 = vld [vmem:[%s0 + $0x3c] sm:$0xf]
  %v129 = vlaneseq
  %v130 = vshrl.u32 %v129, 7
  %v131 = vsub.s32 0, %v130
  %v132 = vrot.slane %v102, %v131
  %v133 = vlaneseq
  %v134 = vshrl.u32 %v133, 7
  %v135 = vsub.s32 1, %v134
  %v136 = vrot.slane %v102, %v135
  %v137 = vlaneseq
  %v138 = vshrl.u32 %v137, 7
  %v139 = vsub.s32 2, %v138
  %v140 = vrot.slane %v102, %v139
  %v160 = vunpack.c.l.b16 %v112
  %v161 = vunpack.c.l.b16 %v113
  %v162 = vunpack.c.l.b16 %v114
  %v163 = vunpack.c.l.b16 %v115
  %v164 = vunpack.c.l.b16 %v116
  %v165 = vunpack.c.l.b16 %v117
  %v166 = vunpack.c.l.b16 %v118
  %v167 = vunpack.c.l.b16 %v119
  %v168 = vunpack.c.l.b16 %v120
  %v169 = vunpack.c.l.b16 %v121
  %v170 = vunpack.c.l.b16 %v122
  %v171 = vunpack.c.l.b16 %v123
  %v172 = vunpack.c.l.b16 %v124
  %v173 = vunpack.c.l.b16 %v125
  %v174 = vunpack.c.l.b16 %v126
  %v175 = vunpack.c.l.b16 %v127
  %v176 = vpack.c.b16 %v161, %v160
  %v177 = vpack.c.b16 %v163, %v162
  %v178 = vpack.c.b16 %v165, %v164
  %v179 = vpack.c.b16 %v167, %v166
  %v180 = vpack.c.b16 %v169, %v168
  %v181 = vpack.c.b16 %v171, %v170
  %v182 = vpack.c.b16 %v173, %v172
  %v183 = vpack.c.b16 %v175, %v174
  %v224 = vunpack.c.l.b16 %v38
  %v225 = vunpack.c.h.b16 %v38
  %v226 = vunpack.c.l.b16 %v39
  %v227 = vunpack.c.l.b16 %v40
  %v228 = vunpack.c.h.b16 %v40
  %v229 = vunpack.c.l.b16 %v41
  %v230 = vunpack.c.l.b16 %v42
  %v231 = vunpack.c.h.b16 %v42
  %v232 = vunpack.c.l.b16 %v43
  %v233 = vunpack.c.l.b16 %v44
  %v234 = vunpack.c.h.b16 %v44
  %v235 = vunpack.c.l.b16 %v45
  %v236 = vunpack.c.l.b16 %v46
  %v237 = vunpack.c.h.b16 %v46
  %v238 = vunpack.c.l.b16 %v47
  %v239 = vunpack.c.l.b16 %v48
  %v240 = vunpack.c.h.b16 %v48
  %v241 = vunpack.c.l.b16 %v49
  %v242 = vunpack.c.l.b16 %v50
  %v243 = vunpack.c.h.b16 %v50
  %v244 = vunpack.c.l.b16 %v51
  %v245 = vunpack.c.l.b16 %v52
  %v246 = vunpack.c.h.b16 %v52
  %v247 = vunpack.c.l.b16 %v53
  %v248 = vunpack.c.l.b16 %v54
  %v249 = vunpack.c.h.b16 %v54
  %v250 = vunpack.c.l.b16 %v55
  %v251 = vunpack.c.l.b16 %v56
  %v252 = vunpack.c.h.b16 %v56
  %v253 = vunpack.c.l.b16 %v57
  %v254 = vunpack.c.l.b16 %v58
  %v255 = vunpack.c.h.b16 %v58
  %v256 = vunpack.c.l.b16 %v59
  %v257 = vunpack.c.l.b16 %v60
  %v258 = vunpack.c.h.b16 %v60
  %v259 = vunpack.c.l.b16 %v61
  %v260 = vunpack.c.l.b16 %v62
  %v261 = vunpack.c.h.b16 %v62
  %v262 = vunpack.c.l.b16 %v63
  %v263 = vunpack.c.l.b16 %v64
  %v264 = vunpack.c.h.b16 %v64
  %v265 = vunpack.c.l.b16 %v65
  %v266 = vunpack.c.l.b16 %v66
  %v267 = vunpack.c.h.b16 %v66
  %v268 = vunpack.c.l.b16 %v67
  %v269 = vunpack.c.l.b16 %v68
  %v270 = vunpack.c.h.b16 %v68
  %v271 = vunpack.c.l.b16 %v69
  %v272 = vpack.c.b16 %v227, %v224
  %v273 = vpack.c.b16 %v228, %v225
  %v274 = vpack.c.b16 %v229, %v226
  %v275 = vpack.c.b16 %v233, %v230
  %v276 = vpack.c.b16 %v234, %v231
  %v277 = vpack.c.b16 %v235, %v232
  %v278 = vpack.c.b16 %v239, %v236
  %v279 = vpack.c.b16 %v240, %v237
  %v280 = vpack.c.b16 %v241, %v238
  %v281 = vpack.c.b16 %v245, %v242
  %v282 = vpack.c.b16 %v246, %v243
  %v283 = vpack.c.b16 %v247, %v244
  %v284 = vpack.c.b16 %v251, %v248
  %v285 = vpack.c.b16 %v252, %v249
  %v286 = vpack.c.b16 %v253, %v250
  %v287 = vpack.c.b16 %v257, %v254
  %v288 = vpack.c.b16 %v258, %v255
  %v289 = vpack.c.b16 %v259, %v256
  %v290 = vpack.c.b16 %v263, %v260
  %v291 = vpack.c.b16 %v264, %v261
  %v292 = vpack.c.b16 %v265, %v262
  %v293 = vpack.c.b16 %v269, %v266
  %v294 = vpack.c.b16 %v270, %v267
  %v295 = vpack.c.b16 %v271, %v268
  %320 = vmatprep.subr.bf16.mxu0 %v273
  %321 = vmatpush1.bf16.msra.mxu0 %v272
  %322 = vmatprep.subr.bf16.mxu0 %v276
  %323 = vmatpush1.bf16.msra.mxu0 %v275
  %324 = vmatprep.subr.bf16.mxu0 %v279
  %325 = vmatpush1.bf16.msra.mxu0 %v278
  %326 = vmatprep.subr.bf16.mxu0 %v282
  %327 = vmatpush1.bf16.msra.mxu0 %v281
  %328 = vmatprep.subr.bf16.mxu0 %v285
  %329 = vmatpush1.bf16.msra.mxu0 %v284
  %330 = vmatprep.subr.bf16.mxu0 %v288
  %331 = vmatpush1.bf16.msra.mxu0 %v287
  %332 = vmatprep.subr.bf16.mxu0 %v291
  %333 = vmatpush1.bf16.msra.mxu0 %v290
  %334 = vmatprep.subr.bf16.mxu0 %v294
  %335 = vmatpush1.bf16.msra.mxu0 %v293
  %336 = vmatprep.subr.bf16.mxu0 0
  %337 = vmatpush1.bf16.msra.mxu0 0
  %338 = vmatprep.subr.bf16.mxu0 0
  %339 = vmatpush1.bf16.msra.mxu0 0
  %340 = vmatprep.subr.bf16.mxu0 0
  %341 = vmatpush1.bf16.msra.mxu0 0
  %342 = vmatprep.subr.bf16.mxu0 0
  %343 = vmatpush1.bf16.msra.mxu0 0
  %344 = vmatprep.subr.bf16.mxu0 0
  %345 = vmatpush1.bf16.msra.mxu0 0
  %346 = vmatprep.subr.bf16.mxu0 0
  %347 = vmatpush1.bf16.msra.mxu0 0
  %348 = vmatprep.subr.bf16.mxu0 0
  %349 = vmatpush1.bf16.msra.mxu0 0
  %350 = vmatprep.subr.bf16.mxu0 0
  %351 = vmatpush1.bf16.msra.mxu0 0
  %352 = vmatprep.mubr.bf16.mxu0 0
  %353 = vmatmul.mubr.bf16.gmra.mrb[0].mxu0 %v176
  %v354 = vpop.f32.mrb[0].mxu0
  %v355 = vadd.f32 %v132, %v354
  %v356 = vpop.f32.mrb[0].mxu0
  %v357 = vadd.f32 %v136, %v356
  %v358 = vpop.f32.mrb[0].mxu0
  %v359 = vadd.f32 %v132, %v358
  %v360 = vpop.f32.mrb[0].mxu0
  %v361 = vadd.f32 %v136, %v360
  %362 = vmatprep.mubr.bf16.mxu0 0
  %363 = vmatmul.mubr.bf16.gmra.mrb[0].mxu0 %v177
  %v364 = vpop.f32.mrb[0].mxu0
  %v365 = vadd.f32 %v132, %v364
  %v366 = vpop.f32.mrb[0].mxu0
  %v367 = vadd.f32 %v136, %v366
  %v368 = vpop.f32.mrb[0].mxu0
  %v369 = vadd.f32 %v132, %v368
  %v370 = vpop.f32.mrb[0].mxu0
  %v371 = vadd.f32 %v136, %v370
  %372 = vmatprep.mubr.bf16.mxu0 0
  %373 = vmatmul.mubr.bf16.gmra.mrb[0].mxu0 %v178
  %v374 = vpop.f32.mrb[0].mxu0
  %v375 = vadd.f32 %v132, %v374
  %v376 = vpop.f32.mrb[0].mxu0
  %v377 = vadd.f32 %v136, %v376
  %v378 = vpop.f32.mrb[0].mxu0
  %v379 = vadd.f32 %v132, %v378
  %v380 = vpop.f32.mrb[0].mxu0
  %v381 = vadd.f32 %v136, %v380
  %382 = vmatprep.mubr.bf16.mxu0 0
  %383 = vmatmul.mubr.bf16.gmra.mrb[0].mxu0 %v179
  %v384 = vpop.f32.mrb[0].mxu0
  %v385 = vadd.f32 %v132, %v384
  %v386 = vpop.f32.mrb[0].mxu0
  %v387 = vadd.f32 %v136, %v386
  %v388 = vpop.f32.mrb[0].mxu0
  %v389 = vadd.f32 %v132, %v388
  %v390 = vpop.f32.mrb[0].mxu0
  %v391 = vadd.f32 %v136, %v390
  %392 = vmatprep.mubr.bf16.mxu0 0
  %393 = vmatmul.mubr.bf16.gmra.mrb[0].mxu0 %v180
  %v394 = vpop.f32.mrb[0].mxu0
  %v395 = vadd.f32 %v132, %v394
  %v396 = vpop.f32.mrb[0].mxu0
  %v397 = vadd.f32 %v136, %v396
  %v398 = vpop.f32.mrb[0].mxu0
  %v399 = vadd.f32 %v132, %v398
  %v400 = vpop.f32.mrb[0].mxu0
  %v401 = vadd.f32 %v136, %v400
  %402 = vmatprep.mubr.bf16.mxu0 0
  %403 = vmatmul.mubr.bf16.gmra.mrb[0].mxu0 %v181
  %v404 = vpop.f32.mrb[0].mxu0
  %v405 = vadd.f32 %v132, %v404
  %v406 = vpop.f32.mrb[0].mxu0
  %v407 = vadd.f32 %v136, %v406
  %v408 = vpop.f32.mrb[0].mxu0
  %v409 = vadd.f32 %v132, %v408
  %v410 = vpop.f32.mrb[0].mxu0
  %v411 = vadd.f32 %v136, %v410
  %412 = vmatprep.mubr.bf16.mxu0 0
  %413 = vmatmul.mubr.bf16.gmra.mrb[0].mxu0 %v182
  %v414 = vpop.f32.mrb[0].mxu0
  %v415 = vadd.f32 %v132, %v414
  %v416 = vpop.f32.mrb[0].mxu0
  %v417 = vadd.f32 %v136, %v416
  %v418 = vpop.f32.mrb[0].mxu0
  %v419 = vadd.f32 %v132, %v418
  %v420 = vpop.f32.mrb[0].mxu0
  %v421 = vadd.f32 %v136, %v420
  %422 = vmatprep.mubr.bf16.mxu0 0
  %423 = vmatmul.mubr.bf16.gmra.mrb[0].mxu0 %v183
  %v424 = vpop.f32.mrb[0].mxu0
  %v425 = vadd.f32 %v132, %v424
  %v426 = vpop.f32.mrb[0].mxu0
  %v427 = vadd.f32 %v136, %v426
  %v428 = vpop.f32.mrb[0].mxu0
  %v429 = vadd.f32 %v132, %v428
  %v430 = vpop.f32.mrb[0].mxu0
  %v431 = vadd.f32 %v136, %v430
  %432 = vdwg.mxu0
  %433 = vmatprep.subr.bf16.mxu0 0
  %434 = vmatpush1.bf16.msra.mxu0 %v274
  %435 = vmatprep.subr.bf16.mxu0 0
  %436 = vmatpush1.bf16.msra.mxu0 %v277
  %437 = vmatprep.subr.bf16.mxu0 0
  %438 = vmatpush1.bf16.msra.mxu0 %v280
  %439 = vmatprep.subr.bf16.mxu0 0
  %440 = vmatpush1.bf16.msra.mxu0 %v283
  %441 = vmatprep.subr.bf16.mxu0 0
  %442 = vmatpush1.bf16.msra.mxu0 %v286
  %443 = vmatprep.subr.bf16.mxu0 0
  %444 = vmatpush1.bf16.msra.mxu0 %v289
  %445 = vmatprep.subr.bf16.mxu0 0
  %446 = vmatpush1.bf16.msra.mxu0 %v292
  %447 = vmatprep.subr.bf16.mxu0 0
  %448 = vmatpush1.bf16.msra.mxu0 %v295
  %449 = vmatprep.subr.bf16.mxu0 0
  %450 = vmatpush1.bf16.msra.mxu0 0
  %451 = vmatprep.subr.bf16.mxu0 0
  %452 = vmatpush1.bf16.msra.mxu0 0
  %453 = vmatprep.subr.bf16.mxu0 0
  %454 = vmatpush1.bf16.msra.mxu0 0
  %455 = vmatprep.subr.bf16.mxu0 0
  %456 = vmatpush1.bf16.msra.mxu0 0
  %457 = vmatprep.subr.bf16.mxu0 0
  %458 = vmatpush1.bf16.msra.mxu0 0
  %459 = vmatprep.subr.bf16.mxu0 0
  %460 = vmatpush1.bf16.msra.mxu0 0
  %461 = vmatprep.subr.bf16.mxu0 0
  %462 = vmatpush1.bf16.msra.mxu0 0
  %463 = vmatprep.subr.bf16.mxu0 0
  %464 = vmatpush1.bf16.msra.mxu0 0
  %465 = vmatprep.mubr.bf16.mxu0 0
  %466 = vmatmul.mubr.bf16.gmra.mrb[0].mxu0 %v176
  %v467 = vpop.f32.mrb[0].mxu0
  %v468 = vadd.f32 %v140, %v467
  %v469 = vpop.f32.mrb[0].mxu0
  %v470 = vpop.f32.mrb[0].mxu0
  %v471 = vadd.f32 %v140, %v470
  %v472 = vpop.f32.mrb[0].mxu0
  %473 = vmatprep.mubr.bf16.mxu0 0
  %474 = vmatmul.mubr.bf16.gmra.mrb[0].mxu0 %v177
  %v475 = vpop.f32.mrb[0].mxu0
  %v476 = vadd.f32 %v140, %v475
  %v477 = vpop.f32.mrb[0].mxu0
  %v478 = vpop.f32.mrb[0].mxu0
  %v479 = vadd.f32 %v140, %v478
  %v480 = vpop.f32.mrb[0].mxu0
  %481 = vmatprep.mubr.bf16.mxu0 0
  %482 = vmatmul.mubr.bf16.gmra.mrb[0].mxu0 %v178
  %v483 = vpop.f32.mrb[0].mxu0
  %v484 = vadd.f32 %v140, %v483
  %v485 = vpop.f32.mrb[0].mxu0
  %v486 = vpop.f32.mrb[0].mxu0
  %v487 = vadd.f32 %v140, %v486
  %v488 = vpop.f32.mrb[0].mxu0
  %489 = vmatprep.mubr.bf16.mxu0 0
  %490 = vmatmul.mubr.bf16.gmra.mrb[0].mxu0 %v179
  %v491 = vpop.f32.mrb[0].mxu0
  %v492 = vadd.f32 %v140, %v491
  %v493 = vpop.f32.mrb[0].mxu0
  %v494 = vpop.f32.mrb[0].mxu0
  %v495 = vadd.f32 %v140, %v494
  %v496 = vpop.f32.mrb[0].mxu0
  %497 = vmatprep.mubr.bf16.mxu0 0
  %498 = vmatmul.mubr.bf16.gmra.mrb[0].mxu0 %v180
  %v499 = vpop.f32.mrb[0].mxu0
  %v500 = vadd.f32 %v140, %v499
  %v501 = vpop.f32.mrb[0].mxu0
  %v502 = vpop.f32.mrb[0].mxu0
  %v503 = vadd.f32 %v140, %v502
  %v504 = vpop.f32.mrb[0].mxu0
  %505 = vmatprep.mubr.bf16.mxu0 0
  %506 = vmatmul.mubr.bf16.gmra.mrb[0].mxu0 %v181
  %v507 = vpop.f32.mrb[0].mxu0
  %v508 = vadd.f32 %v140, %v507
  %v509 = vpop.f32.mrb[0].mxu0
  %v510 = vpop.f32.mrb[0].mxu0
  %v511 = vadd.f32 %v140, %v510
  %v512 = vpop.f32.mrb[0].mxu0
  %513 = vmatprep.mubr.bf16.mxu0 0
  %514 = vmatmul.mubr.bf16.gmra.mrb[0].mxu0 %v182
  %v515 = vpop.f32.mrb[0].mxu0
  %v516 = vadd.f32 %v140, %v515
  %v517 = vpop.f32.mrb[0].mxu0
  %v518 = vpop.f32.mrb[0].mxu0
  %v519 = vadd.f32 %v140, %v518
  %v520 = vpop.f32.mrb[0].mxu0
  %521 = vmatprep.mubr.bf16.mxu0 0
  %522 = vmatmul.mubr.bf16.gmra.mrb[0].mxu0 %v183
  %v523 = vpop.f32.mrb[0].mxu0
  %v524 = vadd.f32 %v140, %v523
  %v525 = vpop.f32.mrb[0].mxu0
  %v526 = vpop.f32.mrb[0].mxu0
  %v527 = vadd.f32 %v140, %v526
  %v528 = vpop.f32.mrb[0].mxu0
  %529 = vdwg.mxu0
  %530 = vst [vmem:[#allocation3] sm:$0xff] %v355
  %531 = vst [vmem:[#allocation3 + $0x8] sm:$0xff] %v357
  %532 = vst [vmem:[#allocation3 + $0x10] sm:$0xff] %v468
  %533 = vst [vmem:[#allocation3 + $0x18] sm:$0xff] %v359
  %534 = vst [vmem:[#allocation3 + $0x20] sm:$0xff] %v361
  %535 = vst [vmem:[#allocation3 + $0x28] sm:$0xff] %v471
  %536 = vst [vmem:[#allocation3 + $0x30] sm:$0xff] %v365
  %537 = vst [vmem:[#allocation3 + $0x38] sm:$0xff] %v367
  %538 = vst [vmem:[#allocation3 + $0x40] sm:$0xff] %v476
  %539 = vst [vmem:[#allocation3 + $0x48] sm:$0xff] %v369
  %540 = vst [vmem:[#allocation3 + $0x50] sm:$0xff] %v371
  %541 = vst [vmem:[#allocation3 + $0x58] sm:$0xff] %v479
  %542 = vst [vmem:[#allocation3 + $0x60] sm:$0xff] %v375
  %543 = vst [vmem:[#allocation3 + $0x68] sm:$0xff] %v377
  %544 = vst [vmem:[#allocation3 + $0x70] sm:$0xff] %v484
  %545 = vst [vmem:[#allocation3 + $0x78] sm:$0xff] %v379
  %546 = vst [vmem:[#allocation3 + $0x80] sm:$0xff] %v381
  %547 = vst [vmem:[#allocation3 + $0x88] sm:$0xff] %v487
  %548 = vst [vmem:[#allocation3 + $0x90] sm:$0xff] %v385
  %549 = vst [vmem:[#allocation3 + $0x98] sm:$0xff] %v387
  %550 = vst [vmem:[#allocation3 + $0xa0] sm:$0xff] %v492
  %551 = vst [vmem:[#allocation3 + $0xa8] sm:$0xff] %v389
  %552 = vst [vmem:[#allocation3 + $0xb0] sm:$0xff] %v391
  %553 = vst [vmem:[#allocation3 + $0xb8] sm:$0xff] %v495
  %554 = vst [vmem:[#allocation3 + $0xc0] sm:$0xff] %v395
  %555 = vst [vmem:[#allocation3 + $0xc8] sm:$0xff] %v397
  %556 = vst [vmem:[#allocation3 + $0xd0] sm:$0xff] %v500
  %557 = vst [vmem:[#allocation3 + $0xd8] sm:$0xff] %v399
  %558 = vst [vmem:[#allocation3 + $0xe0] sm:$0xff] %v401
  %559 = vst [vmem:[#allocation3 + $0xe8] sm:$0xff] %v503
  %560 = vst [vmem:[#allocation3 + $0xf0] sm:$0xff] %v405
  %561 = vst [vmem:[#allocation3 + $0xf8] sm:$0xff] %v407
  %562 = vst [vmem:[#allocation3 + $0x100] sm:$0xff] %v508
  %563 = vst [vmem:[#allocation3 + $0x108] sm:$0xff] %v409
  %564 = vst [vmem:[#allocation3 + $0x110] sm:$0xff] %v411
  %565 = vst [vmem:[#allocation3 + $0x118] sm:$0xff] %v511
  %566 = vst [vmem:[#allocation3 + $0x120] sm:$0xff] %v415
  %567 = vst [vmem:[#allocation3 + $0x128] sm:$0xff] %v417
  %568 = vst [vmem:[#allocation3 + $0x130] sm:$0xff] %v516
  %569 = vst [vmem:[#allocation3 + $0x138] sm:$0xff] %v419
  %570 = vst [vmem:[#allocation3 + $0x140] sm:$0xff] %v421
  %571 = vst [vmem:[#allocation3 + $0x148] sm:$0xff] %v519
  %572 = vst [vmem:[#allocation3 + $0x150] sm:$0xff] %v425
  %573 = vst [vmem:[#allocation3 + $0x158] sm:$0xff] %v427
  %574 = vst [vmem:[#allocation3 + $0x160] sm:$0xff] %v524
  %575 = vst [vmem:[#allocation3 + $0x168] sm:$0xff] %v429
  %576 = vst [vmem:[#allocation3 + $0x170] sm:$0xff] %v431
  %577 = vst [vmem:[#allocation3 + $0x178] sm:$0xff] %v527
  %s578 = smul.u32 0, 3
  %s579 = smul.addr %s578, 8
  %s580 = scalar_lea.vmem [#allocation3], %s579
  %v581 = vld [vmem:[%s580] sm:$0xff]
  %v582 = vld [vmem:[%s580 + $0x8] sm:$0xff]
  %v583 = vld [vmem:[%s580 + $0x10] sm:$0xff]
  %v584 = vld [vmem:[%s580 + $0x18] sm:$0xff]
  %v585 = vld [vmem:[%s580 + $0x20] sm:$0xff]
  %v586 = vld [vmem:[%s580 + $0x28] sm:$0xff]
  %v587 = vpack.c.bf16 %v111, %v110
  %v620 = vunpack.c.l.b16 %v70
  %v621 = vunpack.c.h.b16 %v70
  %v622 = vunpack.c.l.b16 %v71
  %v623 = vunpack.c.l.b16 %v72
  %v624 = vunpack.c.h.b16 %v72
  %v625 = vunpack.c.l.b16 %v73
  %v626 = vunpack.c.l.b16 %v74
  %v627 = vunpack.c.h.b16 %v74
  %v628 = vunpack.c.l.b16 %v75
  %v629 = vunpack.c.l.b16 %v76
  %v630 = vunpack.c.h.b16 %v76
  %v631 = vunpack.c.l.b16 %v77
  %v632 = vunpack.c.l.b16 %v78
  %v633 = vunpack.c.h.b16 %v78
  %v634 = vunpack.c.l.b16 %v79
  %v635 = vunpack.c.l.b16 %v80
  %v636 = vunpack.c.h.b16 %v80
  %v637 = vunpack.c.l.b16 %v81
  %v638 = vunpack.c.l.b16 %v82
  %v639 = vunpack.c.h.b16 %v82
  %v640 = vunpack.c.l.b16 %v83
  %v641 = vunpack.c.l.b16 %v84
  %v642 = vunpack.c.h.b16 %v84
  %v643 = vunpack.c.l.b16 %v85
  %v644 = vunpack.c.l.b16 %v86
  %v645 = vunpack.c.h.b16 %v86
  %v646 = vunpack.c.l.b16 %v87
  %v647 = vunpack.c.l.b16 %v88
  %v648 = vunpack.c.h.b16 %v88
  %v649 = vunpack.c.l.b16 %v89
  %v650 = vunpack.c.l.b16 %v90
  %v651 = vunpack.c.h.b16 %v90
  %v652 = vunpack.c.l.b16 %v91
  %v653 = vunpack.c.l.b16 %v92
  %v654 = vunpack.c.h.b16 %v92
  %v655 = vunpack.c.l.b16 %v93
  %v656 = vunpack.c.l.b16 %v94
  %v657 = vunpack.c.h.b16 %v94
  %v658 = vunpack.c.l.b16 %v95
  %v659 = vunpack.c.l.b16 %v96
  %v660 = vunpack.c.h.b16 %v96
  %v661 = vunpack.c.l.b16 %v97
  %v662 = vunpack.c.l.b16 %v98
  %v663 = vunpack.c.h.b16 %v98
  %v664 = vunpack.c.l.b16 %v99
  %v665 = vunpack.c.l.b16 %v100
  %v666 = vunpack.c.h.b16 %v100
  %v667 = vunpack.c.l.b16 %v101
  %v668 = vpack.c.b16 %v623, %v620
  %v669 = vpack.c.b16 %v624, %v621
  %v670 = vpack.c.b16 %v625, %v622
  %v671 = vpack.c.b16 %v629, %v626
  %v672 = vpack.c.b16 %v630, %v627
  %v673 = vpack.c.b16 %v631, %v628
  %v674 = vpack.c.b16 %v635, %v632
  %v675 = vpack.c.b16 %v636, %v633
  %v676 = vpack.c.b16 %v637, %v634
  %v677 = vpack.c.b16 %v641, %v638
  %v678 = vpack.c.b16 %v642, %v639
  %v679 = vpack.c.b16 %v643, %v640
  %v680 = vpack.c.b16 %v647, %v644
  %v681 = vpack.c.b16 %v648, %v645
  %v682 = vpack.c.b16 %v649, %v646
  %v683 = vpack.c.b16 %v653, %v650
  %v684 = vpack.c.b16 %v654, %v651
  %v685 = vpack.c.b16 %v655, %v652
  %v686 = vpack.c.b16 %v659, %v656
  %v687 = vpack.c.b16 %v660, %v657
  %v688 = vpack.c.b16 %v661, %v658
  %v689 = vpack.c.b16 %v665, %v662
  %v690 = vpack.c.b16 %v666, %v663
  %v691 = vpack.c.b16 %v667, %v664
  %716 = vmatprep.subr.bf16.mxu0 %v669
  %717 = vmatpush1.bf16.msra.mxu0 %v668
  %718 = vmatprep.subr.bf16.mxu0 %v672
  %719 = vmatpush1.bf16.msra.mxu0 %v671
  %720 = vmatprep.subr.bf16.mxu0 %v675
  %721 = vmatpush1.bf16.msra.mxu0 %v674
  %722 = vmatprep.subr.bf16.mxu0 %v678
  %723 = vmatpush1.bf16.msra.mxu0 %v677
  %724 = vmatprep.subr.bf16.mxu0 %v681
  %725 = vmatpush1.bf16.msra.mxu0 %v680
  %726 = vmatprep.subr.bf16.mxu0 %v684
  %727 = vmatpush1.bf16.msra.mxu0 %v683
  %728 = vmatprep.subr.bf16.mxu0 %v687
  %729 = vmatpush1.bf16.msra.mxu0 %v686
  %730 = vmatprep.subr.bf16.mxu0 %v690
  %731 = vmatpush1.bf16.msra.mxu0 %v689
  %732 = vmatprep.subr.bf16.mxu0 0
  %733 = vmatpush1.bf16.msra.mxu0 0
  %734 = vmatprep.subr.bf16.mxu0 0
  %735 = vmatpush1.bf16.msra.mxu0 0
  %736 = vmatprep.subr.bf16.mxu0 0
  %737 = vmatpush1.bf16.msra.mxu0 0
  %738 = vmatprep.subr.bf16.mxu0 0
  %739 = vmatpush1.bf16.msra.mxu0 0
  %740 = vmatprep.subr.bf16.mxu0 0
  %741 = vmatpush1.bf16.msra.mxu0 0
  %742 = vmatprep.subr.bf16.mxu0 0
  %743 = vmatpush1.bf16.msra.mxu0 0
  %744 = vmatprep.subr.bf16.mxu0 0
  %745 = vmatpush1.bf16.msra.mxu0 0
  %746 = vmatprep.subr.bf16.mxu0 0
  %747 = vmatpush1.bf16.msra.mxu0 0
  %748 = vmatprep.mubr.bf16.mxu0 0
  %749 = vmatmul.mubr.bf16.gmra.mrb[0].mxu0 %v587
  %v750 = vpop.f32.mrb[0].mxu0
  %v751 = vadd.f32 0.0, %v750
  %v752 = vpop.f32.mrb[0].mxu0
  %v753 = vadd.f32 0.0, %v752
  %v754 = vpop.f32.mrb[0].mxu0
  %v755 = vadd.f32 0.0, %v754
  %v756 = vpop.f32.mrb[0].mxu0
  %v757 = vadd.f32 0.0, %v756
  %758 = vdwg.mxu0
  %759 = vmatprep.subr.bf16.mxu0 0
  %760 = vmatpush1.bf16.msra.mxu0 %v670
  %761 = vmatprep.subr.bf16.mxu0 0
  %762 = vmatpush1.bf16.msra.mxu0 %v673
  %763 = vmatprep.subr.bf16.mxu0 0
  %764 = vmatpush1.bf16.msra.mxu0 %v676
  %765 = vmatprep.subr.bf16.mxu0 0
  %766 = vmatpush1.bf16.msra.mxu0 %v679
  %767 = vmatprep.subr.bf16.mxu0 0
  %768 = vmatpush1.bf16.msra.mxu0 %v682
  %769 = vmatprep.subr.bf16.mxu0 0
  %770 = vmatpush1.bf16.msra.mxu0 %v685
  %771 = vmatprep.subr.bf16.mxu0 0
  %772 = vmatpush1.bf16.msra.mxu0 %v688
  %773 = vmatprep.subr.bf16.mxu0 0
  %774 = vmatpush1.bf16.msra.mxu0 %v691
  %775 = vmatprep.subr.bf16.mxu0 0
  %776 = vmatpush1.bf16.msra.mxu0 0
  %777 = vmatprep.subr.bf16.mxu0 0
  %778 = vmatpush1.bf16.msra.mxu0 0
  %779 = vmatprep.subr.bf16.mxu0 0
  %780 = vmatpush1.bf16.msra.mxu0 0
  %781 = vmatprep.subr.bf16.mxu0 0
  %782 = vmatpush1.bf16.msra.mxu0 0
  %783 = vmatprep.subr.bf16.mxu0 0
  %784 = vmatpush1.bf16.msra.mxu0 0
  %785 = vmatprep.subr.bf16.mxu0 0
  %786 = vmatpush1.bf16.msra.mxu0 0
  %787 = vmatprep.subr.bf16.mxu0 0
  %788 = vmatpush1.bf16.msra.mxu0 0
  %789 = vmatprep.subr.bf16.mxu0 0
  %790 = vmatpush1.bf16.msra.mxu0 0
  %791 = vmatprep.mubr.bf16.mxu0 0
  %792 = vmatmul.mubr.bf16.gmra.mrb[0].mxu0 %v587
  %v793 = vpop.f32.mrb[0].mxu0
  %v794 = vadd.f32 0.0, %v793
  %v795 = vpop.f32.mrb[0].mxu0
  %v796 = vpop.f32.mrb[0].mxu0
  %v797 = vadd.f32 0.0, %v796
  %v798 = vpop.f32.mrb[0].mxu0
  %799 = vdwg.mxu0
  %v800 = vadd.f32 %v794, %v108
  %v801 = vadd.f32 %v797, %v108
  %v802 = vadd.f32 %v581, %v751
  %v803 = vadd.f32 %v584, %v755
  %v804 = vxor.u32 %v802, 2147483648
  %v805 = vxor.u32 %v803, 2147483648
  %v806 = vmul.f32 %v804, 1.442695
  %v807 = vpow.pop %v806
  %v808 = vmul.f32 %v805, 1.442695
  %v809 = vpow.pop %v808
  %v810 = vadd.f32 %v807, 1.0
  %v811 = vadd.f32 %v809, 1.0
  %v812 = vrcp.pop %v810
  %v813 = vmul.f32 1.0, %v812
  %v814 = vrcp.pop %v811
  %v815 = vmul.f32 1.0, %v814
  %v816 = vadd.f32 %v582, %v753
  %v817 = vadd.f32 %v585, %v757
  %v818 = vxor.u32 %v816, 2147483648
  %v819 = vxor.u32 %v817, 2147483648
  %v820 = vmul.f32 %v818, 1.442695
  %v821 = vpow.pop %v820
  %v822 = vmul.f32 %v819, 1.442695
  %v823 = vpow.pop %v822
  %v824 = vadd.f32 %v821, 1.0
  %v825 = vadd.f32 %v823, 1.0
  %v826 = vrcp.pop %v824
  %v827 = vmul.f32 1.0, %v826
  %v828 = vrcp.pop %v825
  %v829 = vmul.f32 1.0, %v828
  %v830 = vmul.f32 %v813, %v800
  %v831 = vmul.f32 %v815, %v801
  %v832 = vadd.f32 %v583, %v830
  %v833 = vadd.f32 %v586, %v831
  %v834 = vtanh.pop %v832
  %v835 = vtanh.pop %v833
  %v836 = vsub.f32 1.0, %v827
  %v837 = vsub.f32 1.0, %v829
  %v838 = vmul.f32 %v836, %v834
  %v839 = vmul.f32 %v837, %v835
  %v840 = vmul.f32 %v827, %v110
  %v841 = vmul.f32 %v829, %v111
  %v842 = vadd.f32 %v838, %v840
  %v843 = vadd.f32 %v839, %v841
  %v844 = vpack.c.bf16 %v843, %v842
  %845 = vst [vmem:[#allocation2] sm:$0xff] %v844
  %s846 = smul.u32 2, 3
  %s847 = smul.addr %s846, 8
  %s848 = scalar_lea.vmem [#allocation3], %s847
  %v849 = vld [vmem:[%s848] sm:$0xff]
  %v850 = vld [vmem:[%s848 + $0x8] sm:$0xff]
  %v851 = vld [vmem:[%s848 + $0x10] sm:$0xff]
  %v852 = vld [vmem:[%s848 + $0x18] sm:$0xff]
  %v853 = vld [vmem:[%s848 + $0x20] sm:$0xff]
  %v854 = vld [vmem:[%s848 + $0x28] sm:$0xff]
  %855 = vmatprep.subr.bf16.mxu0 %v669
  %856 = vmatpush1.bf16.msra.mxu0 %v668
  %857 = vmatprep.subr.bf16.mxu0 %v672
  %858 = vmatpush1.bf16.msra.mxu0 %v671
  %859 = vmatprep.subr.bf16.mxu0 %v675
  %860 = vmatpush1.bf16.msra.mxu0 %v674
  %861 = vmatprep.subr.bf16.mxu0 %v678
  %862 = vmatpush1.bf16.msra.mxu0 %v677
  %863 = vmatprep.subr.bf16.mxu0 %v681
  %864 = vmatpush1.bf16.msra.mxu0 %v680
  %865 = vmatprep.subr.bf16.mxu0 %v684
  %866 = vmatpush1.bf16.msra.mxu0 %v683
  %867 = vmatprep.subr.bf16.mxu0 %v687
  %868 = vmatpush1.bf16.msra.mxu0 %v686
  %869 = vmatprep.subr.bf16.mxu0 %v690
  %870 = vmatpush1.bf16.msra.mxu0 %v689
  %871 = vmatprep.subr.bf16.mxu0 0
  %872 = vmatpush1.bf16.msra.mxu0 0
  %873 = vmatprep.subr.bf16.mxu0 0
  %874 = vmatpush1.bf16.msra.mxu0 0
  %875 = vmatprep.subr.bf16.mxu0 0
  %876 = vmatpush1.bf16.msra.mxu0 0
  %877 = vmatprep.subr.bf16.mxu0 0
  %878 = vmatpush1.bf16.msra.mxu0 0
  %879 = vmatprep.subr.bf16.mxu0 0
  %880 = vmatpush1.bf16.msra.mxu0 0
  %881 = vmatprep.subr.bf16.mxu0 0
  %882 = vmatpush1.bf16.msra.mxu0 0
  %883 = vmatprep.subr.bf16.mxu0 0
  %884 = vmatpush1.bf16.msra.mxu0 0
  %885 = vmatprep.subr.bf16.mxu0 0
  %886 = vmatpush1.bf16.msra.mxu0 0
  %887 = vmatprep.mubr.bf16.mxu0 0
  %888 = vmatmul.mubr.bf16.gmra.mrb[0].mxu0 %v844
  %v889 = vpop.f32.mrb[0].mxu0
  %v890 = vadd.f32 0.0, %v889
  %v891 = vpop.f32.mrb[0].mxu0
  %v892 = vadd.f32 0.0, %v891
  %v893 = vpop.f32.mrb[0].mxu0
  %v894 = vadd.f32 0.0, %v893
  %v895 = vpop.f32.mrb[0].mxu0
  %v896 = vadd.f32 0.0, %v895
  %897 = vdwg.mxu0
  %898 = vmatprep.subr.bf16.mxu0 0
  %899 = vmatpush1.bf16.msra.mxu0 %v670
  %900 = vmatprep.subr.bf16.mxu0 0
  %901 = vmatpush1.bf16.msra.mxu0 %v673
  %902 = vmatprep.subr.bf16.mxu0 0
  %903 = vmatpush1.bf16.msra.mxu0 %v676
  %904 = vmatprep.subr.bf16.mxu0 0
  %905 = vmatpush1.bf16.msra.mxu0 %v679
  %906 = vmatprep.subr.bf16.mxu0 0
  %907 = vmatpush1.bf16.msra.mxu0 %v682
  %908 = vmatprep.subr.bf16.mxu0 0
  %909 = vmatpush1.bf16.msra.mxu0 %v685
  %910 = vmatprep.subr.bf16.mxu0 0
  %911 = vmatpush1.bf16.msra.mxu0 %v688
  %912 = vmatprep.subr.bf16.mxu0 0
  %913 = vmatpush1.bf16.msra.mxu0 %v691
  %914 = vmatprep.subr.bf16.mxu0 0
  %915 = vmatpush1.bf16.msra.mxu0 0
  %916 = vmatprep.subr.bf16.mxu0 0
  %917 = vmatpush1.bf16.msra.mxu0 0
  %918 = vmatprep.subr.bf16.mxu0 0
  %919 = vmatpush1.bf16.msra.mxu0 0
  %920 = vmatprep.subr.bf16.mxu0 0
  %921 = vmatpush1.bf16.msra.mxu0 0
  %922 = vmatprep.subr.bf16.mxu0 0
  %923 = vmatpush1.bf16.msra.mxu0 0
  %924 = vmatprep.subr.bf16.mxu0 0
  %925 = vmatpush1.bf16.msra.mxu0 0
  %926 = vmatprep.subr.bf16.mxu0 0
  %927 = vmatpush1.bf16.msra.mxu0 0
  %928 = vmatprep.subr.bf16.mxu0 0
  %929 = vmatpush1.bf16.msra.mxu0 0
  %930 = vmatprep.mubr.bf16.mxu0 0
  %931 = vmatmul.mubr.bf16.gmra.mrb[0].mxu0 %v844
  %v932 = vpop.f32.mrb[0].mxu0
  %v933 = vadd.f32 0.0, %v932
  %v934 = vpop.f32.mrb[0].mxu0
  %v935 = vpop.f32.mrb[0].mxu0
  %v936 = vadd.f32 0.0, %v935
  %v937 = vpop.f32.mrb[0].mxu0
  %938 = vdwg.mxu0
  %v939 = vadd.f32 %v933, %v108
  %v940 = vadd.f32 %v936, %v108
  %v941 = vadd.f32 %v849, %v890
  %v942 = vadd.f32 %v852, %v894
  %v943 = vxor.u32 %v941, 2147483648
  %v944 = vxor.u32 %v942, 2147483648
  %v945 = vmul.f32 %v943, 1.442695
  %v946 = vpow.pop %v945
  %v947 = vmul.f32 %v944, 1.442695
  %v948 = vpow.pop %v947
  %v949 = vadd.f32 %v946, 1.0
  %v950 = vadd.f32 %v948, 1.0
  %v951 = vrcp.pop %v949
  %v952 = vmul.f32 1.0, %v951
  %v953 = vrcp.pop %v950
  %v954 = vmul.f32 1.0, %v953
  %v955 = vadd.f32 %v850, %v892
  %v956 = vadd.f32 %v853, %v896
  %v957 = vxor.u32 %v955, 2147483648
  %v958 = vxor.u32 %v956, 2147483648
  %v959 = vmul.f32 %v957, 1.442695
  %v960 = vpow.pop %v959
  %v961 = vmul.f32 %v958, 1.442695
  %v962 = vpow.pop %v961
  %v963 = vadd.f32 %v960, 1.0
  %v964 = vadd.f32 %v962, 1.0
  %v965 = vrcp.pop %v963
  %v966 = vmul.f32 1.0, %v965
  %v967 = vrcp.pop %v964
  %v968 = vmul.f32 1.0, %v967
  %v969 = vmul.f32 %v952, %v939
  %v970 = vmul.f32 %v954, %v940
  %v971 = vadd.f32 %v851, %v969
  %v972 = vadd.f32 %v854, %v970
  %v973 = vtanh.pop %v971
  %v974 = vtanh.pop %v972
  %v975 = vsub.f32 1.0, %v966
  %v976 = vsub.f32 1.0, %v968
  %v977 = vmul.f32 %v975, %v973
  %v978 = vmul.f32 %v976, %v974
  %v979 = vmul.f32 %v966, %v842
  %v980 = vmul.f32 %v968, %v843
  %v981 = vadd.f32 %v977, %v979
  %v982 = vadd.f32 %v978, %v980
  %v983 = vpack.c.bf16 %v982, %v981
  %s984 = scalar_lea.vmem [#allocation2], 8
  %985 = vst [vmem:[%s984] sm:$0xff] %v983
  %s986 = smul.u32 4, 3
  %s987 = smul.addr %s986, 8
  %s988 = scalar_lea.vmem [#allocation3], %s987
  %v989 = vld [vmem:[%s988] sm:$0xff]
  %v990 = vld [vmem:[%s988 + $0x8] sm:$0xff]
  %v991 = vld [vmem:[%s988 + $0x10] sm:$0xff]
  %v992 = vld [vmem:[%s988 + $0x18] sm:$0xff]
  %v993 = vld [vmem:[%s988 + $0x20] sm:$0xff]
  %v994 = vld [vmem:[%s988 + $0x28] sm:$0xff]
  %995 = vmatprep.subr.bf16.mxu0 %v669
  %996 = vmatpush1.bf16.msra.mxu0 %v668
  %997 = vmatprep.subr.bf16.mxu0 %v672
  %998 = vmatpush1.bf16.msra.mxu0 %v671
  %999 = vmatprep.subr.bf16.mxu0 %v675
  %1000 = vmatpush1.bf16.msra.mxu0 %v674
  %1001 = vmatprep.subr.bf16.mxu0 %v678
  %1002 = vmatpush1.bf16.msra.mxu0 %v677
  %1003 = vmatprep.subr.bf16.mxu0 %v681
  %1004 = vmatpush1.bf16.msra.mxu0 %v680
  %1005 = vmatprep.subr.bf16.mxu0 %v684
  %1006 = vmatpush1.bf16.msra.mxu0 %v683
  %1007 = vmatprep.subr.bf16.mxu0 %v687
  %1008 = vmatpush1.bf16.msra.mxu0 %v686
  %1009 = vmatprep.subr.bf16.mxu0 %v690
  %1010 = vmatpush1.bf16.msra.mxu0 %v689
  %1011 = vmatprep.subr.bf16.mxu0 0
  %1012 = vmatpush1.bf16.msra.mxu0 0
  %1013 = vmatprep.subr.bf16.mxu0 0
  %1014 = vmatpush1.bf16.msra.mxu0 0
  %1015 = vmatprep.subr.bf16.mxu0 0
  %1016 = vmatpush1.bf16.msra.mxu0 0
  %1017 = vmatprep.subr.bf16.mxu0 0
  %1018 = vmatpush1.bf16.msra.mxu0 0
  %1019 = vmatprep.subr.bf16.mxu0 0
  %1020 = vmatpush1.bf16.msra.mxu0 0
  %1021 = vmatprep.subr.bf16.mxu0 0
  %1022 = vmatpush1.bf16.msra.mxu0 0
  %1023 = vmatprep.subr.bf16.mxu0 0
  %1024 = vmatpush1.bf16.msra.mxu0 0
  %1025 = vmatprep.subr.bf16.mxu0 0
  %1026 = vmatpush1.bf16.msra.mxu0 0
  %1027 = vmatprep.mubr.bf16.mxu0 0
  %1028 = vmatmul.mubr.bf16.gmra.mrb[0].mxu0 %v983
  %v1029 = vpop.f32.mrb[0].mxu0
  %v1030 = vadd.f32 0.0, %v1029
  %v1031 = vpop.f32.mrb[0].mxu0
  %v1032 = vadd.f32 0.0, %v1031
  %v1033 = vpop.f32.mrb[0].mxu0
  %v1034 = vadd.f32 0.0, %v1033
  %v1035 = vpop.f32.mrb[0].mxu0
  %v1036 = vadd.f32 0.0, %v1035
  %1037 = vdwg.mxu0
  %1038 = vmatprep.subr.bf16.mxu0 0
  %1039 = vmatpush1.bf16.msra.mxu0 %v670
  %1040 = vmatprep.subr.bf16.mxu0 0
  %1041 = vmatpush1.bf16.msra.mxu0 %v673
  %1042 = vmatprep.subr.bf16.mxu0 0
  %1043 = vmatpush1.bf16.msra.mxu0 %v676
  %1044 = vmatprep.subr.bf16.mxu0 0
  %1045 = vmatpush1.bf16.msra.mxu0 %v679
  %1046 = vmatprep.subr.bf16.mxu0 0
  %1047 = vmatpush1.bf16.msra.mxu0 %v682
  %1048 = vmatprep.subr.bf16.mxu0 0
  %1049 = vmatpush1.bf16.msra.mxu0 %v685
  %1050 = vmatprep.subr.bf16.mxu0 0
  %1051 = vmatpush1.bf16.msra.mxu0 %v688
  %1052 = vmatprep.subr.bf16.mxu0 0
  %1053 = vmatpush1.bf16.msra.mxu0 %v691
  %1054 = vmatprep.subr.bf16.mxu0 0
  %1055 = vmatpush1.bf16.msra.mxu0 0
  %1056 = vmatprep.subr.bf16.mxu0 0
  %1057 = vmatpush1.bf16.msra.mxu0 0
  %1058 = vmatprep.subr.bf16.mxu0 0
  %1059 = vmatpush1.bf16.msra.mxu0 0
  %1060 = vmatprep.subr.bf16.mxu0 0
  %1061 = vmatpush1.bf16.msra.mxu0 0
  %1062 = vmatprep.subr.bf16.mxu0 0
  %1063 = vmatpush1.bf16.msra.mxu0 0
  %1064 = vmatprep.subr.bf16.mxu0 0
  %1065 = vmatpush1.bf16.msra.mxu0 0
  %1066 = vmatprep.subr.bf16.mxu0 0
  %1067 = vmatpush1.bf16.msra.mxu0 0
  %1068 = vmatprep.subr.bf16.mxu0 0
  %1069 = vmatpush1.bf16.msra.mxu0 0
  %1070 = vmatprep.mubr.bf16.mxu0 0
  %1071 = vmatmul.mubr.bf16.gmra.mrb[0].mxu0 %v983
  %v1072 = vpop.f32.mrb[0].mxu0
  %v1073 = vadd.f32 0.0, %v1072
  %v1074 = vpop.f32.mrb[0].mxu0
  %v1075 = vpop.f32.mrb[0].mxu0
  %v1076 = vadd.f32 0.0, %v1075
  %v1077 = vpop.f32.mrb[0].mxu0
  %1078 = vdwg.mxu0
  %v1079 = vadd.f32 %v1073, %v108
  %v1080 = vadd.f32 %v1076, %v108
  %v1081 = vadd.f32 %v989, %v1030
  %v1082 = vadd.f32 %v992, %v1034
  %v1083 = vxor.u32 %v1081, 2147483648
  %v1084 = vxor.u32 %v1082, 2147483648
  %v1085 = vmul.f32 %v1083, 1.442695
  %v1086 = vpow.pop %v1085
  %v1087 = vmul.f32 %v1084, 1.442695
  %v1088 = vpow.pop %v1087
  %v1089 = vadd.f32 %v1086, 1.0
  %v1090 = vadd.f32 %v1088, 1.0
  %v1091 = vrcp.pop %v1089
  %v1092 = vmul.f32 1.0, %v1091
  %v1093 = vrcp.pop %v1090
  %v1094 = vmul.f32 1.0, %v1093
  %v1095 = vadd.f32 %v990, %v1032
  %v1096 = vadd.f32 %v993, %v1036
  %v1097 = vxor.u32 %v1095, 2147483648
  %v1098 = vxor.u32 %v1096, 2147483648
  %v1099 = vmul.f32 %v1097, 1.442695
  %v1100 = vpow.pop %v1099
  %v1101 = vmul.f32 %v1098, 1.442695
  %v1102 = vpow.pop %v1101
  %v1103 = vadd.f32 %v1100, 1.0
  %v1104 = vadd.f32 %v1102, 1.0
  %v1105 = vrcp.pop %v1103
  %v1106 = vmul.f32 1.0, %v1105
  %v1107 = vrcp.pop %v1104
  %v1108 = vmul.f32 1.0, %v1107
  %v1109 = vmul.f32 %v1092, %v1079
  %v1110 = vmul.f32 %v1094, %v1080
  %v1111 = vadd.f32 %v991, %v1109
  %v1112 = vadd.f32 %v994, %v1110
  %v1113 = vtanh.pop %v1111
  %v1114 = vtanh.pop %v1112
  %v1115 = vsub.f32 1.0, %v1106
  %v1116 = vsub.f32 1.0, %v1108
  %v1117 = vmul.f32 %v1115, %v1113
  %v1118 = vmul.f32 %v1116, %v1114
  %v1119 = vmul.f32 %v1106, %v981
  %v1120 = vmul.f32 %v1108, %v982
  %v1121 = vadd.f32 %v1117, %v1119
  %v1122 = vadd.f32 %v1118, %v1120
  %v1123 = vpack.c.bf16 %v1122, %v1121
  %s1124 = scalar_lea.vmem [#allocation2], 16
  %1125 = vst [vmem:[%s1124] sm:$0xff] %v1123
  %s1126 = smul.u32 6, 3
  %s1127 = smul.addr %s1126, 8
  %s1128 = scalar_lea.vmem [#allocation3], %s1127
  %v1129 = vld [vmem:[%s1128] sm:$0xff]
  %v1130 = vld [vmem:[%s1128 + $0x8] sm:$0xff]
  %v1131 = vld [vmem:[%s1128 + $0x10] sm:$0xff]
  %v1132 = vld [vmem:[%s1128 + $0x18] sm:$0xff]
  %v1133 = vld [vmem:[%s1128 + $0x20] sm:$0xff]
  %v1134 = vld [vmem:[%s1128 + $0x28] sm:$0xff]
  %1135 = vmatprep.subr.bf16.mxu0 %v669
  %1136 = vmatpush1.bf16.msra.mxu0 %v668
  %1137 = vmatprep.subr.bf16.mxu0 %v672
  %1138 = vmatpush1.bf16.msra.mxu0 %v671
  %1139 = vmatprep.subr.bf16.mxu0 %v675
  %1140 = vmatpush1.bf16.msra.mxu0 %v674
  %1141 = vmatprep.subr.bf16.mxu0 %v678
  %1142 = vmatpush1.bf16.msra.mxu0 %v677
  %1143 = vmatprep.subr.bf16.mxu0 %v681
  %1144 = vmatpush1.bf16.msra.mxu0 %v680
  %1145 = vmatprep.subr.bf16.mxu0 %v684
  %1146 = vmatpush1.bf16.msra.mxu0 %v683
  %1147 = vmatprep.subr.bf16.mxu0 %v687
  %1148 = vmatpush1.bf16.msra.mxu0 %v686
  %1149 = vmatprep.subr.bf16.mxu0 %v690
  %1150 = vmatpush1.bf16.msra.mxu0 %v689
  %1151 = vmatprep.subr.bf16.mxu0 0
  %1152 = vmatpush1.bf16.msra.mxu0 0
  %1153 = vmatprep.subr.bf16.mxu0 0
  %1154 = vmatpush1.bf16.msra.mxu0 0
  %1155 = vmatprep.subr.bf16.mxu0 0
  %1156 = vmatpush1.bf16.msra.mxu0 0
  %1157 = vmatprep.subr.bf16.mxu0 0
  %1158 = vmatpush1.bf16.msra.mxu0 0
  %1159 = vmatprep.subr.bf16.mxu0 0
  %1160 = vmatpush1.bf16.msra.mxu0 0
  %1161 = vmatprep.subr.bf16.mxu0 0
  %1162 = vmatpush1.bf16.msra.mxu0 0
  %1163 = vmatprep.subr.bf16.mxu0 0
  %1164 = vmatpush1.bf16.msra.mxu0 0
  %1165 = vmatprep.subr.bf16.mxu0 0
  %1166 = vmatpush1.bf16.msra.mxu0 0
  %1167 = vmatprep.mubr.bf16.mxu0 0
  %1168 = vmatmul.mubr.bf16.gmra.mrb[0].mxu0 %v1123
  %v1169 = vpop.f32.mrb[0].mxu0
  %v1170 = vadd.f32 0.0, %v1169
  %v1171 = vpop.f32.mrb[0].mxu0
  %v1172 = vadd.f32 0.0, %v1171
  %v1173 = vpop.f32.mrb[0].mxu0
  %v1174 = vadd.f32 0.0, %v1173
  %v1175 = vpop.f32.mrb[0].mxu0
  %v1176 = vadd.f32 0.0, %v1175
  %1177 = vdwg.mxu0
  %1178 = vmatprep.subr.bf16.mxu0 0
  %1179 = vmatpush1.bf16.msra.mxu0 %v670
  %1180 = vmatprep.subr.bf16.mxu0 0
  %1181 = vmatpush1.bf16.msra.mxu0 %v673
  %1182 = vmatprep.subr.bf16.mxu0 0
  %1183 = vmatpush1.bf16.msra.mxu0 %v676
  %1184 = vmatprep.subr.bf16.mxu0 0
  %1185 = vmatpush1.bf16.msra.mxu0 %v679
  %1186 = vmatprep.subr.bf16.mxu0 0
  %1187 = vmatpush1.bf16.msra.mxu0 %v682
  %1188 = vmatprep.subr.bf16.mxu0 0
  %1189 = vmatpush1.bf16.msra.mxu0 %v685
  %1190 = vmatprep.subr.bf16.mxu0 0
  %1191 = vmatpush1.bf16.msra.mxu0 %v688
  %1192 = vmatprep.subr.bf16.mxu0 0
  %1193 = vmatpush1.bf16.msra.mxu0 %v691
  %1194 = vmatprep.subr.bf16.mxu0 0
  %1195 = vmatpush1.bf16.msra.mxu0 0
  %1196 = vmatprep.subr.bf16.mxu0 0
  %1197 = vmatpush1.bf16.msra.mxu0 0
  %1198 = vmatprep.subr.bf16.mxu0 0
  %1199 = vmatpush1.bf16.msra.mxu0 0
  %1200 = vmatprep.subr.bf16.mxu0 0
  %1201 = vmatpush1.bf16.msra.mxu0 0
  %1202 = vmatprep.subr.bf16.mxu0 0
  %1203 = vmatpush1.bf16.msra.mxu0 0
  %1204 = vmatprep.subr.bf16.mxu0 0
  %1205 = vmatpush1.bf16.msra.mxu0 0
  %1206 = vmatprep.subr.bf16.mxu0 0
  %1207 = vmatpush1.bf16.msra.mxu0 0
  %1208 = vmatprep.subr.bf16.mxu0 0
  %1209 = vmatpush1.bf16.msra.mxu0 0
  %1210 = vmatprep.mubr.bf16.mxu0 0
  %1211 = vmatmul.mubr.bf16.gmra.mrb[0].mxu0 %v1123
  %v1212 = vpop.f32.mrb[0].mxu0
  %v1213 = vadd.f32 0.0, %v1212
  %v1214 = vpop.f32.mrb[0].mxu0
  %v1215 = vpop.f32.mrb[0].mxu0
  %v1216 = vadd.f32 0.0, %v1215
  %v1217 = vpop.f32.mrb[0].mxu0
  %1218 = vdwg.mxu0
  %v1219 = vadd.f32 %v1213, %v108
  %v1220 = vadd.f32 %v1216, %v108
  %v1221 = vadd.f32 %v1129, %v1170
  %v1222 = vadd.f32 %v1132, %v1174
  %v1223 = vxor.u32 %v1221, 2147483648
  %v1224 = vxor.u32 %v1222, 2147483648
  %v1225 = vmul.f32 %v1223, 1.442695
  %v1226 = vpow.pop %v1225
  %v1227 = vmul.f32 %v1224, 1.442695
  %v1228 = vpow.pop %v1227
  %v1229 = vadd.f32 %v1226, 1.0
  %v1230 = vadd.f32 %v1228, 1.0
  %v1231 = vrcp.pop %v1229
  %v1232 = vmul.f32 1.0, %v1231
  %v1233 = vrcp.pop %v1230
  %v1234 = vmul.f32 1.0, %v1233
  %v1235 = vadd.f32 %v1130, %v1172
  %v1236 = vadd.f32 %v1133, %v1176
  %v1237 = vxor.u32 %v1235, 2147483648
  %v1238 = vxor.u32 %v1236, 2147483648
  %v1239 = vmul.f32 %v1237, 1.442695
  %v1240 = vpow.pop %v1239
  %v1241 = vmul.f32 %v1238, 1.442695
  %v1242 = vpow.pop %v1241
  %v1243 = vadd.f32 %v1240, 1.0
  %v1244 = vadd.f32 %v1242, 1.0
  %v1245 = vrcp.pop %v1243
  %v1246 = vmul.f32 1.0, %v1245
  %v1247 = vrcp.pop %v1244
  %v1248 = vmul.f32 1.0, %v1247
  %v1249 = vmul.f32 %v1232, %v1219
  %v1250 = vmul.f32 %v1234, %v1220
  %v1251 = vadd.f32 %v1131, %v1249
  %v1252 = vadd.f32 %v1134, %v1250
  %v1253 = vtanh.pop %v1251
  %v1254 = vtanh.pop %v1252
  %v1255 = vsub.f32 1.0, %v1246
  %v1256 = vsub.f32 1.0, %v1248
  %v1257 = vmul.f32 %v1255, %v1253
  %v1258 = vmul.f32 %v1256, %v1254
  %v1259 = vmul.f32 %v1246, %v1121
  %v1260 = vmul.f32 %v1248, %v1122
  %v1261 = vadd.f32 %v1257, %v1259
  %v1262 = vadd.f32 %v1258, %v1260
  %v1263 = vpack.c.bf16 %v1262, %v1261
  %s1264 = scalar_lea.vmem [#allocation2], 24
  %1265 = vst [vmem:[%s1264] sm:$0xff] %v1263
  %s1266 = smul.u32 8, 3
  %s1267 = smul.addr %s1266, 8
  %s1268 = scalar_lea.vmem [#allocation3], %s1267
  %v1269 = vld [vmem:[%s1268] sm:$0xff]
  %v1270 = vld [vmem:[%s1268 + $0x8] sm:$0xff]
  %v1271 = vld [vmem:[%s1268 + $0x10] sm:$0xff]
  %v1272 = vld [vmem:[%s1268 + $0x18] sm:$0xff]
  %v1273 = vld [vmem:[%s1268 + $0x20] sm:$0xff]
  %v1274 = vld [vmem:[%s1268 + $0x28] sm:$0xff]
  %1275 = vmatprep.subr.bf16.mxu0 %v669
  %1276 = vmatpush1.bf16.msra.mxu0 %v668
  %1277 = vmatprep.subr.bf16.mxu0 %v672
  %1278 = vmatpush1.bf16.msra.mxu0 %v671
  %1279 = vmatprep.subr.bf16.mxu0 %v675
  %1280 = vmatpush1.bf16.msra.mxu0 %v674
  %1281 = vmatprep.subr.bf16.mxu0 %v678
  %1282 = vmatpush1.bf16.msra.mxu0 %v677
  %1283 = vmatprep.subr.bf16.mxu0 %v681
  %1284 = vmatpush1.bf16.msra.mxu0 %v680
  %1285 = vmatprep.subr.bf16.mxu0 %v684
  %1286 = vmatpush1.bf16.msra.mxu0 %v683
  %1287 = vmatprep.subr.bf16.mxu0 %v687
  %1288 = vmatpush1.bf16.msra.mxu0 %v686
  %1289 = vmatprep.subr.bf16.mxu0 %v690
  %1290 = vmatpush1.bf16.msra.mxu0 %v689
  %1291 = vmatprep.subr.bf16.mxu0 0
  %1292 = vmatpush1.bf16.msra.mxu0 0
  %1293 = vmatprep.subr.bf16.mxu0 0
  %1294 = vmatpush1.bf16.msra.mxu0 0
  %1295 = vmatprep.subr.bf16.mxu0 0
  %1296 = vmatpush1.bf16.msra.mxu0 0
  %1297 = vmatprep.subr.bf16.mxu0 0
  %1298 = vmatpush1.bf16.msra.mxu0 0
  %1299 = vmatprep.subr.bf16.mxu0 0
  %1300 = vmatpush1.bf16.msra.mxu0 0
  %1301 = vmatprep.subr.bf16.mxu0 0
  %1302 = vmatpush1.bf16.msra.mxu0 0
  %1303 = vmatprep.subr.bf16.mxu0 0
  %1304 = vmatpush1.bf16.msra.mxu0 0
  %1305 = vmatprep.subr.bf16.mxu0 0
  %1306 = vmatpush1.bf16.msra.mxu0 0
  %1307 = vmatprep.mubr.bf16.mxu0 0
  %1308 = vmatmul.mubr.bf16.gmra.mrb[0].mxu0 %v1263
  %v1309 = vpop.f32.mrb[0].mxu0
  %v1310 = vadd.f32 0.0, %v1309
  %v1311 = vpop.f32.mrb[0].mxu0
  %v1312 = vadd.f32 0.0, %v1311
  %v1313 = vpop.f32.mrb[0].mxu0
  %v1314 = vadd.f32 0.0, %v1313
  %v1315 = vpop.f32.mrb[0].mxu0
  %v1316 = vadd.f32 0.0, %v1315
  %1317 = vdwg.mxu0
  %1318 = vmatprep.subr.bf16.mxu0 0
  %1319 = vmatpush1.bf16.msra.mxu0 %v670
  %1320 = vmatprep.subr.bf16.mxu0 0
  %1321 = vmatpush1.bf16.msra.mxu0 %v673
  %1322 = vmatprep.subr.bf16.mxu0 0
  %1323 = vmatpush1.bf16.msra.mxu0 %v676
  %1324 = vmatprep.subr.bf16.mxu0 0
  %1325 = vmatpush1.bf16.msra.mxu0 %v679
  %1326 = vmatprep.subr.bf16.mxu0 0
  %1327 = vmatpush1.bf16.msra.mxu0 %v682
  %1328 = vmatprep.subr.bf16.mxu0 0
  %1329 = vmatpush1.bf16.msra.mxu0 %v685
  %1330 = vmatprep.subr.bf16.mxu0 0
  %1331 = vmatpush1.bf16.msra.mxu0 %v688
  %1332 = vmatprep.subr.bf16.mxu0 0
  %1333 = vmatpush1.bf16.msra.mxu0 %v691
  %1334 = vmatprep.subr.bf16.mxu0 0
  %1335 = vmatpush1.bf16.msra.mxu0 0
  %1336 = vmatprep.subr.bf16.mxu0 0
  %1337 = vmatpush1.bf16.msra.mxu0 0
  %1338 = vmatprep.subr.bf16.mxu0 0
  %1339 = vmatpush1.bf16.msra.mxu0 0
  %1340 = vmatprep.subr.bf16.mxu0 0
  %1341 = vmatpush1.bf16.msra.mxu0 0
  %1342 = vmatprep.subr.bf16.mxu0 0
  %1343 = vmatpush1.bf16.msra.mxu0 0
  %1344 = vmatprep.subr.bf16.mxu0 0
  %1345 = vmatpush1.bf16.msra.mxu0 0
  %1346 = vmatprep.subr.bf16.mxu0 0
  %1347 = vmatpush1.bf16.msra.mxu0 0
  %1348 = vmatprep.subr.bf16.mxu0 0
  %1349 = vmatpush1.bf16.msra.mxu0 0
  %1350 = vmatprep.mubr.bf16.mxu0 0
  %1351 = vmatmul.mubr.bf16.gmra.mrb[0].mxu0 %v1263
  %v1352 = vpop.f32.mrb[0].mxu0
  %v1353 = vadd.f32 0.0, %v1352
  %v1354 = vpop.f32.mrb[0].mxu0
  %v1355 = vpop.f32.mrb[0].mxu0
  %v1356 = vadd.f32 0.0, %v1355
  %v1357 = vpop.f32.mrb[0].mxu0
  %1358 = vdwg.mxu0
  %v1359 = vadd.f32 %v1353, %v108
  %v1360 = vadd.f32 %v1356, %v108
  %v1361 = vadd.f32 %v1269, %v1310
  %v1362 = vadd.f32 %v1272, %v1314
  %v1363 = vxor.u32 %v1361, 2147483648
  %v1364 = vxor.u32 %v1362, 2147483648
  %v1365 = vmul.f32 %v1363, 1.442695
  %v1366 = vpow.pop %v1365
  %v1367 = vmul.f32 %v1364, 1.442695
  %v1368 = vpow.pop %v1367
  %v1369 = vadd.f32 %v1366, 1.0
  %v1370 = vadd.f32 %v1368, 1.0
  %v1371 = vrcp.pop %v1369
  %v1372 = vmul.f32 1.0, %v1371
  %v1373 = vrcp.pop %v1370
  %v1374 = vmul.f32 1.0, %v1373
  %v1375 = vadd.f32 %v1270, %v1312
  %v1376 = vadd.f32 %v1273, %v1316
  %v1377 = vxor.u32 %v1375, 2147483648
  %v1378 = vxor.u32 %v1376, 2147483648
  %v1379 = vmul.f32 %v1377, 1.442695
  %v1380 = vpow.pop %v1379
  %v1381 = vmul.f32 %v1378, 1.442695
  %v1382 = vpow.pop %v1381
  %v1383 = vadd.f32 %v1380, 1.0
  %v1384 = vadd.f32 %v1382, 1.0
  %v1385 = vrcp.pop %v1383
  %v1386 = vmul.f32 1.0, %v1385
  %v1387 = vrcp.pop %v1384
  %v1388 = vmul.f32 1.0, %v1387
  %v1389 = vmul.f32 %v1372, %v1359
  %v1390 = vmul.f32 %v1374, %v1360
  %v1391 = vadd.f32 %v1271, %v1389
  %v1392 = vadd.f32 %v1274, %v1390
  %v1393 = vtanh.pop %v1391
  %v1394 = vtanh.pop %v1392
  %v1395 = vsub.f32 1.0, %v1386
  %v1396 = vsub.f32 1.0, %v1388
  %v1397 = vmul.f32 %v1395, %v1393
  %v1398 = vmul.f32 %v1396, %v1394
  %v1399 = vmul.f32 %v1386, %v1261
  %v1400 = vmul.f32 %v1388, %v1262
  %v1401 = vadd.f32 %v1397, %v1399
  %v1402 = vadd.f32 %v1398, %v1400
  %v1403 = vpack.c.bf16 %v1402, %v1401
  %s1404 = scalar_lea.vmem [#allocation2], 32
  %1405 = vst [vmem:[%s1404] sm:$0xff] %v1403
  %s1406 = smul.u32 10, 3
  %s1407 = smul.addr %s1406, 8
  %s1408 = scalar_lea.vmem [#allocation3], %s1407
  %v1409 = vld [vmem:[%s1408] sm:$0xff]
  %v1410 = vld [vmem:[%s1408 + $0x8] sm:$0xff]
  %v1411 = vld [vmem:[%s1408 + $0x10] sm:$0xff]
  %v1412 = vld [vmem:[%s1408 + $0x18] sm:$0xff]
  %v1413 = vld [vmem:[%s1408 + $0x20] sm:$0xff]
  %v1414 = vld [vmem:[%s1408 + $0x28] sm:$0xff]
  %1415 = vmatprep.subr.bf16.mxu0 %v669
  %1416 = vmatpush1.bf16.msra.mxu0 %v668
  %1417 = vmatprep.subr.bf16.mxu0 %v672
  %1418 = vmatpush1.bf16.msra.mxu0 %v671
  %1419 = vmatprep.subr.bf16.mxu0 %v675
  %1420 = vmatpush1.bf16.msra.mxu0 %v674
  %1421 = vmatprep.subr.bf16.mxu0 %v678
  %1422 = vmatpush1.bf16.msra.mxu0 %v677
  %1423 = vmatprep.subr.bf16.mxu0 %v681
  %1424 = vmatpush1.bf16.msra.mxu0 %v680
  %1425 = vmatprep.subr.bf16.mxu0 %v684
  %1426 = vmatpush1.bf16.msra.mxu0 %v683
  %1427 = vmatprep.subr.bf16.mxu0 %v687
  %1428 = vmatpush1.bf16.msra.mxu0 %v686
  %1429 = vmatprep.subr.bf16.mxu0 %v690
  %1430 = vmatpush1.bf16.msra.mxu0 %v689
  %1431 = vmatprep.subr.bf16.mxu0 0
  %1432 = vmatpush1.bf16.msra.mxu0 0
  %1433 = vmatprep.subr.bf16.mxu0 0
  %1434 = vmatpush1.bf16.msra.mxu0 0
  %1435 = vmatprep.subr.bf16.mxu0 0
  %1436 = vmatpush1.bf16.msra.mxu0 0
  %1437 = vmatprep.subr.bf16.mxu0 0
  %1438 = vmatpush1.bf16.msra.mxu0 0
  %1439 = vmatprep.subr.bf16.mxu0 0
  %1440 = vmatpush1.bf16.msra.mxu0 0
  %1441 = vmatprep.subr.bf16.mxu0 0
  %1442 = vmatpush1.bf16.msra.mxu0 0
  %1443 = vmatprep.subr.bf16.mxu0 0
  %1444 = vmatpush1.bf16.msra.mxu0 0
  %1445 = vmatprep.subr.bf16.mxu0 0
  %1446 = vmatpush1.bf16.msra.mxu0 0
  %1447 = vmatprep.mubr.bf16.mxu0 0
  %1448 = vmatmul.mubr.bf16.gmra.mrb[0].mxu0 %v1403
  %v1449 = vpop.f32.mrb[0].mxu0
  %v1450 = vadd.f32 0.0, %v1449
  %v1451 = vpop.f32.mrb[0].mxu0
  %v1452 = vadd.f32 0.0, %v1451
  %v1453 = vpop.f32.mrb[0].mxu0
  %v1454 = vadd.f32 0.0, %v1453
  %v1455 = vpop.f32.mrb[0].mxu0
  %v1456 = vadd.f32 0.0, %v1455
  %1457 = vdwg.mxu0
  %1458 = vmatprep.subr.bf16.mxu0 0
  %1459 = vmatpush1.bf16.msra.mxu0 %v670
  %1460 = vmatprep.subr.bf16.mxu0 0
  %1461 = vmatpush1.bf16.msra.mxu0 %v673
  %1462 = vmatprep.subr.bf16.mxu0 0
  %1463 = vmatpush1.bf16.msra.mxu0 %v676
  %1464 = vmatprep.subr.bf16.mxu0 0
  %1465 = vmatpush1.bf16.msra.mxu0 %v679
  %1466 = vmatprep.subr.bf16.mxu0 0
  %1467 = vmatpush1.bf16.msra.mxu0 %v682
  %1468 = vmatprep.subr.bf16.mxu0 0
  %1469 = vmatpush1.bf16.msra.mxu0 %v685
  %1470 = vmatprep.subr.bf16.mxu0 0
  %1471 = vmatpush1.bf16.msra.mxu0 %v688
  %1472 = vmatprep.subr.bf16.mxu0 0
  %1473 = vmatpush1.bf16.msra.mxu0 %v691
  %1474 = vmatprep.subr.bf16.mxu0 0
  %1475 = vmatpush1.bf16.msra.mxu0 0
  %1476 = vmatprep.subr.bf16.mxu0 0
  %1477 = vmatpush1.bf16.msra.mxu0 0
  %1478 = vmatprep.subr.bf16.mxu0 0
  %1479 = vmatpush1.bf16.msra.mxu0 0
  %1480 = vmatprep.subr.bf16.mxu0 0
  %1481 = vmatpush1.bf16.msra.mxu0 0
  %1482 = vmatprep.subr.bf16.mxu0 0
  %1483 = vmatpush1.bf16.msra.mxu0 0
  %1484 = vmatprep.subr.bf16.mxu0 0
  %1485 = vmatpush1.bf16.msra.mxu0 0
  %1486 = vmatprep.subr.bf16.mxu0 0
  %1487 = vmatpush1.bf16.msra.mxu0 0
  %1488 = vmatprep.subr.bf16.mxu0 0
  %1489 = vmatpush1.bf16.msra.mxu0 0
  %1490 = vmatprep.mubr.bf16.mxu0 0
  %1491 = vmatmul.mubr.bf16.gmra.mrb[0].mxu0 %v1403
  %v1492 = vpop.f32.mrb[0].mxu0
  %v1493 = vadd.f32 0.0, %v1492
  %v1494 = vpop.f32.mrb[0].mxu0
  %v1495 = vpop.f32.mrb[0].mxu0
  %v1496 = vadd.f32 0.0, %v1495
  %v1497 = vpop.f32.mrb[0].mxu0
  %1498 = vdwg.mxu0
  %v1499 = vadd.f32 %v1493, %v108
  %v1500 = vadd.f32 %v1496, %v108
  %v1501 = vadd.f32 %v1409, %v1450
  %v1502 = vadd.f32 %v1412, %v1454
  %v1503 = vxor.u32 %v1501, 2147483648
  %v1504 = vxor.u32 %v1502, 2147483648
  %v1505 = vmul.f32 %v1503, 1.442695
  %v1506 = vpow.pop %v1505
  %v1507 = vmul.f32 %v1504, 1.442695
  %v1508 = vpow.pop %v1507
  %v1509 = vadd.f32 %v1506, 1.0
  %v1510 = vadd.f32 %v1508, 1.0
  %v1511 = vrcp.pop %v1509
  %v1512 = vmul.f32 1.0, %v1511
  %v1513 = vrcp.pop %v1510
  %v1514 = vmul.f32 1.0, %v1513
  %v1515 = vadd.f32 %v1410, %v1452
  %v1516 = vadd.f32 %v1413, %v1456
  %v1517 = vxor.u32 %v1515, 2147483648
  %v1518 = vxor.u32 %v1516, 2147483648
  %v1519 = vmul.f32 %v1517, 1.442695
  %v1520 = vpow.pop %v1519
  %v1521 = vmul.f32 %v1518, 1.442695
  %v1522 = vpow.pop %v1521
  %v1523 = vadd.f32 %v1520, 1.0
  %v1524 = vadd.f32 %v1522, 1.0
  %v1525 = vrcp.pop %v1523
  %v1526 = vmul.f32 1.0, %v1525
  %v1527 = vrcp.pop %v1524
  %v1528 = vmul.f32 1.0, %v1527
  %v1529 = vmul.f32 %v1512, %v1499
  %v1530 = vmul.f32 %v1514, %v1500
  %v1531 = vadd.f32 %v1411, %v1529
  %v1532 = vadd.f32 %v1414, %v1530
  %v1533 = vtanh.pop %v1531
  %v1534 = vtanh.pop %v1532
  %v1535 = vsub.f32 1.0, %v1526
  %v1536 = vsub.f32 1.0, %v1528
  %v1537 = vmul.f32 %v1535, %v1533
  %v1538 = vmul.f32 %v1536, %v1534
  %v1539 = vmul.f32 %v1526, %v1401
  %v1540 = vmul.f32 %v1528, %v1402
  %v1541 = vadd.f32 %v1537, %v1539
  %v1542 = vadd.f32 %v1538, %v1540
  %v1543 = vpack.c.bf16 %v1542, %v1541
  %s1544 = scalar_lea.vmem [#allocation2], 40
  %1545 = vst [vmem:[%s1544] sm:$0xff] %v1543
  %s1546 = smul.u32 12, 3
  %s1547 = smul.addr %s1546, 8
  %s1548 = scalar_lea.vmem [#allocation3], %s1547
  %v1549 = vld [vmem:[%s1548] sm:$0xff]
  %v1550 = vld [vmem:[%s1548 + $0x8] sm:$0xff]
  %v1551 = vld [vmem:[%s1548 + $0x10] sm:$0xff]
  %v1552 = vld [vmem:[%s1548 + $0x18] sm:$0xff]
  %v1553 = vld [vmem:[%s1548 + $0x20] sm:$0xff]
  %v1554 = vld [vmem:[%s1548 + $0x28] sm:$0xff]
  %1555 = vmatprep.subr.bf16.mxu0 %v669
  %1556 = vmatpush1.bf16.msra.mxu0 %v668
  %1557 = vmatprep.subr.bf16.mxu0 %v672
  %1558 = vmatpush1.bf16.msra.mxu0 %v671
  %1559 = vmatprep.subr.bf16.mxu0 %v675
  %1560 = vmatpush1.bf16.msra.mxu0 %v674
  %1561 = vmatprep.subr.bf16.mxu0 %v678
  %1562 = vmatpush1.bf16.msra.mxu0 %v677
  %1563 = vmatprep.subr.bf16.mxu0 %v681
  %1564 = vmatpush1.bf16.msra.mxu0 %v680
  %1565 = vmatprep.subr.bf16.mxu0 %v684
  %1566 = vmatpush1.bf16.msra.mxu0 %v683
  %1567 = vmatprep.subr.bf16.mxu0 %v687
  %1568 = vmatpush1.bf16.msra.mxu0 %v686
  %1569 = vmatprep.subr.bf16.mxu0 %v690
  %1570 = vmatpush1.bf16.msra.mxu0 %v689
  %1571 = vmatprep.subr.bf16.mxu0 0
  %1572 = vmatpush1.bf16.msra.mxu0 0
  %1573 = vmatprep.subr.bf16.mxu0 0
  %1574 = vmatpush1.bf16.msra.mxu0 0
  %1575 = vmatprep.subr.bf16.mxu0 0
  %1576 = vmatpush1.bf16.msra.mxu0 0
  %1577 = vmatprep.subr.bf16.mxu0 0
  %1578 = vmatpush1.bf16.msra.mxu0 0
  %1579 = vmatprep.subr.bf16.mxu0 0
  %1580 = vmatpush1.bf16.msra.mxu0 0
  %1581 = vmatprep.subr.bf16.mxu0 0
  %1582 = vmatpush1.bf16.msra.mxu0 0
  %1583 = vmatprep.subr.bf16.mxu0 0
  %1584 = vmatpush1.bf16.msra.mxu0 0
  %1585 = vmatprep.subr.bf16.mxu0 0
  %1586 = vmatpush1.bf16.msra.mxu0 0
  %1587 = vmatprep.mubr.bf16.mxu0 0
  %1588 = vmatmul.mubr.bf16.gmra.mrb[0].mxu0 %v1543
  %v1589 = vpop.f32.mrb[0].mxu0
  %v1590 = vadd.f32 0.0, %v1589
  %v1591 = vpop.f32.mrb[0].mxu0
  %v1592 = vadd.f32 0.0, %v1591
  %v1593 = vpop.f32.mrb[0].mxu0
  %v1594 = vadd.f32 0.0, %v1593
  %v1595 = vpop.f32.mrb[0].mxu0
  %v1596 = vadd.f32 0.0, %v1595
  %1597 = vdwg.mxu0
  %1598 = vmatprep.subr.bf16.mxu0 0
  %1599 = vmatpush1.bf16.msra.mxu0 %v670
  %1600 = vmatprep.subr.bf16.mxu0 0
  %1601 = vmatpush1.bf16.msra.mxu0 %v673
  %1602 = vmatprep.subr.bf16.mxu0 0
  %1603 = vmatpush1.bf16.msra.mxu0 %v676
  %1604 = vmatprep.subr.bf16.mxu0 0
  %1605 = vmatpush1.bf16.msra.mxu0 %v679
  %1606 = vmatprep.subr.bf16.mxu0 0
  %1607 = vmatpush1.bf16.msra.mxu0 %v682
  %1608 = vmatprep.subr.bf16.mxu0 0
  %1609 = vmatpush1.bf16.msra.mxu0 %v685
  %1610 = vmatprep.subr.bf16.mxu0 0
  %1611 = vmatpush1.bf16.msra.mxu0 %v688
  %1612 = vmatprep.subr.bf16.mxu0 0
  %1613 = vmatpush1.bf16.msra.mxu0 %v691
  %1614 = vmatprep.subr.bf16.mxu0 0
  %1615 = vmatpush1.bf16.msra.mxu0 0
  %1616 = vmatprep.subr.bf16.mxu0 0
  %1617 = vmatpush1.bf16.msra.mxu0 0
  %1618 = vmatprep.subr.bf16.mxu0 0
  %1619 = vmatpush1.bf16.msra.mxu0 0
  %1620 = vmatprep.subr.bf16.mxu0 0
  %1621 = vmatpush1.bf16.msra.mxu0 0
  %1622 = vmatprep.subr.bf16.mxu0 0
  %1623 = vmatpush1.bf16.msra.mxu0 0
  %1624 = vmatprep.subr.bf16.mxu0 0
  %1625 = vmatpush1.bf16.msra.mxu0 0
  %1626 = vmatprep.subr.bf16.mxu0 0
  %1627 = vmatpush1.bf16.msra.mxu0 0
  %1628 = vmatprep.subr.bf16.mxu0 0
  %1629 = vmatpush1.bf16.msra.mxu0 0
  %1630 = vmatprep.mubr.bf16.mxu0 0
  %1631 = vmatmul.mubr.bf16.gmra.mrb[0].mxu0 %v1543
  %v1632 = vpop.f32.mrb[0].mxu0
  %v1633 = vadd.f32 0.0, %v1632
  %v1634 = vpop.f32.mrb[0].mxu0
  %v1635 = vpop.f32.mrb[0].mxu0
  %v1636 = vadd.f32 0.0, %v1635
  %v1637 = vpop.f32.mrb[0].mxu0
  %1638 = vdwg.mxu0
  %v1639 = vadd.f32 %v1633, %v108
  %v1640 = vadd.f32 %v1636, %v108
  %v1641 = vadd.f32 %v1549, %v1590
  %v1642 = vadd.f32 %v1552, %v1594
  %v1643 = vxor.u32 %v1641, 2147483648
  %v1644 = vxor.u32 %v1642, 2147483648
  %v1645 = vmul.f32 %v1643, 1.442695
  %v1646 = vpow.pop %v1645
  %v1647 = vmul.f32 %v1644, 1.442695
  %v1648 = vpow.pop %v1647
  %v1649 = vadd.f32 %v1646, 1.0
  %v1650 = vadd.f32 %v1648, 1.0
  %v1651 = vrcp.pop %v1649
  %v1652 = vmul.f32 1.0, %v1651
  %v1653 = vrcp.pop %v1650
  %v1654 = vmul.f32 1.0, %v1653
  %v1655 = vadd.f32 %v1550, %v1592
  %v1656 = vadd.f32 %v1553, %v1596
  %v1657 = vxor.u32 %v1655, 2147483648
  %v1658 = vxor.u32 %v1656, 2147483648
  %v1659 = vmul.f32 %v1657, 1.442695
  %v1660 = vpow.pop %v1659
  %v1661 = vmul.f32 %v1658, 1.442695
  %v1662 = vpow.pop %v1661
  %v1663 = vadd.f32 %v1660, 1.0
  %v1664 = vadd.f32 %v1662, 1.0
  %v1665 = vrcp.pop %v1663
  %v1666 = vmul.f32 1.0, %v1665
  %v1667 = vrcp.pop %v1664
  %v1668 = vmul.f32 1.0, %v1667
  %v1669 = vmul.f32 %v1652, %v1639
  %v1670 = vmul.f32 %v1654, %v1640
  %v1671 = vadd.f32 %v1551, %v1669
  %v1672 = vadd.f32 %v1554, %v1670
  %v1673 = vtanh.pop %v1671
  %v1674 = vtanh.pop %v1672
  %v1675 = vsub.f32 1.0, %v1666
  %v1676 = vsub.f32 1.0, %v1668
  %v1677 = vmul.f32 %v1675, %v1673
  %v1678 = vmul.f32 %v1676, %v1674
  %v1679 = vmul.f32 %v1666, %v1541
  %v1680 = vmul.f32 %v1668, %v1542
  %v1681 = vadd.f32 %v1677, %v1679
  %v1682 = vadd.f32 %v1678, %v1680
  %v1683 = vpack.c.bf16 %v1682, %v1681
  %s1684 = scalar_lea.vmem [#allocation2], 48
  %1685 = vst [vmem:[%s1684] sm:$0xff] %v1683
  %s1686 = smul.u32 14, 3
  %s1687 = smul.addr %s1686, 8
  %s1688 = scalar_lea.vmem [#allocation3], %s1687
  %v1689 = vld [vmem:[%s1688] sm:$0xff]
  %v1690 = vld [vmem:[%s1688 + $0x8] sm:$0xff]
  %v1691 = vld [vmem:[%s1688 + $0x10] sm:$0xff]
  %v1692 = vld [vmem:[%s1688 + $0x18] sm:$0xff]
  %v1693 = vld [vmem:[%s1688 + $0x20] sm:$0xff]
  %v1694 = vld [vmem:[%s1688 + $0x28] sm:$0xff]
  %1695 = vmatprep.subr.bf16.mxu0 %v669
  %1696 = vmatpush1.bf16.msra.mxu0 %v668
  %1697 = vmatprep.subr.bf16.mxu0 %v672
  %1698 = vmatpush1.bf16.msra.mxu0 %v671
  %1699 = vmatprep.subr.bf16.mxu0 %v675
  %1700 = vmatpush1.bf16.msra.mxu0 %v674
  %1701 = vmatprep.subr.bf16.mxu0 %v678
  %1702 = vmatpush1.bf16.msra.mxu0 %v677
  %1703 = vmatprep.subr.bf16.mxu0 %v681
  %1704 = vmatpush1.bf16.msra.mxu0 %v680
  %1705 = vmatprep.subr.bf16.mxu0 %v684
  %1706 = vmatpush1.bf16.msra.mxu0 %v683
  %1707 = vmatprep.subr.bf16.mxu0 %v687
  %1708 = vmatpush1.bf16.msra.mxu0 %v686
  %1709 = vmatprep.subr.bf16.mxu0 %v690
  %1710 = vmatpush1.bf16.msra.mxu0 %v689
  %1711 = vmatprep.subr.bf16.mxu0 0
  %1712 = vmatpush1.bf16.msra.mxu0 0
  %1713 = vmatprep.subr.bf16.mxu0 0
  %1714 = vmatpush1.bf16.msra.mxu0 0
  %1715 = vmatprep.subr.bf16.mxu0 0
  %1716 = vmatpush1.bf16.msra.mxu0 0
  %1717 = vmatprep.subr.bf16.mxu0 0
  %1718 = vmatpush1.bf16.msra.mxu0 0
  %1719 = vmatprep.subr.bf16.mxu0 0
  %1720 = vmatpush1.bf16.msra.mxu0 0
  %1721 = vmatprep.subr.bf16.mxu0 0
  %1722 = vmatpush1.bf16.msra.mxu0 0
  %1723 = vmatprep.subr.bf16.mxu0 0
  %1724 = vmatpush1.bf16.msra.mxu0 0
  %1725 = vmatprep.subr.bf16.mxu0 0
  %1726 = vmatpush1.bf16.msra.mxu0 0
  %1727 = vmatprep.mubr.bf16.mxu0 0
  %1728 = vmatmul.mubr.bf16.gmra.mrb[0].mxu0 %v1683
  %v1729 = vpop.f32.mrb[0].mxu0
  %v1730 = vadd.f32 0.0, %v1729
  %v1731 = vpop.f32.mrb[0].mxu0
  %v1732 = vadd.f32 0.0, %v1731
  %v1733 = vpop.f32.mrb[0].mxu0
  %v1734 = vadd.f32 0.0, %v1733
  %v1735 = vpop.f32.mrb[0].mxu0
  %v1736 = vadd.f32 0.0, %v1735
  %1737 = vdwg.mxu0
  %1738 = vmatprep.subr.bf16.mxu0 0
  %1739 = vmatpush1.bf16.msra.mxu0 %v670
  %1740 = vmatprep.subr.bf16.mxu0 0
  %1741 = vmatpush1.bf16.msra.mxu0 %v673
  %1742 = vmatprep.subr.bf16.mxu0 0
  %1743 = vmatpush1.bf16.msra.mxu0 %v676
  %1744 = vmatprep.subr.bf16.mxu0 0
  %1745 = vmatpush1.bf16.msra.mxu0 %v679
  %1746 = vmatprep.subr.bf16.mxu0 0
  %1747 = vmatpush1.bf16.msra.mxu0 %v682
  %1748 = vmatprep.subr.bf16.mxu0 0
  %1749 = vmatpush1.bf16.msra.mxu0 %v685
  %1750 = vmatprep.subr.bf16.mxu0 0
  %1751 = vmatpush1.bf16.msra.mxu0 %v688
  %1752 = vmatprep.subr.bf16.mxu0 0
  %1753 = vmatpush1.bf16.msra.mxu0 %v691
  %1754 = vmatprep.subr.bf16.mxu0 0
  %1755 = vmatpush1.bf16.msra.mxu0 0
  %1756 = vmatprep.subr.bf16.mxu0 0
  %1757 = vmatpush1.bf16.msra.mxu0 0
  %1758 = vmatprep.subr.bf16.mxu0 0
  %1759 = vmatpush1.bf16.msra.mxu0 0
  %1760 = vmatprep.subr.bf16.mxu0 0
  %1761 = vmatpush1.bf16.msra.mxu0 0
  %1762 = vmatprep.subr.bf16.mxu0 0
  %1763 = vmatpush1.bf16.msra.mxu0 0
  %1764 = vmatprep.subr.bf16.mxu0 0
  %1765 = vmatpush1.bf16.msra.mxu0 0
  %1766 = vmatprep.subr.bf16.mxu0 0
  %1767 = vmatpush1.bf16.msra.mxu0 0
  %1768 = vmatprep.subr.bf16.mxu0 0
  %1769 = vmatpush1.bf16.msra.mxu0 0
  %1770 = vmatprep.mubr.bf16.mxu0 0
  %1771 = vmatmul.mubr.bf16.gmra.mrb[0].mxu0 %v1683
  %v1772 = vpop.f32.mrb[0].mxu0
  %v1773 = vadd.f32 0.0, %v1772
  %v1774 = vpop.f32.mrb[0].mxu0
  %v1775 = vpop.f32.mrb[0].mxu0
  %v1776 = vadd.f32 0.0, %v1775
  %v1777 = vpop.f32.mrb[0].mxu0
  %1778 = vdwg.mxu0
  %v1779 = vadd.f32 %v1773, %v108
  %v1780 = vadd.f32 %v1776, %v108
  %v1781 = vadd.f32 %v1689, %v1730
  %v1782 = vadd.f32 %v1692, %v1734
  %v1783 = vxor.u32 %v1781, 2147483648
  %v1784 = vxor.u32 %v1782, 2147483648
  %v1785 = vmul.f32 %v1783, 1.442695
  %v1786 = vpow.pop %v1785
  %v1787 = vmul.f32 %v1784, 1.442695
  %v1788 = vpow.pop %v1787
  %v1789 = vadd.f32 %v1786, 1.0
  %v1790 = vadd.f32 %v1788, 1.0
  %v1791 = vrcp.pop %v1789
  %v1792 = vmul.f32 1.0, %v1791
  %v1793 = vrcp.pop %v1790
  %v1794 = vmul.f32 1.0, %v1793
  %v1795 = vadd.f32 %v1690, %v1732
  %v1796 = vadd.f32 %v1693, %v1736
  %v1797 = vxor.u32 %v1795, 2147483648
  %v1798 = vxor.u32 %v1796, 2147483648
  %v1799 = vmul.f32 %v1797, 1.442695
  %v1800 = vpow.pop %v1799
  %v1801 = vmul.f32 %v1798, 1.442695
  %v1802 = vpow.pop %v1801
  %v1803 = vadd.f32 %v1800, 1.0
  %v1804 = vadd.f32 %v1802, 1.0
  %v1805 = vrcp.pop %v1803
  %v1806 = vmul.f32 1.0, %v1805
  %v1807 = vrcp.pop %v1804
  %v1808 = vmul.f32 1.0, %v1807
  %v1809 = vmul.f32 %v1792, %v1779
  %v1810 = vmul.f32 %v1794, %v1780
  %v1811 = vadd.f32 %v1691, %v1809
  %v1812 = vadd.f32 %v1694, %v1810
  %v1813 = vtanh.pop %v1811
  %v1814 = vtanh.pop %v1812
  %v1815 = vsub.f32 1.0, %v1806
  %v1816 = vsub.f32 1.0, %v1808
  %v1817 = vmul.f32 %v1815, %v1813
  %v1818 = vmul.f32 %v1816, %v1814
  %v1819 = vmul.f32 %v1806, %v1681
  %v1820 = vmul.f32 %v1808, %v1682
  %v1821 = vadd.f32 %v1817, %v1819
  %v1822 = vadd.f32 %v1818, %v1820
  %v1823 = vpack.c.bf16 %v1822, %v1821
  %s1824 = scalar_lea.vmem [#allocation2], 56
  %1825 = vst [vmem:[%s1824] sm:$0xff] %v1823
  %1826 = vst [vmem:[%s11] sm:$0xff] %v1821
  %1827 = vst [vmem:[%s11 + $0x8] sm:$0xff] %v1822
  %v1828 = vld [vmem:[%s6] sm:$0xff]
  %v1829 = vld [vmem:[%s6 + $0x8] sm:$0xf]
  %v1830 = vld [vmem:[%s6 + $0xc] sm:$0xff]
  %v1831 = vld [vmem:[%s6 + $0x14] sm:$0xf]
  %v1832 = vld [vmem:[%s6 + $0x18] sm:$0xff]
  %v1833 = vld [vmem:[%s6 + $0x20] sm:$0xf]
  %v1834 = vld [vmem:[%s6 + $0x24] sm:$0xff]
  %v1835 = vld [vmem:[%s6 + $0x2c] sm:$0xf]
  %v1836 = vld [vmem:[%s6 + $0x30] sm:$0xff]
  %v1837 = vld [vmem:[%s6 + $0x38] sm:$0xf]
  %v1838 = vld [vmem:[%s6 + $0x3c] sm:$0xff]
  %v1839 = vld [vmem:[%s6 + $0x44] sm:$0xf]
  %v1840 = vld [vmem:[%s6 + $0x48] sm:$0xff]
  %v1841 = vld [vmem:[%s6 + $0x50] sm:$0xf]
  %v1842 = vld [vmem:[%s6 + $0x54] sm:$0xff]
  %v1843 = vld [vmem:[%s6 + $0x5c] sm:$0xf]
  %v1844 = vld [vmem:[%s6 + $0x60] sm:$0xff]
  %v1845 = vld [vmem:[%s6 + $0x68] sm:$0xf]
  %v1846 = vld [vmem:[%s6 + $0x6c] sm:$0xff]
  %v1847 = vld [vmem:[%s6 + $0x74] sm:$0xf]
  %v1848 = vld [vmem:[%s6 + $0x78] sm:$0xff]
  %v1849 = vld [vmem:[%s6 + $0x80] sm:$0xf]
  %v1850 = vld [vmem:[%s6 + $0x84] sm:$0xff]
  %v1851 = vld [vmem:[%s6 + $0x8c] sm:$0xf]
  %v1852 = vld [vmem:[%s6 + $0x90] sm:$0xff]
  %v1853 = vld [vmem:[%s6 + $0x98] sm:$0xf]
  %v1854 = vld [vmem:[%s6 + $0x9c] sm:$0xff]
  %v1855 = vld [vmem:[%s6 + $0xa4] sm:$0xf]
  %v1856 = vld [vmem:[%s6 + $0xa8] sm:$0xff]
  %v1857 = vld [vmem:[%s6 + $0xb0] sm:$0xf]
  %v1858 = vld [vmem:[%s6 + $0xb4] sm:$0xff]
  %v1859 = vld [vmem:[%s6 + $0xbc] sm:$0xf]
  %v1860 = vld [vmem:[%s7] sm:$0xff]
  %v1861 = vld [vmem:[%s7 + $0x8] sm:$0xf]
  %v1862 = vld [vmem:[%s7 + $0xc] sm:$0xff]
  %v1863 = vld [vmem:[%s7 + $0x14] sm:$0xf]
  %v1864 = vld [vmem:[%s7 + $0x18] sm:$0xff]
  %v1865 = vld [vmem:[%s7 + $0x20] sm:$0xf]
  %v1866 = vld [vmem:[%s7 + $0x24] sm:$0xff]
  %v1867 = vld [vmem:[%s7 + $0x2c] sm:$0xf]
  %v1868 = vld [vmem:[%s7 + $0x30] sm:$0xff]
  %v1869 = vld [vmem:[%s7 + $0x38] sm:$0xf]
  %v1870 = vld [vmem:[%s7 + $0x3c] sm:$0xff]
  %v1871 = vld [vmem:[%s7 + $0x44] sm:$0xf]
  %v1872 = vld [vmem:[%s7 + $0x48] sm:$0xff]
  %v1873 = vld [vmem:[%s7 + $0x50] sm:$0xf]
  %v1874 = vld [vmem:[%s7 + $0x54] sm:$0xff]
  %v1875 = vld [vmem:[%s7 + $0x5c] sm:$0xf]
  %v1876 = vld [vmem:[%s7 + $0x60] sm:$0xff]
  %v1877 = vld [vmem:[%s7 + $0x68] sm:$0xf]
  %v1878 = vld [vmem:[%s7 + $0x6c] sm:$0xff]
  %v1879 = vld [vmem:[%s7 + $0x74] sm:$0xf]
  %v1880 = vld [vmem:[%s7 + $0x78] sm:$0xff]
  %v1881 = vld [vmem:[%s7 + $0x80] sm:$0xf]
  %v1882 = vld [vmem:[%s7 + $0x84] sm:$0xff]
  %v1883 = vld [vmem:[%s7 + $0x8c] sm:$0xf]
  %v1884 = vld [vmem:[%s7 + $0x90] sm:$0xff]
  %v1885 = vld [vmem:[%s7 + $0x98] sm:$0xf]
  %v1886 = vld [vmem:[%s7 + $0x9c] sm:$0xff]
  %v1887 = vld [vmem:[%s7 + $0xa4] sm:$0xf]
  %v1888 = vld [vmem:[%s7 + $0xa8] sm:$0xff]
  %v1889 = vld [vmem:[%s7 + $0xb0] sm:$0xf]
  %v1890 = vld [vmem:[%s7 + $0xb4] sm:$0xff]
  %v1891 = vld [vmem:[%s7 + $0xbc] sm:$0xf]
  %v1892 = vld [vmem:[%s8] sm:$0x7]
  %v1893 = vld [vmem:[%s9] sm:$0x1]
  %v1895 = vlaneseq
  %v1896 = vshrl.u32 %v1895, 7
  %v1897 = vsub.s32 0, %v1896
  %v1898 = vrot.slane %v1893, %v1897
  %s1900 = scalar_lea.vmem %s1, 16
  %v1901 = vld [vmem:[%s1900] sm:$0xff]
  %v1902 = vld [vmem:[%s1900 + $0x8] sm:$0xff]
  %v1903 = vld [vmem:[#allocation2] sm:$0xff]
  %v1904 = vld [vmem:[#allocation2 + $0x8] sm:$0xff]
  %v1905 = vld [vmem:[#allocation2 + $0x10] sm:$0xff]
  %v1906 = vld [vmem:[#allocation2 + $0x18] sm:$0xff]
  %v1907 = vld [vmem:[#allocation2 + $0x20] sm:$0xff]
  %v1908 = vld [vmem:[#allocation2 + $0x28] sm:$0xff]
  %v1909 = vld [vmem:[#allocation2 + $0x30] sm:$0xff]
  %v1910 = vld [vmem:[#allocation2 + $0x38] sm:$0xff]
  %v1912 = vlaneseq
  %v1913 = vshrl.u32 %v1912, 7
  %v1914 = vsub.s32 0, %v1913
  %v1915 = vrot.slane %v1892, %v1914
  %v1916 = vlaneseq
  %v1917 = vshrl.u32 %v1916, 7
  %v1918 = vsub.s32 1, %v1917
  %v1919 = vrot.slane %v1892, %v1918
  %v1920 = vlaneseq
  %v1921 = vshrl.u32 %v1920, 7
  %v1922 = vsub.s32 2, %v1921
  %v1923 = vrot.slane %v1892, %v1922
  %v1959 = vunpack.c.l.b16 %v1828
  %v1960 = vunpack.c.h.b16 %v1828
  %v1961 = vunpack.c.l.b16 %v1829
  %v1962 = vunpack.c.l.b16 %v1830
  %v1963 = vunpack.c.h.b16 %v1830
  %v1964 = vunpack.c.l.b16 %v1831
  %v1965 = vunpack.c.l.b16 %v1832
  %v1966 = vunpack.c.h.b16 %v1832
  %v1967 = vunpack.c.l.b16 %v1833
  %v1968 = vunpack.c.l.b16 %v1834
  %v1969 = vunpack.c.h.b16 %v1834
  %v1970 = vunpack.c.l.b16 %v1835
  %v1971 = vunpack.c.l.b16 %v1836
  %v1972 = vunpack.c.h.b16 %v1836
  %v1973 = vunpack.c.l.b16 %v1837
  %v1974 = vunpack.c.l.b16 %v1838
  %v1975 = vunpack.c.h.b16 %v1838
  %v1976 = vunpack.c.l.b16 %v1839
  %v1977 = vunpack.c.l.b16 %v1840
  %v1978 = vunpack.c.h.b16 %v1840
  %v1979 = vunpack.c.l.b16 %v1841
  %v1980 = vunpack.c.l.b16 %v1842
  %v1981 = vunpack.c.h.b16 %v1842
  %v1982 = vunpack.c.l.b16 %v1843
  %v1983 = vunpack.c.l.b16 %v1844
  %v1984 = vunpack.c.h.b16 %v1844
  %v1985 = vunpack.c.l.b16 %v1845
  %v1986 = vunpack.c.l.b16 %v1846
  %v1987 = vunpack.c.h.b16 %v1846
  %v1988 = vunpack.c.l.b16 %v1847
  %v1989 = vunpack.c.l.b16 %v1848
  %v1990 = vunpack.c.h.b16 %v1848
  %v1991 = vunpack.c.l.b16 %v1849
  %v1992 = vunpack.c.l.b16 %v1850
  %v1993 = vunpack.c.h.b16 %v1850
  %v1994 = vunpack.c.l.b16 %v1851
  %v1995 = vunpack.c.l.b16 %v1852
  %v1996 = vunpack.c.h.b16 %v1852
  %v1997 = vunpack.c.l.b16 %v1853
  %v1998 = vunpack.c.l.b16 %v1854
  %v1999 = vunpack.c.h.b16 %v1854
  %v2000 = vunpack.c.l.b16 %v1855
  %v2001 = vunpack.c.l.b16 %v1856
  %v2002 = vunpack.c.h.b16 %v1856
  %v2003 = vunpack.c.l.b16 %v1857
  %v2004 = vunpack.c.l.b16 %v1858
  %v2005 = vunpack.c.h.b16 %v1858
  %v2006 = vunpack.c.l.b16 %v1859
  %v2007 = vpack.c.b16 %v1962, %v1959
  %v2008 = vpack.c.b16 %v1963, %v1960
  %v2009 = vpack.c.b16 %v1964, %v1961
  %v2010 = vpack.c.b16 %v1968, %v1965
  %v2011 = vpack.c.b16 %v1969, %v1966
  %v2012 = vpack.c.b16 %v1970, %v1967
  %v2013 = vpack.c.b16 %v1974, %v1971
  %v2014 = vpack.c.b16 %v1975, %v1972
  %v2015 = vpack.c.b16 %v1976, %v1973
  %v2016 = vpack.c.b16 %v1980, %v1977
  %v2017 = vpack.c.b16 %v1981, %v1978
  %v2018 = vpack.c.b16 %v1982, %v1979
  %v2019 = vpack.c.b16 %v1986, %v1983
  %v2020 = vpack.c.b16 %v1987, %v1984
  %v2021 = vpack.c.b16 %v1988, %v1985
  %v2022 = vpack.c.b16 %v1992, %v1989
  %v2023 = vpack.c.b16 %v1993, %v1990
  %v2024 = vpack.c.b16 %v1994, %v1991
  %v2025 = vpack.c.b16 %v1998, %v1995
  %v2026 = vpack.c.b16 %v1999, %v1996
  %v2027 = vpack.c.b16 %v2000, %v1997
  %v2028 = vpack.c.b16 %v2004, %v2001
  %v2029 = vpack.c.b16 %v2005, %v2002
  %v2030 = vpack.c.b16 %v2006, %v2003
  %2055 = vmatprep.subr.bf16.mxu0 %v2008
  %2056 = vmatpush1.bf16.msra.mxu0 %v2007
  %2057 = vmatprep.subr.bf16.mxu0 %v2011
  %2058 = vmatpush1.bf16.msra.mxu0 %v2010
  %2059 = vmatprep.subr.bf16.mxu0 %v2014
  %2060 = vmatpush1.bf16.msra.mxu0 %v2013
  %2061 = vmatprep.subr.bf16.mxu0 %v2017
  %2062 = vmatpush1.bf16.msra.mxu0 %v2016
  %2063 = vmatprep.subr.bf16.mxu0 %v2020
  %2064 = vmatpush1.bf16.msra.mxu0 %v2019
  %2065 = vmatprep.subr.bf16.mxu0 %v2023
  %2066 = vmatpush1.bf16.msra.mxu0 %v2022
  %2067 = vmatprep.subr.bf16.mxu0 %v2026
  %2068 = vmatpush1.bf16.msra.mxu0 %v2025
  %2069 = vmatprep.subr.bf16.mxu0 %v2029
  %2070 = vmatpush1.bf16.msra.mxu0 %v2028
  %2071 = vmatprep.subr.bf16.mxu0 0
  %2072 = vmatpush1.bf16.msra.mxu0 0
  %2073 = vmatprep.subr.bf16.mxu0 0
  %2074 = vmatpush1.bf16.msra.mxu0 0
  %2075 = vmatprep.subr.bf16.mxu0 0
  %2076 = vmatpush1.bf16.msra.mxu0 0
  %2077 = vmatprep.subr.bf16.mxu0 0
  %2078 = vmatpush1.bf16.msra.mxu0 0
  %2079 = vmatprep.subr.bf16.mxu0 0
  %2080 = vmatpush1.bf16.msra.mxu0 0
  %2081 = vmatprep.subr.bf16.mxu0 0
  %2082 = vmatpush1.bf16.msra.mxu0 0
  %2083 = vmatprep.subr.bf16.mxu0 0
  %2084 = vmatpush1.bf16.msra.mxu0 0
  %2085 = vmatprep.subr.bf16.mxu0 0
  %2086 = vmatpush1.bf16.msra.mxu0 0
  %2087 = vmatprep.mubr.bf16.mxu0 0
  %2088 = vmatmul.mubr.bf16.gmra.mrb[0].mxu0 %v1903
  %v2089 = vpop.f32.mrb[0].mxu0
  %v2090 = vadd.f32 %v1915, %v2089
  %v2091 = vpop.f32.mrb[0].mxu0
  %v2092 = vadd.f32 %v1919, %v2091
  %v2093 = vpop.f32.mrb[0].mxu0
  %v2094 = vadd.f32 %v1915, %v2093
  %v2095 = vpop.f32.mrb[0].mxu0
  %v2096 = vadd.f32 %v1919, %v2095
  %2097 = vmatprep.mubr.bf16.mxu0 0
  %2098 = vmatmul.mubr.bf16.gmra.mrb[0].mxu0 %v1904
  %v2099 = vpop.f32.mrb[0].mxu0
  %v2100 = vadd.f32 %v1915, %v2099
  %v2101 = vpop.f32.mrb[0].mxu0
  %v2102 = vadd.f32 %v1919, %v2101
  %v2103 = vpop.f32.mrb[0].mxu0
  %v2104 = vadd.f32 %v1915, %v2103
  %v2105 = vpop.f32.mrb[0].mxu0
  %v2106 = vadd.f32 %v1919, %v2105
  %2107 = vmatprep.mubr.bf16.mxu0 0
  %2108 = vmatmul.mubr.bf16.gmra.mrb[0].mxu0 %v1905
  %v2109 = vpop.f32.mrb[0].mxu0
  %v2110 = vadd.f32 %v1915, %v2109
  %v2111 = vpop.f32.mrb[0].mxu0
  %v2112 = vadd.f32 %v1919, %v2111
  %v2113 = vpop.f32.mrb[0].mxu0
  %v2114 = vadd.f32 %v1915, %v2113
  %v2115 = vpop.f32.mrb[0].mxu0
  %v2116 = vadd.f32 %v1919, %v2115
  %2117 = vmatprep.mubr.bf16.mxu0 0
  %2118 = vmatmul.mubr.bf16.gmra.mrb[0].mxu0 %v1906
  %v2119 = vpop.f32.mrb[0].mxu0
  %v2120 = vadd.f32 %v1915, %v2119
  %v2121 = vpop.f32.mrb[0].mxu0
  %v2122 = vadd.f32 %v1919, %v2121
  %v2123 = vpop.f32.mrb[0].mxu0
  %v2124 = vadd.f32 %v1915, %v2123
  %v2125 = vpop.f32.mrb[0].mxu0
  %v2126 = vadd.f32 %v1919, %v2125
  %2127 = vmatprep.mubr.bf16.mxu0 0
  %2128 = vmatmul.mubr.bf16.gmra.mrb[0].mxu0 %v1907
  %v2129 = vpop.f32.mrb[0].mxu0
  %v2130 = vadd.f32 %v1915, %v2129
  %v2131 = vpop.f32.mrb[0].mxu0
  %v2132 = vadd.f32 %v1919, %v2131
  %v2133 = vpop.f32.mrb[0].mxu0
  %v2134 = vadd.f32 %v1915, %v2133
  %v2135 = vpop.f32.mrb[0].mxu0
  %v2136 = vadd.f32 %v1919, %v2135
  %2137 = vmatprep.mubr.bf16.mxu0 0
  %2138 = vmatmul.mubr.bf16.gmra.mrb[0].mxu0 %v1908
  %v2139 = vpop.f32.mrb[0].mxu0
  %v2140 = vadd.f32 %v1915, %v2139
  %v2141 = vpop.f32.mrb[0].mxu0
  %v2142 = vadd.f32 %v1919, %v2141
  %v2143 = vpop.f32.mrb[0].mxu0
  %v2144 = vadd.f32 %v1915, %v2143
  %v2145 = vpop.f32.mrb[0].mxu0
  %v2146 = vadd.f32 %v1919, %v2145
  %2147 = vmatprep.mubr.bf16.mxu0 0
  %2148 = vmatmul.mubr.bf16.gmra.mrb[0].mxu0 %v1909
  %v2149 = vpop.f32.mrb[0].mxu0
  %v2150 = vadd.f32 %v1915, %v2149
  %v2151 = vpop.f32.mrb[0].mxu0
  %v2152 = vadd.f32 %v1919, %v2151
  %v2153 = vpop.f32.mrb[0].mxu0
  %v2154 = vadd.f32 %v1915, %v2153
  %v2155 = vpop.f32.mrb[0].mxu0
  %v2156 = vadd.f32 %v1919, %v2155
  %2157 = vmatprep.mubr.bf16.mxu0 0
  %2158 = vmatmul.mubr.bf16.gmra.mrb[0].mxu0 %v1910
  %v2159 = vpop.f32.mrb[0].mxu0
  %v2160 = vadd.f32 %v1915, %v2159
  %v2161 = vpop.f32.mrb[0].mxu0
  %v2162 = vadd.f32 %v1919, %v2161
  %v2163 = vpop.f32.mrb[0].mxu0
  %v2164 = vadd.f32 %v1915, %v2163
  %v2165 = vpop.f32.mrb[0].mxu0
  %v2166 = vadd.f32 %v1919, %v2165
  %2167 = vdwg.mxu0
  %2168 = vmatprep.subr.bf16.mxu0 0
  %2169 = vmatpush1.bf16.msra.mxu0 %v2009
  %2170 = vmatprep.subr.bf16.mxu0 0
  %2171 = vmatpush1.bf16.msra.mxu0 %v2012
  %2172 = vmatprep.subr.bf16.mxu0 0
  %2173 = vmatpush1.bf16.msra.mxu0 %v2015
  %2174 = vmatprep.subr.bf16.mxu0 0
  %2175 = vmatpush1.bf16.msra.mxu0 %v2018
  %2176 = vmatprep.subr.bf16.mxu0 0
  %2177 = vmatpush1.bf16.msra.mxu0 %v2021
  %2178 = vmatprep.subr.bf16.mxu0 0
  %2179 = vmatpush1.bf16.msra.mxu0 %v2024
  %2180 = vmatprep.subr.bf16.mxu0 0
  %2181 = vmatpush1.bf16.msra.mxu0 %v2027
  %2182 = vmatprep.subr.bf16.mxu0 0
  %2183 = vmatpush1.bf16.msra.mxu0 %v2030
  %2184 = vmatprep.subr.bf16.mxu0 0
  %2185 = vmatpush1.bf16.msra.mxu0 0
  %2186 = vmatprep.subr.bf16.mxu0 0
  %2187 = vmatpush1.bf16.msra.mxu0 0
  %2188 = vmatprep.subr.bf16.mxu0 0
  %2189 = vmatpush1.bf16.msra.mxu0 0
  %2190 = vmatprep.subr.bf16.mxu0 0
  %2191 = vmatpush1.bf16.msra.mxu0 0
  %2192 = vmatprep.subr.bf16.mxu0 0
  %2193 = vmatpush1.bf16.msra.mxu0 0
  %2194 = vmatprep.subr.bf16.mxu0 0
  %2195 = vmatpush1.bf16.msra.mxu0 0
  %2196 = vmatprep.subr.bf16.mxu0 0
  %2197 = vmatpush1.bf16.msra.mxu0 0
  %2198 = vmatprep.subr.bf16.mxu0 0
  %2199 = vmatpush1.bf16.msra.mxu0 0
  %2200 = vmatprep.mubr.bf16.mxu0 0
  %2201 = vmatmul.mubr.bf16.gmra.mrb[0].mxu0 %v1903
  %v2202 = vpop.f32.mrb[0].mxu0
  %v2203 = vadd.f32 %v1923, %v2202
  %v2204 = vpop.f32.mrb[0].mxu0
  %v2205 = vpop.f32.mrb[0].mxu0
  %v2206 = vadd.f32 %v1923, %v2205
  %v2207 = vpop.f32.mrb[0].mxu0
  %2208 = vmatprep.mubr.bf16.mxu0 0
  %2209 = vmatmul.mubr.bf16.gmra.mrb[0].mxu0 %v1904
  %v2210 = vpop.f32.mrb[0].mxu0
  %v2211 = vadd.f32 %v1923, %v2210
  %v2212 = vpop.f32.mrb[0].mxu0
  %v2213 = vpop.f32.mrb[0].mxu0
  %v2214 = vadd.f32 %v1923, %v2213
  %v2215 = vpop.f32.mrb[0].mxu0
  %2216 = vmatprep.mubr.bf16.mxu0 0
  %2217 = vmatmul.mubr.bf16.gmra.mrb[0].mxu0 %v1905
  %v2218 = vpop.f32.mrb[0].mxu0
  %v2219 = vadd.f32 %v1923, %v2218
  %v2220 = vpop.f32.mrb[0].mxu0
  %v2221 = vpop.f32.mrb[0].mxu0
  %v2222 = vadd.f32 %v1923, %v2221
  %v2223 = vpop.f32.mrb[0].mxu0
  %2224 = vmatprep.mubr.bf16.mxu0 0
  %2225 = vmatmul.mubr.bf16.gmra.mrb[0].mxu0 %v1906
  %v2226 = vpop.f32.mrb[0].mxu0
  %v2227 = vadd.f32 %v1923, %v2226
  %v2228 = vpop.f32.mrb[0].mxu0
  %v2229 = vpop.f32.mrb[0].mxu0
  %v2230 = vadd.f32 %v1923, %v2229
  %v2231 = vpop.f32.mrb[0].mxu0
  %2232 = vmatprep.mubr.bf16.mxu0 0
  %2233 = vmatmul.mubr.bf16.gmra.mrb[0].mxu0 %v1907
  %v2234 = vpop.f32.mrb[0].mxu0
  %v2235 = vadd.f32 %v1923, %v2234
  %v2236 = vpop.f32.mrb[0].mxu0
  %v2237 = vpop.f32.mrb[0].mxu0
  %v2238 = vadd.f32 %v1923, %v2237
  %v2239 = vpop.f32.mrb[0].mxu0
  %2240 = vmatprep.mubr.bf16.mxu0 0
  %2241 = vmatmul.mubr.bf16.gmra.mrb[0].mxu0 %v1908
  %v2242 = vpop.f32.mrb[0].mxu0
  %v2243 = vadd.f32 %v1923, %v2242
  %v2244 = vpop.f32.mrb[0].mxu0
  %v2245 = vpop.f32.mrb[0].mxu0
  %v2246 = vadd.f32 %v1923, %v2245
  %v2247 = vpop.f32.mrb[0].mxu0
  %2248 = vmatprep.mubr.bf16.mxu0 0
  %2249 = vmatmul.mubr.bf16.gmra.mrb[0].mxu0 %v1909
  %v2250 = vpop.f32.mrb[0].mxu0
  %v2251 = vadd.f32 %v1923, %v2250
  %v2252 = vpop.f32.mrb[0].mxu0
  %v2253 = vpop.f32.mrb[0].mxu0
  %v2254 = vadd.f32 %v1923, %v2253
  %v2255 = vpop.f32.mrb[0].mxu0
  %2256 = vmatprep.mubr.bf16.mxu0 0
  %2257 = vmatmul.mubr.bf16.gmra.mrb[0].mxu0 %v1910
  %v2258 = vpop.f32.mrb[0].mxu0
  %v2259 = vadd.f32 %v1923, %v2258
  %v2260 = vpop.f32.mrb[0].mxu0
  %v2261 = vpop.f32.mrb[0].mxu0
  %v2262 = vadd.f32 %v1923, %v2261
  %v2263 = vpop.f32.mrb[0].mxu0
  %2264 = vdwg.mxu0
  %2265 = vst [vmem:[#allocation3] sm:$0xff] %v2090
  %2266 = vst [vmem:[#allocation3 + $0x8] sm:$0xff] %v2092
  %2267 = vst [vmem:[#allocation3 + $0x10] sm:$0xff] %v2203
  %2268 = vst [vmem:[#allocation3 + $0x18] sm:$0xff] %v2094
  %2269 = vst [vmem:[#allocation3 + $0x20] sm:$0xff] %v2096
  %2270 = vst [vmem:[#allocation3 + $0x28] sm:$0xff] %v2206
  %2271 = vst [vmem:[#allocation3 + $0x30] sm:$0xff] %v2100
  %2272 = vst [vmem:[#allocation3 + $0x38] sm:$0xff] %v2102
  %2273 = vst [vmem:[#allocation3 + $0x40] sm:$0xff] %v2211
  %2274 = vst [vmem:[#allocation3 + $0x48] sm:$0xff] %v2104
  %2275 = vst [vmem:[#allocation3 + $0x50] sm:$0xff] %v2106
  %2276 = vst [vmem:[#allocation3 + $0x58] sm:$0xff] %v2214
  %2277 = vst [vmem:[#allocation3 + $0x60] sm:$0xff] %v2110
  %2278 = vst [vmem:[#allocation3 + $0x68] sm:$0xff] %v2112
  %2279 = vst [vmem:[#allocation3 + $0x70] sm:$0xff] %v2219
  %2280 = vst [vmem:[#allocation3 + $0x78] sm:$0xff] %v2114
  %2281 = vst [vmem:[#allocation3 + $0x80] sm:$0xff] %v2116
  %2282 = vst [vmem:[#allocation3 + $0x88] sm:$0xff] %v2222
  %2283 = vst [vmem:[#allocation3 + $0x90] sm:$0xff] %v2120
  %2284 = vst [vmem:[#allocation3 + $0x98] sm:$0xff] %v2122
  %2285 = vst [vmem:[#allocation3 + $0xa0] sm:$0xff] %v2227
  %2286 = vst [vmem:[#allocation3 + $0xa8] sm:$0xff] %v2124
  %2287 = vst [vmem:[#allocation3 + $0xb0] sm:$0xff] %v2126
  %2288 = vst [vmem:[#allocation3 + $0xb8] sm:$0xff] %v2230
  %2289 = vst [vmem:[#allocation3 + $0xc0] sm:$0xff] %v2130
  %2290 = vst [vmem:[#allocation3 + $0xc8] sm:$0xff] %v2132
  %2291 = vst [vmem:[#allocation3 + $0xd0] sm:$0xff] %v2235
  %2292 = vst [vmem:[#allocation3 + $0xd8] sm:$0xff] %v2134
  %2293 = vst [vmem:[#allocation3 + $0xe0] sm:$0xff] %v2136
  %2294 = vst [vmem:[#allocation3 + $0xe8] sm:$0xff] %v2238
  %2295 = vst [vmem:[#allocation3 + $0xf0] sm:$0xff] %v2140
  %2296 = vst [vmem:[#allocation3 + $0xf8] sm:$0xff] %v2142
  %2297 = vst [vmem:[#allocation3 + $0x100] sm:$0xff] %v2243
  %2298 = vst [vmem:[#allocation3 + $0x108] sm:$0xff] %v2144
  %2299 = vst [vmem:[#allocation3 + $0x110] sm:$0xff] %v2146
  %2300 = vst [vmem:[#allocation3 + $0x118] sm:$0xff] %v2246
  %2301 = vst [vmem:[#allocation3 + $0x120] sm:$0xff] %v2150
  %2302 = vst [vmem:[#allocation3 + $0x128] sm:$0xff] %v2152
  %2303 = vst [vmem:[#allocation3 + $0x130] sm:$0xff] %v2251
  %2304 = vst [vmem:[#allocation3 + $0x138] sm:$0xff] %v2154
  %2305 = vst [vmem:[#allocation3 + $0x140] sm:$0xff] %v2156
  %2306 = vst [vmem:[#allocation3 + $0x148] sm:$0xff] %v2254
  %2307 = vst [vmem:[#allocation3 + $0x150] sm:$0xff] %v2160
  %2308 = vst [vmem:[#allocation3 + $0x158] sm:$0xff] %v2162
  %2309 = vst [vmem:[#allocation3 + $0x160] sm:$0xff] %v2259
  %2310 = vst [vmem:[#allocation3 + $0x168] sm:$0xff] %v2164
  %2311 = vst [vmem:[#allocation3 + $0x170] sm:$0xff] %v2166
  %2312 = vst [vmem:[#allocation3 + $0x178] sm:$0xff] %v2262
  %v2313 = vld [vmem:[%s580] sm:$0xff]
  %v2314 = vld [vmem:[%s580 + $0x8] sm:$0xff]
  %v2315 = vld [vmem:[%s580 + $0x10] sm:$0xff]
  %v2316 = vld [vmem:[%s580 + $0x18] sm:$0xff]
  %v2317 = vld [vmem:[%s580 + $0x20] sm:$0xff]
  %v2318 = vld [vmem:[%s580 + $0x28] sm:$0xff]
  %v2319 = vpack.c.bf16 %v1902, %v1901
  %v2352 = vunpack.c.l.b16 %v1860
  %v2353 = vunpack.c.h.b16 %v1860
  %v2354 = vunpack.c.l.b16 %v1861
  %v2355 = vunpack.c.l.b16 %v1862
  %v2356 = vunpack.c.h.b16 %v1862
  %v2357 = vunpack.c.l.b16 %v1863
  %v2358 = vunpack.c.l.b16 %v1864
  %v2359 = vunpack.c.h.b16 %v1864
  %v2360 = vunpack.c.l.b16 %v1865
  %v2361 = vunpack.c.l.b16 %v1866
  %v2362 = vunpack.c.h.b16 %v1866
  %v2363 = vunpack.c.l.b16 %v1867
  %v2364 = vunpack.c.l.b16 %v1868
  %v2365 = vunpack.c.h.b16 %v1868
  %v2366 = vunpack.c.l.b16 %v1869
  %v2367 = vunpack.c.l.b16 %v1870
  %v2368 = vunpack.c.h.b16 %v1870
  %v2369 = vunpack.c.l.b16 %v1871
  %v2370 = vunpack.c.l.b16 %v1872
  %v2371 = vunpack.c.h.b16 %v1872
  %v2372 = vunpack.c.l.b16 %v1873
  %v2373 = vunpack.c.l.b16 %v1874
  %v2374 = vunpack.c.h.b16 %v1874
  %v2375 = vunpack.c.l.b16 %v1875
  %v2376 = vunpack.c.l.b16 %v1876
  %v2377 = vunpack.c.h.b16 %v1876
  %v2378 = vunpack.c.l.b16 %v1877
  %v2379 = vunpack.c.l.b16 %v1878
  %v2380 = vunpack.c.h.b16 %v1878
  %v2381 = vunpack.c.l.b16 %v1879
  %v2382 = vunpack.c.l.b16 %v1880
  %v2383 = vunpack.c.h.b16 %v1880
  %v2384 = vunpack.c.l.b16 %v1881
  %v2385 = vunpack.c.l.b16 %v1882
  %v2386 = vunpack.c.h.b16 %v1882
  %v2387 = vunpack.c.l.b16 %v1883
  %v2388 = vunpack.c.l.b16 %v1884
  %v2389 = vunpack.c.h.b16 %v1884
  %v2390 = vunpack.c.l.b16 %v1885
  %v2391 = vunpack.c.l.b16 %v1886
  %v2392 = vunpack.c.h.b16 %v1886
  %v2393 = vunpack.c.l.b16 %v1887
  %v2394 = vunpack.c.l.b16 %v1888
  %v2395 = vunpack.c.h.b16 %v1888
  %v2396 = vunpack.c.l.b16 %v1889
  %v2397 = vunpack.c.l.b16 %v1890
  %v2398 = vunpack.c.h.b16 %v1890
  %v2399 = vunpack.c.l.b16 %v1891
  %v2400 = vpack.c.b16 %v2355, %v2352
  %v2401 = vpack.c.b16 %v2356, %v2353
  %v2402 = vpack.c.b16 %v2357, %v2354
  %v2403 = vpack.c.b16 %v2361, %v2358
  %v2404 = vpack.c.b16 %v2362, %v2359
  %v2405 = vpack.c.b16 %v2363, %v2360
  %v2406 = vpack.c.b16 %v2367, %v2364
  %v2407 = vpack.c.b16 %v2368, %v2365
  %v2408 = vpack.c.b16 %v2369, %v2366
  %v2409 = vpack.c.b16 %v2373, %v2370
  %v2410 = vpack.c.b16 %v2374, %v2371
  %v2411 = vpack.c.b16 %v2375, %v2372
  %v2412 = vpack.c.b16 %v2379, %v2376
  %v2413 = vpack.c.b16 %v2380, %v2377
  %v2414 = vpack.c.b16 %v2381, %v2378
  %v2415 = vpack.c.b16 %v2385, %v2382
  %v2416 = vpack.c.b16 %v2386, %v2383
  %v2417 = vpack.c.b16 %v2387, %v2384
  %v2418 = vpack.c.b16 %v2391, %v2388
  %v2419 = vpack.c.b16 %v2392, %v2389
  %v2420 = vpack.c.b16 %v2393, %v2390
  %v2421 = vpack.c.b16 %v2397, %v2394
  %v2422 = vpack.c.b16 %v2398, %v2395
  %v2423 = vpack.c.b16 %v2399, %v2396
  %2448 = vmatprep.subr.bf16.mxu0 %v2401
  %2449 = vmatpush1.bf16.msra.mxu0 %v2400
  %2450 = vmatprep.subr.bf16.mxu0 %v2404
  %2451 = vmatpush1.bf16.msra.mxu0 %v2403
  %2452 = vmatprep.subr.bf16.mxu0 %v2407
  %2453 = vmatpush1.bf16.msra.mxu0 %v2406
  %2454 = vmatprep.subr.bf16.mxu0 %v2410
  %2455 = vmatpush1.bf16.msra.mxu0 %v2409
  %2456 = vmatprep.subr.bf16.mxu0 %v2413
  %2457 = vmatpush1.bf16.msra.mxu0 %v2412
  %2458 = vmatprep.subr.bf16.mxu0 %v2416
  %2459 = vmatpush1.bf16.msra.mxu0 %v2415
  %2460 = vmatprep.subr.bf16.mxu0 %v2419
  %2461 = vmatpush1.bf16.msra.mxu0 %v2418
  %2462 = vmatprep.subr.bf16.mxu0 %v2422
  %2463 = vmatpush1.bf16.msra.mxu0 %v2421
  %2464 = vmatprep.subr.bf16.mxu0 0
  %2465 = vmatpush1.bf16.msra.mxu0 0
  %2466 = vmatprep.subr.bf16.mxu0 0
  %2467 = vmatpush1.bf16.msra.mxu0 0
  %2468 = vmatprep.subr.bf16.mxu0 0
  %2469 = vmatpush1.bf16.msra.mxu0 0
  %2470 = vmatprep.subr.bf16.mxu0 0
  %2471 = vmatpush1.bf16.msra.mxu0 0
  %2472 = vmatprep.subr.bf16.mxu0 0
  %2473 = vmatpush1.bf16.msra.mxu0 0
  %2474 = vmatprep.subr.bf16.mxu0 0
  %2475 = vmatpush1.bf16.msra.mxu0 0
  %2476 = vmatprep.subr.bf16.mxu0 0
  %2477 = vmatpush1.bf16.msra.mxu0 0
  %2478 = vmatprep.subr.bf16.mxu0 0
  %2479 = vmatpush1.bf16.msra.mxu0 0
  %2480 = vmatprep.mubr.bf16.mxu0 0
  %2481 = vmatmul.mubr.bf16.gmra.mrb[0].mxu0 %v2319
  %v2482 = vpop.f32.mrb[0].mxu0
  %v2483 = vadd.f32 0.0, %v2482
  %v2484 = vpop.f32.mrb[0].mxu0
  %v2485 = vadd.f32 0.0, %v2484
  %v2486 = vpop.f32.mrb[0].mxu0
  %v2487 = vadd.f32 0.0, %v2486
  %v2488 = vpop.f32.mrb[0].mxu0
  %v2489 = vadd.f32 0.0, %v2488
  %2490 = vdwg.mxu0
  %2491 = vmatprep.subr.bf16.mxu0 0
  %2492 = vmatpush1.bf16.msra.mxu0 %v2402
  %2493 = vmatprep.subr.bf16.mxu0 0
  %2494 = vmatpush1.bf16.msra.mxu0 %v2405
  %2495 = vmatprep.subr.bf16.mxu0 0
  %2496 = vmatpush1.bf16.msra.mxu0 %v2408
  %2497 = vmatprep.subr.bf16.mxu0 0
  %2498 = vmatpush1.bf16.msra.mxu0 %v2411
  %2499 = vmatprep.subr.bf16.mxu0 0
  %2500 = vmatpush1.bf16.msra.mxu0 %v2414
  %2501 = vmatprep.subr.bf16.mxu0 0
  %2502 = vmatpush1.bf16.msra.mxu0 %v2417
  %2503 = vmatprep.subr.bf16.mxu0 0
  %2504 = vmatpush1.bf16.msra.mxu0 %v2420
  %2505 = vmatprep.subr.bf16.mxu0 0
  %2506 = vmatpush1.bf16.msra.mxu0 %v2423
  %2507 = vmatprep.subr.bf16.mxu0 0
  %2508 = vmatpush1.bf16.msra.mxu0 0
  %2509 = vmatprep.subr.bf16.mxu0 0
  %2510 = vmatpush1.bf16.msra.mxu0 0
  %2511 = vmatprep.subr.bf16.mxu0 0
  %2512 = vmatpush1.bf16.msra.mxu0 0
  %2513 = vmatprep.subr.bf16.mxu0 0
  %2514 = vmatpush1.bf16.msra.mxu0 0
  %2515 = vmatprep.subr.bf16.mxu0 0
  %2516 = vmatpush1.bf16.msra.mxu0 0
  %2517 = vmatprep.subr.bf16.mxu0 0
  %2518 = vmatpush1.bf16.msra.mxu0 0
  %2519 = vmatprep.subr.bf16.mxu0 0
  %2520 = vmatpush1.bf16.msra.mxu0 0
  %2521 = vmatprep.subr.bf16.mxu0 0
  %2522 = vmatpush1.bf16.msra.mxu0 0
  %2523 = vmatprep.mubr.bf16.mxu0 0
  %2524 = vmatmul.mubr.bf16.gmra.mrb[0].mxu0 %v2319
  %v2525 = vpop.f32.mrb[0].mxu0
  %v2526 = vadd.f32 0.0, %v2525
  %v2527 = vpop.f32.mrb[0].mxu0
  %v2528 = vpop.f32.mrb[0].mxu0
  %v2529 = vadd.f32 0.0, %v2528
  %v2530 = vpop.f32.mrb[0].mxu0
  %2531 = vdwg.mxu0
  %v2532 = vadd.f32 %v2526, %v1898
  %v2533 = vadd.f32 %v2529, %v1898
  %v2534 = vadd.f32 %v2313, %v2483
  %v2535 = vadd.f32 %v2316, %v2487
  %v2536 = vxor.u32 %v2534, 2147483648
  %v2537 = vxor.u32 %v2535, 2147483648
  %v2538 = vmul.f32 %v2536, 1.442695
  %v2539 = vpow.pop %v2538
  %v2540 = vmul.f32 %v2537, 1.442695
  %v2541 = vpow.pop %v2540
  %v2542 = vadd.f32 %v2539, 1.0
  %v2543 = vadd.f32 %v2541, 1.0
  %v2544 = vrcp.pop %v2542
  %v2545 = vmul.f32 1.0, %v2544
  %v2546 = vrcp.pop %v2543
  %v2547 = vmul.f32 1.0, %v2546
  %v2548 = vadd.f32 %v2314, %v2485
  %v2549 = vadd.f32 %v2317, %v2489
  %v2550 = vxor.u32 %v2548, 2147483648
  %v2551 = vxor.u32 %v2549, 2147483648
  %v2552 = vmul.f32 %v2550, 1.442695
  %v2553 = vpow.pop %v2552
  %v2554 = vmul.f32 %v2551, 1.442695
  %v2555 = vpow.pop %v2554
  %v2556 = vadd.f32 %v2553, 1.0
  %v2557 = vadd.f32 %v2555, 1.0
  %v2558 = vrcp.pop %v2556
  %v2559 = vmul.f32 1.0, %v2558
  %v2560 = vrcp.pop %v2557
  %v2561 = vmul.f32 1.0, %v2560
  %v2562 = vmul.f32 %v2545, %v2532
  %v2563 = vmul.f32 %v2547, %v2533
  %v2564 = vadd.f32 %v2315, %v2562
  %v2565 = vadd.f32 %v2318, %v2563
  %v2566 = vtanh.pop %v2564
  %v2567 = vtanh.pop %v2565
  %v2568 = vsub.f32 1.0, %v2559
  %v2569 = vsub.f32 1.0, %v2561
  %v2570 = vmul.f32 %v2568, %v2566
  %v2571 = vmul.f32 %v2569, %v2567
  %v2572 = vmul.f32 %v2559, %v1901
  %v2573 = vmul.f32 %v2561, %v1902
  %v2574 = vadd.f32 %v2570, %v2572
  %v2575 = vadd.f32 %v2571, %v2573
  %v2576 = vpack.c.bf16 %v2575, %v2574
  %v2578 = vunpack.c.l.b16 %v2576
  %v2579 = vunpack.c.h.b16 %v2576
  %v2580 = vpack.c.b16 %v2578, %v2578
  %v2581 = vpack.c.b16 %v2579, %v2579
  %2584 = vst [vmem:[%s10] sm:$0xf] %v2580
  %2585 = vst [vmem:[%s10 + $0x4] sm:$0xf] %v2581
  %v2586 = vld [vmem:[%s848] sm:$0xff]
  %v2587 = vld [vmem:[%s848 + $0x8] sm:$0xff]
  %v2588 = vld [vmem:[%s848 + $0x10] sm:$0xff]
  %v2589 = vld [vmem:[%s848 + $0x18] sm:$0xff]
  %v2590 = vld [vmem:[%s848 + $0x20] sm:$0xff]
  %v2591 = vld [vmem:[%s848 + $0x28] sm:$0xff]
  %2592 = vmatprep.subr.bf16.mxu0 %v2401
  %2593 = vmatpush1.bf16.msra.mxu0 %v2400
  %2594 = vmatprep.subr.bf16.mxu0 %v2404
  %2595 = vmatpush1.bf16.msra.mxu0 %v2403
  %2596 = vmatprep.subr.bf16.mxu0 %v2407
  %2597 = vmatpush1.bf16.msra.mxu0 %v2406
  %2598 = vmatprep.subr.bf16.mxu0 %v2410
  %2599 = vmatpush1.bf16.msra.mxu0 %v2409
  %2600 = vmatprep.subr.bf16.mxu0 %v2413
  %2601 = vmatpush1.bf16.msra.mxu0 %v2412
  %2602 = vmatprep.subr.bf16.mxu0 %v2416
  %2603 = vmatpush1.bf16.msra.mxu0 %v2415
  %2604 = vmatprep.subr.bf16.mxu0 %v2419
  %2605 = vmatpush1.bf16.msra.mxu0 %v2418
  %2606 = vmatprep.subr.bf16.mxu0 %v2422
  %2607 = vmatpush1.bf16.msra.mxu0 %v2421
  %2608 = vmatprep.subr.bf16.mxu0 0
  %2609 = vmatpush1.bf16.msra.mxu0 0
  %2610 = vmatprep.subr.bf16.mxu0 0
  %2611 = vmatpush1.bf16.msra.mxu0 0
  %2612 = vmatprep.subr.bf16.mxu0 0
  %2613 = vmatpush1.bf16.msra.mxu0 0
  %2614 = vmatprep.subr.bf16.mxu0 0
  %2615 = vmatpush1.bf16.msra.mxu0 0
  %2616 = vmatprep.subr.bf16.mxu0 0
  %2617 = vmatpush1.bf16.msra.mxu0 0
  %2618 = vmatprep.subr.bf16.mxu0 0
  %2619 = vmatpush1.bf16.msra.mxu0 0
  %2620 = vmatprep.subr.bf16.mxu0 0
  %2621 = vmatpush1.bf16.msra.mxu0 0
  %2622 = vmatprep.subr.bf16.mxu0 0
  %2623 = vmatpush1.bf16.msra.mxu0 0
  %2624 = vmatprep.mubr.bf16.mxu0 0
  %2625 = vmatmul.mubr.bf16.gmra.mrb[0].mxu0 %v2576
  %v2626 = vpop.f32.mrb[0].mxu0
  %v2627 = vadd.f32 0.0, %v2626
  %v2628 = vpop.f32.mrb[0].mxu0
  %v2629 = vadd.f32 0.0, %v2628
  %v2630 = vpop.f32.mrb[0].mxu0
  %v2631 = vadd.f32 0.0, %v2630
  %v2632 = vpop.f32.mrb[0].mxu0
  %v2633 = vadd.f32 0.0, %v2632
  %2634 = vdwg.mxu0
  %2635 = vmatprep.subr.bf16.mxu0 0
  %2636 = vmatpush1.bf16.msra.mxu0 %v2402
  %2637 = vmatprep.subr.bf16.mxu0 0
  %2638 = vmatpush1.bf16.msra.mxu0 %v2405
  %2639 = vmatprep.subr.bf16.mxu0 0
  %2640 = vmatpush1.bf16.msra.mxu0 %v2408
  %2641 = vmatprep.subr.bf16.mxu0 0
  %2642 = vmatpush1.bf16.msra.mxu0 %v2411
  %2643 = vmatprep.subr.bf16.mxu0 0
  %2644 = vmatpush1.bf16.msra.mxu0 %v2414
  %2645 = vmatprep.subr.bf16.mxu0 0
  %2646 = vmatpush1.bf16.msra.mxu0 %v2417
  %2647 = vmatprep.subr.bf16.mxu0 0
  %2648 = vmatpush1.bf16.msra.mxu0 %v2420
  %2649 = vmatprep.subr.bf16.mxu0 0
  %2650 = vmatpush1.bf16.msra.mxu0 %v2423
  %2651 = vmatprep.subr.bf16.mxu0 0
  %2652 = vmatpush1.bf16.msra.mxu0 0
  %2653 = vmatprep.subr.bf16.mxu0 0
  %2654 = vmatpush1.bf16.msra.mxu0 0
  %2655 = vmatprep.subr.bf16.mxu0 0
  %2656 = vmatpush1.bf16.msra.mxu0 0
  %2657 = vmatprep.subr.bf16.mxu0 0
  %2658 = vmatpush1.bf16.msra.mxu0 0
  %2659 = vmatprep.subr.bf16.mxu0 0
  %2660 = vmatpush1.bf16.msra.mxu0 0
  %2661 = vmatprep.subr.bf16.mxu0 0
  %2662 = vmatpush1.bf16.msra.mxu0 0
  %2663 = vmatprep.subr.bf16.mxu0 0
  %2664 = vmatpush1.bf16.msra.mxu0 0
  %2665 = vmatprep.subr.bf16.mxu0 0
  %2666 = vmatpush1.bf16.msra.mxu0 0
  %2667 = vmatprep.mubr.bf16.mxu0 0
  %2668 = vmatmul.mubr.bf16.gmra.mrb[0].mxu0 %v2576
  %v2669 = vpop.f32.mrb[0].mxu0
  %v2670 = vadd.f32 0.0, %v2669
  %v2671 = vpop.f32.mrb[0].mxu0
  %v2672 = vpop.f32.mrb[0].mxu0
  %v2673 = vadd.f32 0.0, %v2672
  %v2674 = vpop.f32.mrb[0].mxu0
  %2675 = vdwg.mxu0
  %v2676 = vadd.f32 %v2670, %v1898
  %v2677 = vadd.f32 %v2673, %v1898
  %v2678 = vadd.f32 %v2586, %v2627
  %v2679 = vadd.f32 %v2589, %v2631
  %v2680 = vxor.u32 %v2678, 2147483648
  %v2681 = vxor.u32 %v2679, 2147483648
  %v2682 = vmul.f32 %v2680, 1.442695
  %v2683 = vpow.pop %v2682
  %v2684 = vmul.f32 %v2681, 1.442695
  %v2685 = vpow.pop %v2684
  %v2686 = vadd.f32 %v2683, 1.0
  %v2687 = vadd.f32 %v2685, 1.0
  %v2688 = vrcp.pop %v2686
  %v2689 = vmul.f32 1.0, %v2688
  %v2690 = vrcp.pop %v2687
  %v2691 = vmul.f32 1.0, %v2690
  %v2692 = vadd.f32 %v2587, %v2629
  %v2693 = vadd.f32 %v2590, %v2633
  %v2694 = vxor.u32 %v2692, 2147483648
  %v2695 = vxor.u32 %v2693, 2147483648
  %v2696 = vmul.f32 %v2694, 1.442695
  %v2697 = vpow.pop %v2696
  %v2698 = vmul.f32 %v2695, 1.442695
  %v2699 = vpow.pop %v2698
  %v2700 = vadd.f32 %v2697, 1.0
  %v2701 = vadd.f32 %v2699, 1.0
  %v2702 = vrcp.pop %v2700
  %v2703 = vmul.f32 1.0, %v2702
  %v2704 = vrcp.pop %v2701
  %v2705 = vmul.f32 1.0, %v2704
  %v2706 = vmul.f32 %v2689, %v2676
  %v2707 = vmul.f32 %v2691, %v2677
  %v2708 = vadd.f32 %v2588, %v2706
  %v2709 = vadd.f32 %v2591, %v2707
  %v2710 = vtanh.pop %v2708
  %v2711 = vtanh.pop %v2709
  %v2712 = vsub.f32 1.0, %v2703
  %v2713 = vsub.f32 1.0, %v2705
  %v2714 = vmul.f32 %v2712, %v2710
  %v2715 = vmul.f32 %v2713, %v2711
  %v2716 = vmul.f32 %v2703, %v2574
  %v2717 = vmul.f32 %v2705, %v2575
  %v2718 = vadd.f32 %v2714, %v2716
  %v2719 = vadd.f32 %v2715, %v2717
  %v2720 = vpack.c.bf16 %v2719, %v2718
  %v2722 = vunpack.c.l.b16 %v2720
  %v2723 = vunpack.c.h.b16 %v2720
  %v2724 = vpack.c.b16 %v2722, %v2722
  %v2725 = vpack.c.b16 %v2723, %v2723
  %s2728 = scalar_lea.vmem %s10, 8
  %2729 = vst [vmem:[%s2728] sm:$0xf] %v2724
  %2730 = vst [vmem:[%s2728 + $0x4] sm:$0xf] %v2725
  %v2731 = vld [vmem:[%s988] sm:$0xff]
  %v2732 = vld [vmem:[%s988 + $0x8] sm:$0xff]
  %v2733 = vld [vmem:[%s988 + $0x10] sm:$0xff]
  %v2734 = vld [vmem:[%s988 + $0x18] sm:$0xff]
  %v2735 = vld [vmem:[%s988 + $0x20] sm:$0xff]
  %v2736 = vld [vmem:[%s988 + $0x28] sm:$0xff]
  %2737 = vmatprep.subr.bf16.mxu0 %v2401
  %2738 = vmatpush1.bf16.msra.mxu0 %v2400
  %2739 = vmatprep.subr.bf16.mxu0 %v2404
  %2740 = vmatpush1.bf16.msra.mxu0 %v2403
  %2741 = vmatprep.subr.bf16.mxu0 %v2407
  %2742 = vmatpush1.bf16.msra.mxu0 %v2406
  %2743 = vmatprep.subr.bf16.mxu0 %v2410
  %2744 = vmatpush1.bf16.msra.mxu0 %v2409
  %2745 = vmatprep.subr.bf16.mxu0 %v2413
  %2746 = vmatpush1.bf16.msra.mxu0 %v2412
  %2747 = vmatprep.subr.bf16.mxu0 %v2416
  %2748 = vmatpush1.bf16.msra.mxu0 %v2415
  %2749 = vmatprep.subr.bf16.mxu0 %v2419
  %2750 = vmatpush1.bf16.msra.mxu0 %v2418
  %2751 = vmatprep.subr.bf16.mxu0 %v2422
  %2752 = vmatpush1.bf16.msra.mxu0 %v2421
  %2753 = vmatprep.subr.bf16.mxu0 0
  %2754 = vmatpush1.bf16.msra.mxu0 0
  %2755 = vmatprep.subr.bf16.mxu0 0
  %2756 = vmatpush1.bf16.msra.mxu0 0
  %2757 = vmatprep.subr.bf16.mxu0 0
  %2758 = vmatpush1.bf16.msra.mxu0 0
  %2759 = vmatprep.subr.bf16.mxu0 0
  %2760 = vmatpush1.bf16.msra.mxu0 0
  %2761 = vmatprep.subr.bf16.mxu0 0
  %2762 = vmatpush1.bf16.msra.mxu0 0
  %2763 = vmatprep.subr.bf16.mxu0 0
  %2764 = vmatpush1.bf16.msra.mxu0 0
  %2765 = vmatprep.subr.bf16.mxu0 0
  %2766 = vmatpush1.bf16.msra.mxu0 0
  %2767 = vmatprep.subr.bf16.mxu0 0
  %2768 = vmatpush1.bf16.msra.mxu0 0
  %2769 = vmatprep.mubr.bf16.mxu0 0
  %2770 = vmatmul.mubr.bf16.gmra.mrb[0].mxu0 %v2720
  %v2771 = vpop.f32.mrb[0].mxu0
  %v2772 = vadd.f32 0.0, %v2771
  %v2773 = vpop.f32.mrb[0].mxu0
  %v2774 = vadd.f32 0.0, %v2773
  %v2775 = vpop.f32.mrb[0].mxu0
  %v2776 = vadd.f32 0.0, %v2775
  %v2777 = vpop.f32.mrb[0].mxu0
  %v2778 = vadd.f32 0.0, %v2777
  %2779 = vdwg.mxu0
  %2780 = vmatprep.subr.bf16.mxu0 0
  %2781 = vmatpush1.bf16.msra.mxu0 %v2402
  %2782 = vmatprep.subr.bf16.mxu0 0
  %2783 = vmatpush1.bf16.msra.mxu0 %v2405
  %2784 = vmatprep.subr.bf16.mxu0 0
  %2785 = vmatpush1.bf16.msra.mxu0 %v2408
  %2786 = vmatprep.subr.bf16.mxu0 0
  %2787 = vmatpush1.bf16.msra.mxu0 %v2411
  %2788 = vmatprep.subr.bf16.mxu0 0
  %2789 = vmatpush1.bf16.msra.mxu0 %v2414
  %2790 = vmatprep.subr.bf16.mxu0 0
  %2791 = vmatpush1.bf16.msra.mxu0 %v2417
  %2792 = vmatprep.subr.bf16.mxu0 0
  %2793 = vmatpush1.bf16.msra.mxu0 %v2420
  %2794 = vmatprep.subr.bf16.mxu0 0
  %2795 = vmatpush1.bf16.msra.mxu0 %v2423
  %2796 = vmatprep.subr.bf16.mxu0 0
  %2797 = vmatpush1.bf16.msra.mxu0 0
  %2798 = vmatprep.subr.bf16.mxu0 0
  %2799 = vmatpush1.bf16.msra.mxu0 0
  %2800 = vmatprep.subr.bf16.mxu0 0
  %2801 = vmatpush1.bf16.msra.mxu0 0
  %2802 = vmatprep.subr.bf16.mxu0 0
  %2803 = vmatpush1.bf16.msra.mxu0 0
  %2804 = vmatprep.subr.bf16.mxu0 0
  %2805 = vmatpush1.bf16.msra.mxu0 0
  %2806 = vmatprep.subr.bf16.mxu0 0
  %2807 = vmatpush1.bf16.msra.mxu0 0
  %2808 = vmatprep.subr.bf16.mxu0 0
  %2809 = vmatpush1.bf16.msra.mxu0 0
  %2810 = vmatprep.subr.bf16.mxu0 0
  %2811 = vmatpush1.bf16.msra.mxu0 0
  %2812 = vmatprep.mubr.bf16.mxu0 0
  %2813 = vmatmul.mubr.bf16.gmra.mrb[0].mxu0 %v2720
  %v2814 = vpop.f32.mrb[0].mxu0
  %v2815 = vadd.f32 0.0, %v2814
  %v2816 = vpop.f32.mrb[0].mxu0
  %v2817 = vpop.f32.mrb[0].mxu0
  %v2818 = vadd.f32 0.0, %v2817
  %v2819 = vpop.f32.mrb[0].mxu0
  %2820 = vdwg.mxu0
  %v2821 = vadd.f32 %v2815, %v1898
  %v2822 = vadd.f32 %v2818, %v1898
  %v2823 = vadd.f32 %v2731, %v2772
  %v2824 = vadd.f32 %v2734, %v2776
  %v2825 = vxor.u32 %v2823, 2147483648
  %v2826 = vxor.u32 %v2824, 2147483648
  %v2827 = vmul.f32 %v2825, 1.442695
  %v2828 = vpow.pop %v2827
  %v2829 = vmul.f32 %v2826, 1.442695
  %v2830 = vpow.pop %v2829
  %v2831 = vadd.f32 %v2828, 1.0
  %v2832 = vadd.f32 %v2830, 1.0
  %v2833 = vrcp.pop %v2831
  %v2834 = vmul.f32 1.0, %v2833
  %v2835 = vrcp.pop %v2832
  %v2836 = vmul.f32 1.0, %v2835
  %v2837 = vadd.f32 %v2732, %v2774
  %v2838 = vadd.f32 %v2735, %v2778
  %v2839 = vxor.u32 %v2837, 2147483648
  %v2840 = vxor.u32 %v2838, 2147483648
  %v2841 = vmul.f32 %v2839, 1.442695
  %v2842 = vpow.pop %v2841
  %v2843 = vmul.f32 %v2840, 1.442695
  %v2844 = vpow.pop %v2843
  %v2845 = vadd.f32 %v2842, 1.0
  %v2846 = vadd.f32 %v2844, 1.0
  %v2847 = vrcp.pop %v2845
  %v2848 = vmul.f32 1.0, %v2847
  %v2849 = vrcp.pop %v2846
  %v2850 = vmul.f32 1.0, %v2849
  %v2851 = vmul.f32 %v2834, %v2821
  %v2852 = vmul.f32 %v2836, %v2822
  %v2853 = vadd.f32 %v2733, %v2851
  %v2854 = vadd.f32 %v2736, %v2852
  %v2855 = vtanh.pop %v2853
  %v2856 = vtanh.pop %v2854
  %v2857 = vsub.f32 1.0, %v2848
  %v2858 = vsub.f32 1.0, %v2850
  %v2859 = vmul.f32 %v2857, %v2855
  %v2860 = vmul.f32 %v2858, %v2856
  %v2861 = vmul.f32 %v2848, %v2718
  %v2862 = vmul.f32 %v2850, %v2719
  %v2863 = vadd.f32 %v2859, %v2861
  %v2864 = vadd.f32 %v2860, %v2862
  %v2865 = vpack.c.bf16 %v2864, %v2863
  %v2867 = vunpack.c.l.b16 %v2865
  %v2868 = vunpack.c.h.b16 %v2865
  %v2869 = vpack.c.b16 %v2867, %v2867
  %v2870 = vpack.c.b16 %v2868, %v2868
  %s2873 = scalar_lea.vmem %s10, 16
  %2874 = vst [vmem:[%s2873] sm:$0xf] %v2869
  %2875 = vst [vmem:[%s2873 + $0x4] sm:$0xf] %v2870
  %v2876 = vld [vmem:[%s1128] sm:$0xff]
  %v2877 = vld [vmem:[%s1128 + $0x8] sm:$0xff]
  %v2878 = vld [vmem:[%s1128 + $0x10] sm:$0xff]
  %v2879 = vld [vmem:[%s1128 + $0x18] sm:$0xff]
  %v2880 = vld [vmem:[%s1128 + $0x20] sm:$0xff]
  %v2881 = vld [vmem:[%s1128 + $0x28] sm:$0xff]
  %2882 = vmatprep.subr.bf16.mxu0 %v2401
  %2883 = vmatpush1.bf16.msra.mxu0 %v2400
  %2884 = vmatprep.subr.bf16.mxu0 %v2404
  %2885 = vmatpush1.bf16.msra.mxu0 %v2403
  %2886 = vmatprep.subr.bf16.mxu0 %v2407
  %2887 = vmatpush1.bf16.msra.mxu0 %v2406
  %2888 = vmatprep.subr.bf16.mxu0 %v2410
  %2889 = vmatpush1.bf16.msra.mxu0 %v2409
  %2890 = vmatprep.subr.bf16.mxu0 %v2413
  %2891 = vmatpush1.bf16.msra.mxu0 %v2412
  %2892 = vmatprep.subr.bf16.mxu0 %v2416
  %2893 = vmatpush1.bf16.msra.mxu0 %v2415
  %2894 = vmatprep.subr.bf16.mxu0 %v2419
  %2895 = vmatpush1.bf16.msra.mxu0 %v2418
  %2896 = vmatprep.subr.bf16.mxu0 %v2422
  %2897 = vmatpush1.bf16.msra.mxu0 %v2421
  %2898 = vmatprep.subr.bf16.mxu0 0
  %2899 = vmatpush1.bf16.msra.mxu0 0
  %2900 = vmatprep.subr.bf16.mxu0 0
  %2901 = vmatpush1.bf16.msra.mxu0 0
  %2902 = vmatprep.subr.bf16.mxu0 0
  %2903 = vmatpush1.bf16.msra.mxu0 0
  %2904 = vmatprep.subr.bf16.mxu0 0
  %2905 = vmatpush1.bf16.msra.mxu0 0
  %2906 = vmatprep.subr.bf16.mxu0 0
  %2907 = vmatpush1.bf16.msra.mxu0 0
  %2908 = vmatprep.subr.bf16.mxu0 0
  %2909 = vmatpush1.bf16.msra.mxu0 0
  %2910 = vmatprep.subr.bf16.mxu0 0
  %2911 = vmatpush1.bf16.msra.mxu0 0
  %2912 = vmatprep.subr.bf16.mxu0 0
  %2913 = vmatpush1.bf16.msra.mxu0 0
  %2914 = vmatprep.mubr.bf16.mxu0 0
  %2915 = vmatmul.mubr.bf16.gmra.mrb[0].mxu0 %v2865
  %v2916 = vpop.f32.mrb[0].mxu0
  %v2917 = vadd.f32 0.0, %v2916
  %v2918 = vpop.f32.mrb[0].mxu0
  %v2919 = vadd.f32 0.0, %v2918
  %v2920 = vpop.f32.mrb[0].mxu0
  %v2921 = vadd.f32 0.0, %v2920
  %v2922 = vpop.f32.mrb[0].mxu0
  %v2923 = vadd.f32 0.0, %v2922
  %2924 = vdwg.mxu0
  %2925 = vmatprep.subr.bf16.mxu0 0
  %2926 = vmatpush1.bf16.msra.mxu0 %v2402
  %2927 = vmatprep.subr.bf16.mxu0 0
  %2928 = vmatpush1.bf16.msra.mxu0 %v2405
  %2929 = vmatprep.subr.bf16.mxu0 0
  %2930 = vmatpush1.bf16.msra.mxu0 %v2408
  %2931 = vmatprep.subr.bf16.mxu0 0
  %2932 = vmatpush1.bf16.msra.mxu0 %v2411
  %2933 = vmatprep.subr.bf16.mxu0 0
  %2934 = vmatpush1.bf16.msra.mxu0 %v2414
  %2935 = vmatprep.subr.bf16.mxu0 0
  %2936 = vmatpush1.bf16.msra.mxu0 %v2417
  %2937 = vmatprep.subr.bf16.mxu0 0
  %2938 = vmatpush1.bf16.msra.mxu0 %v2420
  %2939 = vmatprep.subr.bf16.mxu0 0
  %2940 = vmatpush1.bf16.msra.mxu0 %v2423
  %2941 = vmatprep.subr.bf16.mxu0 0
  %2942 = vmatpush1.bf16.msra.mxu0 0
  %2943 = vmatprep.subr.bf16.mxu0 0
  %2944 = vmatpush1.bf16.msra.mxu0 0
  %2945 = vmatprep.subr.bf16.mxu0 0
  %2946 = vmatpush1.bf16.msra.mxu0 0
  %2947 = vmatprep.subr.bf16.mxu0 0
  %2948 = vmatpush1.bf16.msra.mxu0 0
  %2949 = vmatprep.subr.bf16.mxu0 0
  %2950 = vmatpush1.bf16.msra.mxu0 0
  %2951 = vmatprep.subr.bf16.mxu0 0
  %2952 = vmatpush1.bf16.msra.mxu0 0
  %2953 = vmatprep.subr.bf16.mxu0 0
  %2954 = vmatpush1.bf16.msra.mxu0 0
  %2955 = vmatprep.subr.bf16.mxu0 0
  %2956 = vmatpush1.bf16.msra.mxu0 0
  %2957 = vmatprep.mubr.bf16.mxu0 0
  %2958 = vmatmul.mubr.bf16.gmra.mrb[0].mxu0 %v2865
  %v2959 = vpop.f32.mrb[0].mxu0
  %v2960 = vadd.f32 0.0, %v2959
  %v2961 = vpop.f32.mrb[0].mxu0
  %v2962 = vpop.f32.mrb[0].mxu0
  %v2963 = vadd.f32 0.0, %v2962
  %v2964 = vpop.f32.mrb[0].mxu0
  %2965 = vdwg.mxu0
  %v2966 = vadd.f32 %v2960, %v1898
  %v2967 = vadd.f32 %v2963, %v1898
  %v2968 = vadd.f32 %v2876, %v2917
  %v2969 = vadd.f32 %v2879, %v2921
  %v2970 = vxor.u32 %v2968, 2147483648
  %v2971 = vxor.u32 %v2969, 2147483648
  %v2972 = vmul.f32 %v2970, 1.442695
  %v2973 = vpow.pop %v2972
  %v2974 = vmul.f32 %v2971, 1.442695
  %v2975 = vpow.pop %v2974
  %v2976 = vadd.f32 %v2973, 1.0
  %v2977 = vadd.f32 %v2975, 1.0
  %v2978 = vrcp.pop %v2976
  %v2979 = vmul.f32 1.0, %v2978
  %v2980 = vrcp.pop %v2977
  %v2981 = vmul.f32 1.0, %v2980
  %v2982 = vadd.f32 %v2877, %v2919
  %v2983 = vadd.f32 %v2880, %v2923
  %v2984 = vxor.u32 %v2982, 2147483648
  %v2985 = vxor.u32 %v2983, 2147483648
  %v2986 = vmul.f32 %v2984, 1.442695
  %v2987 = vpow.pop %v2986
  %v2988 = vmul.f32 %v2985, 1.442695
  %v2989 = vpow.pop %v2988
  %v2990 = vadd.f32 %v2987, 1.0
  %v2991 = vadd.f32 %v2989, 1.0
  %v2992 = vrcp.pop %v2990
  %v2993 = vmul.f32 1.0, %v2992
  %v2994 = vrcp.pop %v2991
  %v2995 = vmul.f32 1.0, %v2994
  %v2996 = vmul.f32 %v2979, %v2966
  %v2997 = vmul.f32 %v2981, %v2967
  %v2998 = vadd.f32 %v2878, %v2996
  %v2999 = vadd.f32 %v2881, %v2997
  %v3000 = vtanh.pop %v2998
  %v3001 = vtanh.pop %v2999
  %v3002 = vsub.f32 1.0, %v2993
  %v3003 = vsub.f32 1.0, %v2995
  %v3004 = vmul.f32 %v3002, %v3000
  %v3005 = vmul.f32 %v3003, %v3001
  %v3006 = vmul.f32 %v2993, %v2863
  %v3007 = vmul.f32 %v2995, %v2864
  %v3008 = vadd.f32 %v3004, %v3006
  %v3009 = vadd.f32 %v3005, %v3007
  %v3010 = vpack.c.bf16 %v3009, %v3008
  %v3012 = vunpack.c.l.b16 %v3010
  %v3013 = vunpack.c.h.b16 %v3010
  %v3014 = vpack.c.b16 %v3012, %v3012
  %v3015 = vpack.c.b16 %v3013, %v3013
  %s3018 = scalar_lea.vmem %s10, 24
  %3019 = vst [vmem:[%s3018] sm:$0xf] %v3014
  %3020 = vst [vmem:[%s3018 + $0x4] sm:$0xf] %v3015
  %v3021 = vld [vmem:[%s1268] sm:$0xff]
  %v3022 = vld [vmem:[%s1268 + $0x8] sm:$0xff]
  %v3023 = vld [vmem:[%s1268 + $0x10] sm:$0xff]
  %v3024 = vld [vmem:[%s1268 + $0x18] sm:$0xff]
  %v3025 = vld [vmem:[%s1268 + $0x20] sm:$0xff]
  %v3026 = vld [vmem:[%s1268 + $0x28] sm:$0xff]
  %3027 = vmatprep.subr.bf16.mxu0 %v2401
  %3028 = vmatpush1.bf16.msra.mxu0 %v2400
  %3029 = vmatprep.subr.bf16.mxu0 %v2404
  %3030 = vmatpush1.bf16.msra.mxu0 %v2403
  %3031 = vmatprep.subr.bf16.mxu0 %v2407
  %3032 = vmatpush1.bf16.msra.mxu0 %v2406
  %3033 = vmatprep.subr.bf16.mxu0 %v2410
  %3034 = vmatpush1.bf16.msra.mxu0 %v2409
  %3035 = vmatprep.subr.bf16.mxu0 %v2413
  %3036 = vmatpush1.bf16.msra.mxu0 %v2412
  %3037 = vmatprep.subr.bf16.mxu0 %v2416
  %3038 = vmatpush1.bf16.msra.mxu0 %v2415
  %3039 = vmatprep.subr.bf16.mxu0 %v2419
  %3040 = vmatpush1.bf16.msra.mxu0 %v2418
  %3041 = vmatprep.subr.bf16.mxu0 %v2422
  %3042 = vmatpush1.bf16.msra.mxu0 %v2421
  %3043 = vmatprep.subr.bf16.mxu0 0
  %3044 = vmatpush1.bf16.msra.mxu0 0
  %3045 = vmatprep.subr.bf16.mxu0 0
  %3046 = vmatpush1.bf16.msra.mxu0 0
  %3047 = vmatprep.subr.bf16.mxu0 0
  %3048 = vmatpush1.bf16.msra.mxu0 0
  %3049 = vmatprep.subr.bf16.mxu0 0
  %3050 = vmatpush1.bf16.msra.mxu0 0
  %3051 = vmatprep.subr.bf16.mxu0 0
  %3052 = vmatpush1.bf16.msra.mxu0 0
  %3053 = vmatprep.subr.bf16.mxu0 0
  %3054 = vmatpush1.bf16.msra.mxu0 0
  %3055 = vmatprep.subr.bf16.mxu0 0
  %3056 = vmatpush1.bf16.msra.mxu0 0
  %3057 = vmatprep.subr.bf16.mxu0 0
  %3058 = vmatpush1.bf16.msra.mxu0 0
  %3059 = vmatprep.mubr.bf16.mxu0 0
  %3060 = vmatmul.mubr.bf16.gmra.mrb[0].mxu0 %v3010
  %v3061 = vpop.f32.mrb[0].mxu0
  %v3062 = vadd.f32 0.0, %v3061
  %v3063 = vpop.f32.mrb[0].mxu0
  %v3064 = vadd.f32 0.0, %v3063
  %v3065 = vpop.f32.mrb[0].mxu0
  %v3066 = vadd.f32 0.0, %v3065
  %v3067 = vpop.f32.mrb[0].mxu0
  %v3068 = vadd.f32 0.0, %v3067
  %3069 = vdwg.mxu0
  %3070 = vmatprep.subr.bf16.mxu0 0
  %3071 = vmatpush1.bf16.msra.mxu0 %v2402
  %3072 = vmatprep.subr.bf16.mxu0 0
  %3073 = vmatpush1.bf16.msra.mxu0 %v2405
  %3074 = vmatprep.subr.bf16.mxu0 0
  %3075 = vmatpush1.bf16.msra.mxu0 %v2408
  %3076 = vmatprep.subr.bf16.mxu0 0
  %3077 = vmatpush1.bf16.msra.mxu0 %v2411
  %3078 = vmatprep.subr.bf16.mxu0 0
  %3079 = vmatpush1.bf16.msra.mxu0 %v2414
  %3080 = vmatprep.subr.bf16.mxu0 0
  %3081 = vmatpush1.bf16.msra.mxu0 %v2417
  %3082 = vmatprep.subr.bf16.mxu0 0
  %3083 = vmatpush1.bf16.msra.mxu0 %v2420
  %3084 = vmatprep.subr.bf16.mxu0 0
  %3085 = vmatpush1.bf16.msra.mxu0 %v2423
  %3086 = vmatprep.subr.bf16.mxu0 0
  %3087 = vmatpush1.bf16.msra.mxu0 0
  %3088 = vmatprep.subr.bf16.mxu0 0
  %3089 = vmatpush1.bf16.msra.mxu0 0
  %3090 = vmatprep.subr.bf16.mxu0 0
  %3091 = vmatpush1.bf16.msra.mxu0 0
  %3092 = vmatprep.subr.bf16.mxu0 0
  %3093 = vmatpush1.bf16.msra.mxu0 0
  %3094 = vmatprep.subr.bf16.mxu0 0
  %3095 = vmatpush1.bf16.msra.mxu0 0
  %3096 = vmatprep.subr.bf16.mxu0 0
  %3097 = vmatpush1.bf16.msra.mxu0 0
  %3098 = vmatprep.subr.bf16.mxu0 0
  %3099 = vmatpush1.bf16.msra.mxu0 0
  %3100 = vmatprep.subr.bf16.mxu0 0
  %3101 = vmatpush1.bf16.msra.mxu0 0
  %3102 = vmatprep.mubr.bf16.mxu0 0
  %3103 = vmatmul.mubr.bf16.gmra.mrb[0].mxu0 %v3010
  %v3104 = vpop.f32.mrb[0].mxu0
  %v3105 = vadd.f32 0.0, %v3104
  %v3106 = vpop.f32.mrb[0].mxu0
  %v3107 = vpop.f32.mrb[0].mxu0
  %v3108 = vadd.f32 0.0, %v3107
  %v3109 = vpop.f32.mrb[0].mxu0
  %3110 = vdwg.mxu0
  %v3111 = vadd.f32 %v3105, %v1898
  %v3112 = vadd.f32 %v3108, %v1898
  %v3113 = vadd.f32 %v3021, %v3062
  %v3114 = vadd.f32 %v3024, %v3066
  %v3115 = vxor.u32 %v3113, 2147483648
  %v3116 = vxor.u32 %v3114, 2147483648
  %v3117 = vmul.f32 %v3115, 1.442695
  %v3118 = vpow.pop %v3117
  %v3119 = vmul.f32 %v3116, 1.442695
  %v3120 = vpow.pop %v3119
  %v3121 = vadd.f32 %v3118, 1.0
  %v3122 = vadd.f32 %v3120, 1.0
  %v3123 = vrcp.pop %v3121
  %v3124 = vmul.f32 1.0, %v3123
  %v3125 = vrcp.pop %v3122
  %v3126 = vmul.f32 1.0, %v3125
  %v3127 = vadd.f32 %v3022, %v3064
  %v3128 = vadd.f32 %v3025, %v3068
  %v3129 = vxor.u32 %v3127, 2147483648
  %v3130 = vxor.u32 %v3128, 2147483648
  %v3131 = vmul.f32 %v3129, 1.442695
  %v3132 = vpow.pop %v3131
  %v3133 = vmul.f32 %v3130, 1.442695
  %v3134 = vpow.pop %v3133
  %v3135 = vadd.f32 %v3132, 1.0
  %v3136 = vadd.f32 %v3134, 1.0
  %v3137 = vrcp.pop %v3135
  %v3138 = vmul.f32 1.0, %v3137
  %v3139 = vrcp.pop %v3136
  %v3140 = vmul.f32 1.0, %v3139
  %v3141 = vmul.f32 %v3124, %v3111
  %v3142 = vmul.f32 %v3126, %v3112
  %v3143 = vadd.f32 %v3023, %v3141
  %v3144 = vadd.f32 %v3026, %v3142
  %v3145 = vtanh.pop %v3143
  %v3146 = vtanh.pop %v3144
  %v3147 = vsub.f32 1.0, %v3138
  %v3148 = vsub.f32 1.0, %v3140
  %v3149 = vmul.f32 %v3147, %v3145
  %v3150 = vmul.f32 %v3148, %v3146
  %v3151 = vmul.f32 %v3138, %v3008
  %v3152 = vmul.f32 %v3140, %v3009
  %v3153 = vadd.f32 %v3149, %v3151
  %v3154 = vadd.f32 %v3150, %v3152
  %v3155 = vpack.c.bf16 %v3154, %v3153
  %v3157 = vunpack.c.l.b16 %v3155
  %v3158 = vunpack.c.h.b16 %v3155
  %v3159 = vpack.c.b16 %v3157, %v3157
  %v3160 = vpack.c.b16 %v3158, %v3158
  %s3163 = scalar_lea.vmem %s10, 32
  %3164 = vst [vmem:[%s3163] sm:$0xf] %v3159
  %3165 = vst [vmem:[%s3163 + $0x4] sm:$0xf] %v3160
  %v3166 = vld [vmem:[%s1408] sm:$0xff]
  %v3167 = vld [vmem:[%s1408 + $0x8] sm:$0xff]
  %v3168 = vld [vmem:[%s1408 + $0x10] sm:$0xff]
  %v3169 = vld [vmem:[%s1408 + $0x18] sm:$0xff]
  %v3170 = vld [vmem:[%s1408 + $0x20] sm:$0xff]
  %v3171 = vld [vmem:[%s1408 + $0x28] sm:$0xff]
  %3172 = vmatprep.subr.bf16.mxu0 %v2401
  %3173 = vmatpush1.bf16.msra.mxu0 %v2400
  %3174 = vmatprep.subr.bf16.mxu0 %v2404
  %3175 = vmatpush1.bf16.msra.mxu0 %v2403
  %3176 = vmatprep.subr.bf16.mxu0 %v2407
  %3177 = vmatpush1.bf16.msra.mxu0 %v2406
  %3178 = vmatprep.subr.bf16.mxu0 %v2410
  %3179 = vmatpush1.bf16.msra.mxu0 %v2409
  %3180 = vmatprep.subr.bf16.mxu0 %v2413
  %3181 = vmatpush1.bf16.msra.mxu0 %v2412
  %3182 = vmatprep.subr.bf16.mxu0 %v2416
  %3183 = vmatpush1.bf16.msra.mxu0 %v2415
  %3184 = vmatprep.subr.bf16.mxu0 %v2419
  %3185 = vmatpush1.bf16.msra.mxu0 %v2418
  %3186 = vmatprep.subr.bf16.mxu0 %v2422
  %3187 = vmatpush1.bf16.msra.mxu0 %v2421
  %3188 = vmatprep.subr.bf16.mxu0 0
  %3189 = vmatpush1.bf16.msra.mxu0 0
  %3190 = vmatprep.subr.bf16.mxu0 0
  %3191 = vmatpush1.bf16.msra.mxu0 0
  %3192 = vmatprep.subr.bf16.mxu0 0
  %3193 = vmatpush1.bf16.msra.mxu0 0
  %3194 = vmatprep.subr.bf16.mxu0 0
  %3195 = vmatpush1.bf16.msra.mxu0 0
  %3196 = vmatprep.subr.bf16.mxu0 0
  %3197 = vmatpush1.bf16.msra.mxu0 0
  %3198 = vmatprep.subr.bf16.mxu0 0
  %3199 = vmatpush1.bf16.msra.mxu0 0
  %3200 = vmatprep.subr.bf16.mxu0 0
  %3201 = vmatpush1.bf16.msra.mxu0 0
  %3202 = vmatprep.subr.bf16.mxu0 0
  %3203 = vmatpush1.bf16.msra.mxu0 0
  %3204 = vmatprep.mubr.bf16.mxu0 0
  %3205 = vmatmul.mubr.bf16.gmra.mrb[0].mxu0 %v3155
  %v3206 = vpop.f32.mrb[0].mxu0
  %v3207 = vadd.f32 0.0, %v3206
  %v3208 = vpop.f32.mrb[0].mxu0
  %v3209 = vadd.f32 0.0, %v3208
  %v3210 = vpop.f32.mrb[0].mxu0
  %v3211 = vadd.f32 0.0, %v3210
  %v3212 = vpop.f32.mrb[0].mxu0
  %v3213 = vadd.f32 0.0, %v3212
  %3214 = vdwg.mxu0
  %3215 = vmatprep.subr.bf16.mxu0 0
  %3216 = vmatpush1.bf16.msra.mxu0 %v2402
  %3217 = vmatprep.subr.bf16.mxu0 0
  %3218 = vmatpush1.bf16.msra.mxu0 %v2405
  %3219 = vmatprep.subr.bf16.mxu0 0
  %3220 = vmatpush1.bf16.msra.mxu0 %v2408
  %3221 = vmatprep.subr.bf16.mxu0 0
  %3222 = vmatpush1.bf16.msra.mxu0 %v2411
  %3223 = vmatprep.subr.bf16.mxu0 0
  %3224 = vmatpush1.bf16.msra.mxu0 %v2414
  %3225 = vmatprep.subr.bf16.mxu0 0
  %3226 = vmatpush1.bf16.msra.mxu0 %v2417
  %3227 = vmatprep.subr.bf16.mxu0 0
  %3228 = vmatpush1.bf16.msra.mxu0 %v2420
  %3229 = vmatprep.subr.bf16.mxu0 0
  %3230 = vmatpush1.bf16.msra.mxu0 %v2423
  %3231 = vmatprep.subr.bf16.mxu0 0
  %3232 = vmatpush1.bf16.msra.mxu0 0
  %3233 = vmatprep.subr.bf16.mxu0 0
  %3234 = vmatpush1.bf16.msra.mxu0 0
  %3235 = vmatprep.subr.bf16.mxu0 0
  %3236 = vmatpush1.bf16.msra.mxu0 0
  %3237 = vmatprep.subr.bf16.mxu0 0
  %3238 = vmatpush1.bf16.msra.mxu0 0
  %3239 = vmatprep.subr.bf16.mxu0 0
  %3240 = vmatpush1.bf16.msra.mxu0 0
  %3241 = vmatprep.subr.bf16.mxu0 0
  %3242 = vmatpush1.bf16.msra.mxu0 0
  %3243 = vmatprep.subr.bf16.mxu0 0
  %3244 = vmatpush1.bf16.msra.mxu0 0
  %3245 = vmatprep.subr.bf16.mxu0 0
  %3246 = vmatpush1.bf16.msra.mxu0 0
  %3247 = vmatprep.mubr.bf16.mxu0 0
  %3248 = vmatmul.mubr.bf16.gmra.mrb[0].mxu0 %v3155
  %v3249 = vpop.f32.mrb[0].mxu0
  %v3250 = vadd.f32 0.0, %v3249
  %v3251 = vpop.f32.mrb[0].mxu0
  %v3252 = vpop.f32.mrb[0].mxu0
  %v3253 = vadd.f32 0.0, %v3252
  %v3254 = vpop.f32.mrb[0].mxu0
  %3255 = vdwg.mxu0
  %v3256 = vadd.f32 %v3250, %v1898
  %v3257 = vadd.f32 %v3253, %v1898
  %v3258 = vadd.f32 %v3166, %v3207
  %v3259 = vadd.f32 %v3169, %v3211
  %v3260 = vxor.u32 %v3258, 2147483648
  %v3261 = vxor.u32 %v3259, 2147483648
  %v3262 = vmul.f32 %v3260, 1.442695
  %v3263 = vpow.pop %v3262
  %v3264 = vmul.f32 %v3261, 1.442695
  %v3265 = vpow.pop %v3264
  %v3266 = vadd.f32 %v3263, 1.0
  %v3267 = vadd.f32 %v3265, 1.0
  %v3268 = vrcp.pop %v3266
  %v3269 = vmul.f32 1.0, %v3268
  %v3270 = vrcp.pop %v3267
  %v3271 = vmul.f32 1.0, %v3270
  %v3272 = vadd.f32 %v3167, %v3209
  %v3273 = vadd.f32 %v3170, %v3213
  %v3274 = vxor.u32 %v3272, 2147483648
  %v3275 = vxor.u32 %v3273, 2147483648
  %v3276 = vmul.f32 %v3274, 1.442695
  %v3277 = vpow.pop %v3276
  %v3278 = vmul.f32 %v3275, 1.442695
  %v3279 = vpow.pop %v3278
  %v3280 = vadd.f32 %v3277, 1.0
  %v3281 = vadd.f32 %v3279, 1.0
  %v3282 = vrcp.pop %v3280
  %v3283 = vmul.f32 1.0, %v3282
  %v3284 = vrcp.pop %v3281
  %v3285 = vmul.f32 1.0, %v3284
  %v3286 = vmul.f32 %v3269, %v3256
  %v3287 = vmul.f32 %v3271, %v3257
  %v3288 = vadd.f32 %v3168, %v3286
  %v3289 = vadd.f32 %v3171, %v3287
  %v3290 = vtanh.pop %v3288
  %v3291 = vtanh.pop %v3289
  %v3292 = vsub.f32 1.0, %v3283
  %v3293 = vsub.f32 1.0, %v3285
  %v3294 = vmul.f32 %v3292, %v3290
  %v3295 = vmul.f32 %v3293, %v3291
  %v3296 = vmul.f32 %v3283, %v3153
  %v3297 = vmul.f32 %v3285, %v3154
  %v3298 = vadd.f32 %v3294, %v3296
  %v3299 = vadd.f32 %v3295, %v3297
  %v3300 = vpack.c.bf16 %v3299, %v3298
  %v3302 = vunpack.c.l.b16 %v3300
  %v3303 = vunpack.c.h.b16 %v3300
  %v3304 = vpack.c.b16 %v3302, %v3302
  %v3305 = vpack.c.b16 %v3303, %v3303
  %s3308 = scalar_lea.vmem %s10, 40
  %3309 = vst [vmem:[%s3308] sm:$0xf] %v3304
  %3310 = vst [vmem:[%s3308 + $0x4] sm:$0xf] %v3305
  %v3311 = vld [vmem:[%s1548] sm:$0xff]
  %v3312 = vld [vmem:[%s1548 + $0x8] sm:$0xff]
  %v3313 = vld [vmem:[%s1548 + $0x10] sm:$0xff]
  %v3314 = vld [vmem:[%s1548 + $0x18] sm:$0xff]
  %v3315 = vld [vmem:[%s1548 + $0x20] sm:$0xff]
  %v3316 = vld [vmem:[%s1548 + $0x28] sm:$0xff]
  %3317 = vmatprep.subr.bf16.mxu0 %v2401
  %3318 = vmatpush1.bf16.msra.mxu0 %v2400
  %3319 = vmatprep.subr.bf16.mxu0 %v2404
  %3320 = vmatpush1.bf16.msra.mxu0 %v2403
  %3321 = vmatprep.subr.bf16.mxu0 %v2407
  %3322 = vmatpush1.bf16.msra.mxu0 %v2406
  %3323 = vmatprep.subr.bf16.mxu0 %v2410
  %3324 = vmatpush1.bf16.msra.mxu0 %v2409
  %3325 = vmatprep.subr.bf16.mxu0 %v2413
  %3326 = vmatpush1.bf16.msra.mxu0 %v2412
  %3327 = vmatprep.subr.bf16.mxu0 %v2416
  %3328 = vmatpush1.bf16.msra.mxu0 %v2415
  %3329 = vmatprep.subr.bf16.mxu0 %v2419
  %3330 = vmatpush1.bf16.msra.mxu0 %v2418
  %3331 = vmatprep.subr.bf16.mxu0 %v2422
  %3332 = vmatpush1.bf16.msra.mxu0 %v2421
  %3333 = vmatprep.subr.bf16.mxu0 0
  %3334 = vmatpush1.bf16.msra.mxu0 0
  %3335 = vmatprep.subr.bf16.mxu0 0
  %3336 = vmatpush1.bf16.msra.mxu0 0
  %3337 = vmatprep.subr.bf16.mxu0 0
  %3338 = vmatpush1.bf16.msra.mxu0 0
  %3339 = vmatprep.subr.bf16.mxu0 0
  %3340 = vmatpush1.bf16.msra.mxu0 0
  %3341 = vmatprep.subr.bf16.mxu0 0
  %3342 = vmatpush1.bf16.msra.mxu0 0
  %3343 = vmatprep.subr.bf16.mxu0 0
  %3344 = vmatpush1.bf16.msra.mxu0 0
  %3345 = vmatprep.subr.bf16.mxu0 0
  %3346 = vmatpush1.bf16.msra.mxu0 0
  %3347 = vmatprep.subr.bf16.mxu0 0
  %3348 = vmatpush1.bf16.msra.mxu0 0
  %3349 = vmatprep.mubr.bf16.mxu0 0
  %3350 = vmatmul.mubr.bf16.gmra.mrb[0].mxu0 %v3300
  %v3351 = vpop.f32.mrb[0].mxu0
  %v3352 = vadd.f32 0.0, %v3351
  %v3353 = vpop.f32.mrb[0].mxu0
  %v3354 = vadd.f32 0.0, %v3353
  %v3355 = vpop.f32.mrb[0].mxu0
  %v3356 = vadd.f32 0.0, %v3355
  %v3357 = vpop.f32.mrb[0].mxu0
  %v3358 = vadd.f32 0.0, %v3357
  %3359 = vdwg.mxu0
  %3360 = vmatprep.subr.bf16.mxu0 0
  %3361 = vmatpush1.bf16.msra.mxu0 %v2402
  %3362 = vmatprep.subr.bf16.mxu0 0
  %3363 = vmatpush1.bf16.msra.mxu0 %v2405
  %3364 = vmatprep.subr.bf16.mxu0 0
  %3365 = vmatpush1.bf16.msra.mxu0 %v2408
  %3366 = vmatprep.subr.bf16.mxu0 0
  %3367 = vmatpush1.bf16.msra.mxu0 %v2411
  %3368 = vmatprep.subr.bf16.mxu0 0
  %3369 = vmatpush1.bf16.msra.mxu0 %v2414
  %3370 = vmatprep.subr.bf16.mxu0 0
  %3371 = vmatpush1.bf16.msra.mxu0 %v2417
  %3372 = vmatprep.subr.bf16.mxu0 0
  %3373 = vmatpush1.bf16.msra.mxu0 %v2420
  %3374 = vmatprep.subr.bf16.mxu0 0
  %3375 = vmatpush1.bf16.msra.mxu0 %v2423
  %3376 = vmatprep.subr.bf16.mxu0 0
  %3377 = vmatpush1.bf16.msra.mxu0 0
  %3378 = vmatprep.subr.bf16.mxu0 0
  %3379 = vmatpush1.bf16.msra.mxu0 0
  %3380 = vmatprep.subr.bf16.mxu0 0
  %3381 = vmatpush1.bf16.msra.mxu0 0
  %3382 = vmatprep.subr.bf16.mxu0 0
  %3383 = vmatpush1.bf16.msra.mxu0 0
  %3384 = vmatprep.subr.bf16.mxu0 0
  %3385 = vmatpush1.bf16.msra.mxu0 0
  %3386 = vmatprep.subr.bf16.mxu0 0
  %3387 = vmatpush1.bf16.msra.mxu0 0
  %3388 = vmatprep.subr.bf16.mxu0 0
  %3389 = vmatpush1.bf16.msra.mxu0 0
  %3390 = vmatprep.subr.bf16.mxu0 0
  %3391 = vmatpush1.bf16.msra.mxu0 0
  %3392 = vmatprep.mubr.bf16.mxu0 0
  %3393 = vmatmul.mubr.bf16.gmra.mrb[0].mxu0 %v3300
  %v3394 = vpop.f32.mrb[0].mxu0
  %v3395 = vadd.f32 0.0, %v3394
  %v3396 = vpop.f32.mrb[0].mxu0
  %v3397 = vpop.f32.mrb[0].mxu0
  %v3398 = vadd.f32 0.0, %v3397
  %v3399 = vpop.f32.mrb[0].mxu0
  %3400 = vdwg.mxu0
  %v3401 = vadd.f32 %v3395, %v1898
  %v3402 = vadd.f32 %v3398, %v1898
  %v3403 = vadd.f32 %v3311, %v3352
  %v3404 = vadd.f32 %v3314, %v3356
  %v3405 = vxor.u32 %v3403, 2147483648
  %v3406 = vxor.u32 %v3404, 2147483648
  %v3407 = vmul.f32 %v3405, 1.442695
  %v3408 = vpow.pop %v3407
  %v3409 = vmul.f32 %v3406, 1.442695
  %v3410 = vpow.pop %v3409
  %v3411 = vadd.f32 %v3408, 1.0
  %v3412 = vadd.f32 %v3410, 1.0
  %v3413 = vrcp.pop %v3411
  %v3414 = vmul.f32 1.0, %v3413
  %v3415 = vrcp.pop %v3412
  %v3416 = vmul.f32 1.0, %v3415
  %v3417 = vadd.f32 %v3312, %v3354
  %v3418 = vadd.f32 %v3315, %v3358
  %v3419 = vxor.u32 %v3417, 2147483648
  %v3420 = vxor.u32 %v3418, 2147483648
  %v3421 = vmul.f32 %v3419, 1.442695
  %v3422 = vpow.pop %v3421
  %v3423 = vmul.f32 %v3420, 1.442695
  %v3424 = vpow.pop %v3423
  %v3425 = vadd.f32 %v3422, 1.0
  %v3426 = vadd.f32 %v3424, 1.0
  %v3427 = vrcp.pop %v3425
  %v3428 = vmul.f32 1.0, %v3427
  %v3429 = vrcp.pop %v3426
  %v3430 = vmul.f32 1.0, %v3429
  %v3431 = vmul.f32 %v3414, %v3401
  %v3432 = vmul.f32 %v3416, %v3402
  %v3433 = vadd.f32 %v3313, %v3431
  %v3434 = vadd.f32 %v3316, %v3432
  %v3435 = vtanh.pop %v3433
  %v3436 = vtanh.pop %v3434
  %v3437 = vsub.f32 1.0, %v3428
  %v3438 = vsub.f32 1.0, %v3430
  %v3439 = vmul.f32 %v3437, %v3435
  %v3440 = vmul.f32 %v3438, %v3436
  %v3441 = vmul.f32 %v3428, %v3298
  %v3442 = vmul.f32 %v3430, %v3299
  %v3443 = vadd.f32 %v3439, %v3441
  %v3444 = vadd.f32 %v3440, %v3442
  %v3445 = vpack.c.bf16 %v3444, %v3443
  %v3447 = vunpack.c.l.b16 %v3445
  %v3448 = vunpack.c.h.b16 %v3445
  %v3449 = vpack.c.b16 %v3447, %v3447
  %v3450 = vpack.c.b16 %v3448, %v3448
  %s3453 = scalar_lea.vmem %s10, 48
  %3454 = vst [vmem:[%s3453] sm:$0xf] %v3449
  %3455 = vst [vmem:[%s3453 + $0x4] sm:$0xf] %v3450
  %v3456 = vld [vmem:[%s1688] sm:$0xff]
  %v3457 = vld [vmem:[%s1688 + $0x8] sm:$0xff]
  %v3458 = vld [vmem:[%s1688 + $0x10] sm:$0xff]
  %v3459 = vld [vmem:[%s1688 + $0x18] sm:$0xff]
  %v3460 = vld [vmem:[%s1688 + $0x20] sm:$0xff]
  %v3461 = vld [vmem:[%s1688 + $0x28] sm:$0xff]
  %3462 = vmatprep.subr.bf16.mxu0 %v2401
  %3463 = vmatpush1.bf16.msra.mxu0 %v2400
  %3464 = vmatprep.subr.bf16.mxu0 %v2404
  %3465 = vmatpush1.bf16.msra.mxu0 %v2403
  %3466 = vmatprep.subr.bf16.mxu0 %v2407
  %3467 = vmatpush1.bf16.msra.mxu0 %v2406
  %3468 = vmatprep.subr.bf16.mxu0 %v2410
  %3469 = vmatpush1.bf16.msra.mxu0 %v2409
  %3470 = vmatprep.subr.bf16.mxu0 %v2413
  %3471 = vmatpush1.bf16.msra.mxu0 %v2412
  %3472 = vmatprep.subr.bf16.mxu0 %v2416
  %3473 = vmatpush1.bf16.msra.mxu0 %v2415
  %3474 = vmatprep.subr.bf16.mxu0 %v2419
  %3475 = vmatpush1.bf16.msra.mxu0 %v2418
  %3476 = vmatprep.subr.bf16.mxu0 %v2422
  %3477 = vmatpush1.bf16.msra.mxu0 %v2421
  %3478 = vmatprep.subr.bf16.mxu0 0
  %3479 = vmatpush1.bf16.msra.mxu0 0
  %3480 = vmatprep.subr.bf16.mxu0 0
  %3481 = vmatpush1.bf16.msra.mxu0 0
  %3482 = vmatprep.subr.bf16.mxu0 0
  %3483 = vmatpush1.bf16.msra.mxu0 0
  %3484 = vmatprep.subr.bf16.mxu0 0
  %3485 = vmatpush1.bf16.msra.mxu0 0
  %3486 = vmatprep.subr.bf16.mxu0 0
  %3487 = vmatpush1.bf16.msra.mxu0 0
  %3488 = vmatprep.subr.bf16.mxu0 0
  %3489 = vmatpush1.bf16.msra.mxu0 0
  %3490 = vmatprep.subr.bf16.mxu0 0
  %3491 = vmatpush1.bf16.msra.mxu0 0
  %3492 = vmatprep.subr.bf16.mxu0 0
  %3493 = vmatpush1.bf16.msra.mxu0 0
  %3494 = vmatprep.mubr.bf16.mxu0 0
  %3495 = vmatmul.mubr.bf16.gmra.mrb[0].mxu0 %v3445
  %v3496 = vpop.f32.mrb[0].mxu0
  %v3497 = vadd.f32 0.0, %v3496
  %v3498 = vpop.f32.mrb[0].mxu0
  %v3499 = vadd.f32 0.0, %v3498
  %v3500 = vpop.f32.mrb[0].mxu0
  %v3501 = vadd.f32 0.0, %v3500
  %v3502 = vpop.f32.mrb[0].mxu0
  %v3503 = vadd.f32 0.0, %v3502
  %3504 = vdwg.mxu0
  %3505 = vmatprep.subr.bf16.mxu0 0
  %3506 = vmatpush1.bf16.msra.mxu0 %v2402
  %3507 = vmatprep.subr.bf16.mxu0 0
  %3508 = vmatpush1.bf16.msra.mxu0 %v2405
  %3509 = vmatprep.subr.bf16.mxu0 0
  %3510 = vmatpush1.bf16.msra.mxu0 %v2408
  %3511 = vmatprep.subr.bf16.mxu0 0
  %3512 = vmatpush1.bf16.msra.mxu0 %v2411
  %3513 = vmatprep.subr.bf16.mxu0 0
  %3514 = vmatpush1.bf16.msra.mxu0 %v2414
  %3515 = vmatprep.subr.bf16.mxu0 0
  %3516 = vmatpush1.bf16.msra.mxu0 %v2417
  %3517 = vmatprep.subr.bf16.mxu0 0
  %3518 = vmatpush1.bf16.msra.mxu0 %v2420
  %3519 = vmatprep.subr.bf16.mxu0 0
  %3520 = vmatpush1.bf16.msra.mxu0 %v2423
  %3521 = vmatprep.subr.bf16.mxu0 0
  %3522 = vmatpush1.bf16.msra.mxu0 0
  %3523 = vmatprep.subr.bf16.mxu0 0
  %3524 = vmatpush1.bf16.msra.mxu0 0
  %3525 = vmatprep.subr.bf16.mxu0 0
  %3526 = vmatpush1.bf16.msra.mxu0 0
  %3527 = vmatprep.subr.bf16.mxu0 0
  %3528 = vmatpush1.bf16.msra.mxu0 0
  %3529 = vmatprep.subr.bf16.mxu0 0
  %3530 = vmatpush1.bf16.msra.mxu0 0
  %3531 = vmatprep.subr.bf16.mxu0 0
  %3532 = vmatpush1.bf16.msra.mxu0 0
  %3533 = vmatprep.subr.bf16.mxu0 0
  %3534 = vmatpush1.bf16.msra.mxu0 0
  %3535 = vmatprep.subr.bf16.mxu0 0
  %3536 = vmatpush1.bf16.msra.mxu0 0
  %3537 = vmatprep.mubr.bf16.mxu0 0
  %3538 = vmatmul.mubr.bf16.gmra.mrb[0].mxu0 %v3445
  %v3539 = vpop.f32.mrb[0].mxu0
  %v3540 = vadd.f32 0.0, %v3539
  %v3541 = vpop.f32.mrb[0].mxu0
  %v3542 = vpop.f32.mrb[0].mxu0
  %v3543 = vadd.f32 0.0, %v3542
  %v3544 = vpop.f32.mrb[0].mxu0
  %3545 = vdwg.mxu0
  %v3546 = vadd.f32 %v3540, %v1898
  %v3547 = vadd.f32 %v3543, %v1898
  %v3548 = vadd.f32 %v3456, %v3497
  %v3549 = vadd.f32 %v3459, %v3501
  %v3550 = vxor.u32 %v3548, 2147483648
  %v3551 = vxor.u32 %v3549, 2147483648
  %v3552 = vmul.f32 %v3550, 1.442695
  %v3553 = vpow.pop %v3552
  %v3554 = vmul.f32 %v3551, 1.442695
  %v3555 = vpow.pop %v3554
  %v3556 = vadd.f32 %v3553, 1.0
  %v3557 = vadd.f32 %v3555, 1.0
  %v3558 = vrcp.pop %v3556
  %v3559 = vmul.f32 1.0, %v3558
  %v3560 = vrcp.pop %v3557
  %v3561 = vmul.f32 1.0, %v3560
  %v3562 = vadd.f32 %v3457, %v3499
  %v3563 = vadd.f32 %v3460, %v3503
  %v3564 = vxor.u32 %v3562, 2147483648
  %v3565 = vxor.u32 %v3563, 2147483648
  %v3566 = vmul.f32 %v3564, 1.442695
  %v3567 = vpow.pop %v3566
  %v3568 = vmul.f32 %v3565, 1.442695
  %v3569 = vpow.pop %v3568
  %v3570 = vadd.f32 %v3567, 1.0
  %v3571 = vadd.f32 %v3569, 1.0
  %v3572 = vrcp.pop %v3570
  %v3573 = vmul.f32 1.0, %v3572
  %v3574 = vrcp.pop %v3571
  %v3575 = vmul.f32 1.0, %v3574
  %v3576 = vmul.f32 %v3559, %v3546
  %v3577 = vmul.f32 %v3561, %v3547
  %v3578 = vadd.f32 %v3458, %v3576
  %v3579 = vadd.f32 %v3461, %v3577
  %v3580 = vtanh.pop %v3578
  %v3581 = vtanh.pop %v3579
  %v3582 = vsub.f32 1.0, %v3573
  %v3583 = vsub.f32 1.0, %v3575
  %v3584 = vmul.f32 %v3582, %v3580
  %v3585 = vmul.f32 %v3583, %v3581
  %v3586 = vmul.f32 %v3573, %v3443
  %v3587 = vmul.f32 %v3575, %v3444
  %v3588 = vadd.f32 %v3584, %v3586
  %v3589 = vadd.f32 %v3585, %v3587
  %v3590 = vpack.c.bf16 %v3589, %v3588
  %v3592 = vunpack.c.l.b16 %v3590
  %v3593 = vunpack.c.h.b16 %v3590
  %v3594 = vpack.c.b16 %v3592, %v3592
  %v3595 = vpack.c.b16 %v3593, %v3593
  %s3598 = scalar_lea.vmem %s10, 56
  %3599 = vst [vmem:[%s3598] sm:$0xf] %v3594
  %3600 = vst [vmem:[%s3598 + $0x4] sm:$0xf] %v3595
  %s3601 = scalar_lea.vmem %s11, 16
  %3602 = vst [vmem:[%s3601] sm:$0xff] %v3588
  %3603 = vst [vmem:[%s3601 + $0x8] sm:$0xff] %v3589
  // Predicated region
  $region42: #{naive_decoder_forward.2} parent=0 // pred_check
    _
  $region43: #{naive_decoder_forward.2} parent=0 // pred_check_branch
    %3605 = sbr.rel (0) target = $region45
  $region44: #{naive_decoder_forward.2} parent=0 // pred_region
    _
  $region45: #{naive_decoder_forward.2} parent=0 // pred_fallthru
    _
  // Predicated region
  $region46: #{naive_decoder_forward.2} parent=0 // pred_check
    _
  $region47: #{naive_decoder_forward.2} parent=0 // pred_check_branch
    %3607 = sbr.rel (0) target = $region49
  $region48: #{naive_decoder_forward.2} parent=0 // pred_region
    _
  $region49: #{naive_decoder_forward.2} parent=0 // pred_fallthru
    _
  // Predicated region
  $region50: #{naive_decoder_forward.2} parent=0 // pred_check
    _
  $region51: #{naive_decoder_forward.2} parent=0 // pred_check_branch
    %3609 = sbr.rel (0) target = $region53
  $region52: #{naive_decoder_forward.2} parent=0 // pred_region
    _
  $region53: #{naive_decoder_forward.2} parent=0 // pred_fallthru
    _
  // Predicated region
  $region54: #{naive_decoder_forward.2} parent=0 // pred_check
    _
  $region55: #{naive_decoder_forward.2} parent=0 // pred_check_branch
    %3611 = sbr.rel (0) target = $region57
  $region56: #{naive_decoder_forward.2} parent=0 // pred_region
    _
  $region57: #{naive_decoder_forward.2} parent=0 // pred_fallthru
    _

</llo_original>
